<compile_context>
chip_gen: v6e
topology: v6e:2x2x1
jax: 0.10.0
libtpu: 0.0.40
codegen_flags: <defaults>
</compile_context>

<pallas_src>
import jax
import jax.numpy as jnp
import numpy as np
from jax.experimental import pallas as pl
from jax.experimental.pallas import tpu as pltpu

# ---------------- configuration ----------------
N, H, W = 2, 16, 16
HW = H * W
C_IN, C_EXP, C_OUT = 16, 64, 16
KSIZE = 3


def _make_divisible(v, divisor, min_value=None):
    if min_value is None:
        min_value = divisor
    new_v = max(min_value, int(v + divisor / 2) // divisor * divisor)
    if new_v < 0.9 * v:
        new_v += divisor
    return new_v


C_SQ = _make_divisible(C_EXP // 4, 8)   # 16

# Column layout of the packed per-channel parameter table, shape (C_EXP, PTAB_W).
COL_TAPS = 0            # 9 depthwise taps (BN-folded, pre-scaled by 1/6), cols 0..8
COL_B_DW = 9            # depthwise BN bias
COL_B_EXP = 10          # expand BN bias
COL_B_FC2 = 11          # SE fc2 bias
COL_B_PROJ = 12         # project BN bias (rows 0..C_OUT-1)
COL_FC1 = 16            # SE fc1 transposed, pre-scaled by 1/6: [c, j] = W1[j, c]/6
COL_FC2 = 32            # SE fc2:                                [c, j] = W2[c, j]
COL_B_FC1 = 48          # SE fc1 bias as a (1, C_SQ) row stored in row 0
PTAB_W = 64


def _hardswish(x):
    return x * jnp.clip(x + 3.0, 0.0, 6.0) * (1.0 / 6.0)


def _hardsigmoid(x):
    return jnp.clip(x + 3.0, 0.0, 6.0) * (1.0 / 6.0)


# ---------------- Pallas kernel ----------------
def inverted_residual_kernel(x_ref, w_exp_ref, w_proj_ref, ptab_ref, o_ref):
    nb = x_ref.shape[0]                              # static batch size
    ptab = ptab_ref[...]                             # (C_EXP, PTAB_W) f32
    w_exp = w_exp_ref[...]                           # (C_EXP, C_IN)  bf16
    w_proj = w_proj_ref[...]                         # (C_OUT, C_EXP) bf16

    b_exp = ptab[:, COL_B_EXP:COL_B_EXP + 1]
    b_dw = ptab[:, COL_B_DW:COL_B_DW + 1]
    b_fc2 = ptab[:, COL_B_FC2:COL_B_FC2 + 1]
    b_proj = ptab[:C_OUT, COL_B_PROJ:COL_B_PROJ + 1]
    w1t = ptab[:, COL_FC1:COL_FC1 + C_SQ]            # (C_EXP, C_SQ), already /6
    w2 = ptab[:, COL_FC2:COL_FC2 + C_SQ]             # (C_EXP, C_SQ)
    b_fc1 = ptab[0:1, COL_B_FC1:COL_B_FC1 + C_SQ]    # (1, C_SQ)

    # ---- depthwise edge masks: built once, pre-combined per tap ----
    # spatial index p = y*W + w lives on the lane axis.
    lane_p = jax.lax.broadcasted_iota(jnp.int32, (C_EXP, HW), 1)
    w_idx = lane_p & (W - 1)                         # W is a power of two
    ok_l = w_idx > 0                                 # may read w-1
    ok_r = w_idx < (W - 1)                           # may read w+1
    ok_u = lane_p >= W                               # may read y-1
    ok_d = lane_p < (H - 1) * W                      # may read y+1
    tap_mask = {
        (-1, -1): jnp.logical_and(ok_u, ok_l),
        (-1, 0): ok_u,
        (-1, 1): jnp.logical_and(ok_u, ok_r),
        (0, -1): ok_l,
        (0, 1): ok_r,
        (1, -1): jnp.logical_and(ok_d, ok_l),
        (1, 0): ok_d,
        (1, 1): jnp.logical_and(ok_d, ok_r),
    }

    # ---- per-image pipeline (static unrolled loop, single grid step) ----
    for b in range(nb):
        x = x_ref[b]                                 # (C_IN, HW) f32

        # 1x1 expand conv (BN folded) + hardswish (the 1/6 is folded into taps)
        h = jnp.dot(w_exp, x.astype(jnp.bfloat16),
                    preferred_element_type=jnp.float32)          # (C_EXP, HW)
        h = h + b_exp
        h6 = h * jnp.clip(h + 3.0, 0.0, 6.0)         # = 6 * hardswish(h)

        # depthwise 3x3, stride 1, pad 1 (BN folded): lane rolls + edge masks
        acc = h6 * ptab[:, COL_TAPS + 4:COL_TAPS + 5]            # center tap
        for dy in (-1, 0, 1):
            for dx in (-1, 0, 1):
                if dy == 0 and dx == 0:
                    continue
                k = (dy + 1) * KSIZE + (dx + 1)
                shift = (-(dy * W + dx)) % HW        # non-negative, same cyclic roll
                v = pltpu.roll(h6, shift=shift, axis=1)
                acc = acc + jnp.where(tap_mask[(dy, dx)], v, 0.0) * \
                    ptab[:, COL_TAPS + k:COL_TAPS + k + 1]
        dpre = acc + b_dw
        d6 = dpre * jnp.clip(dpre + 3.0, 0.0, 6.0)   # = 6 * hardswish(dpre)

        # SqueezeExcitation on the VPU/XLU (1/6's folded into w_fc1 and sigma)
        pooled = jnp.sum(d6, axis=1, keepdims=True) * (1.0 / HW)   # (C_EXP, 1)
        s = jnp.sum(w1t * pooled, axis=0, keepdims=True) + b_fc1   # (1, C_SQ)
        s = jnp.maximum(s, 0.0)
        z = jnp.sum(w2 * s, axis=1, keepdims=True) + b_fc2         # (C_EXP, 1)
        sigma = jnp.clip(z + 3.0, 0.0, 6.0) * (1.0 / 36.0)         # hsig/6 * 1/6
        dsc = d6 * sigma                                           # = hs(dpre)*hsig(z)

        # 1x1 project conv (BN folded, Identity) + residual
        p = jnp.dot(w_proj, dsc.astype(jnp.bfloat16),
                    preferred_element_type=jnp.float32)            # (C_OUT, HW)
        p = p + b_proj
        o_ref[b] = (p + x).astype(o_ref.dtype)


def inverted_residual(x_nchw, kernel_params):
    """PyTorch-compatible NCHW entry point; NCHW maps to the kernel layout with a
    pure metadata reshape (no transpose)."""
    n, c, hh, ww = x_nchw.shape
    assert c == C_IN and hh == H and ww == W
    assert C_OUT == C_IN                   # residual connection (stride==1)
    assert (W & (W - 1)) == 0              # lane-index math assumes power-of-two W
    # TODO(synk): stride=2 / 5x5 / dilation>1 MobileNetV3 blocks are not covered
    # by this roll+mask depthwise; only this block config is implemented.
    hw = hh * ww
    x_flat = x_nchw.reshape(n, c, hw)
    w_exp, w_proj, ptab = kernel_params
    y_flat = pl.pallas_call(
        inverted_residual_kernel,
        out_shape=jax.ShapeDtypeStruct((n, C_OUT, hw), x_nchw.dtype),
        grid=(1,),
        in_specs=[
            pl.BlockSpec((n, C_IN, hw), lambda i: (0, 0, 0)),
            pl.BlockSpec(w_exp.shape, lambda i: (0, 0)),
            pl.BlockSpec(w_proj.shape, lambda i: (0, 0)),
            pl.BlockSpec(ptab.shape, lambda i: (0, 0)),
        ],
        out_specs=pl.BlockSpec((n, C_OUT, hw), lambda i: (0, 0, 0)),
        compiler_params=pltpu.CompilerParams(
            dimension_semantics=("arbitrary",)),
    )(x_flat, w_exp, w_proj, ptab)
    return y_flat.reshape(n, C_OUT, hh, ww)


# ---------------- deterministic parameter construction ----------------
def make_bn(key, c, eps=1e-5):
    k1, k2, k3, k4 = jax.random.split(key, 4)
    gamma = jax.random.uniform(k1, (c,), minval=0.5, maxval=1.5)
    beta = jax.random.uniform(k2, (c,), minval=-0.2, maxval=0.2)
    mean = jax.random.uniform(k3, (c,), minval=-0.1, maxval=0.1)
    var = jax.random.uniform(k4, (c,), minval=0.5, maxval=1.5)
    scale = gamma / jnp.sqrt(var + eps)
    shift = beta - mean * scale
    return scale.astype(jnp.float32), shift.astype(jnp.float32)


def build_params(key):
    ks = jax.random.split(key, 10)
    # expand 1x1: Conv2d (C_EXP, C_IN, 1, 1), bias=False, + BN
    w_exp_raw = 0.1 * jax.random.normal(ks[0], (C_EXP, C_IN), jnp.float32)
    s_exp, b_exp = make_bn(ks[1], C_EXP)
    w_exp = w_exp_raw * s_exp[:, None]                     # BN folded (eval mode)
    # depthwise 3x3: (C_EXP, 1, 3, 3), groups=C_EXP, bias=False, + BN
    w_dw_raw = 0.1 * jax.random.normal(ks[2], (C_EXP, KSIZE, KSIZE), jnp.float32)
    s_dw, b_dw = make_bn(ks[3], C_EXP)
    w_dw = w_dw_raw * s_dw[:, None, None]                  # BN folded
    # SE fc1 / fc2: 1x1 convs WITH bias (no BN)
    w_fc1 = 0.1 * jax.random.normal(ks[4], (C_SQ, C_EXP), jnp.float32)
    b_fc1 = 0.1 * jax.random.normal(ks[5], (C_SQ,), jnp.float32)
    w_fc2 = 0.1 * jax.random.normal(ks[6], (C_EXP, C_SQ), jnp.float32)
    b_fc2 = 0.1 * jax.random.normal(ks[7], (C_EXP,), jnp.float32)
    # project 1x1: (C_OUT, C_EXP, 1, 1), bias=False, + BN (Identity act)
    w_proj_raw = 0.1 * jax.random.normal(ks[8], (C_OUT, C_EXP), jnp.float32)
    s_proj, b_proj = make_bn(ks[9], C_OUT)
    w_proj = w_proj_raw * s_proj[:, None]

    # ----- packed kernel parameters (1/6 hardswish constants folded host-side) -----
    w_exp_b16 = w_exp.astype(jnp.bfloat16)                 # (C_EXP, C_IN)
    w_proj_b16 = w_proj.astype(jnp.bfloat16)               # (C_OUT, C_EXP)
    ptab = jnp.zeros((C_EXP, PTAB_W), jnp.float32)
    ptab = ptab.at[:, COL_TAPS:COL_TAPS + 9].set(
        w_dw.reshape(C_EXP, 9) * (1.0 / 6.0))
    ptab = ptab.at[:, COL_B_DW].set(b_dw)
    ptab = ptab.at[:, COL_B_EXP].set(b_exp)
    ptab = ptab.at[:, COL_B_FC2].set(b_fc2)
    ptab = ptab.at[:C_OUT, COL_B_PROJ].set(b_proj)
    ptab = ptab.at[:, COL_FC1:COL_FC1 + C_SQ].set(w_fc1.T * (1.0 / 6.0))
    ptab = ptab.at[:, COL_FC2:COL_FC2 + C_SQ].set(w_fc2)
    ptab = ptab.at[0, COL_B_FC1:COL_B_FC1 + C_SQ].set(b_fc1)

    kernel_params = (w_exp_b16, w_proj_b16, ptab)
    ref_params = dict(w_exp_b16=w_exp_b16, b_exp=b_exp, w_dw=w_dw, b_dw=b_dw,
                      w_fc1=w_fc1, b_fc1=b_fc1, w_fc2=w_fc2, b_fc2=b_fc2,
                      w_proj_b16=w_proj_b16, b_proj=b_proj)
    return kernel_params, ref_params


# ---------------- pure-JAX NCHW reference (PyTorch-faithful, eval-mode BN) ----------------
def reference_nchw(x, rp):
    n, c, hh, ww = x.shape
    xb = x.astype(jnp.bfloat16)
    h = jnp.einsum('oc,nchw->nohw', rp['w_exp_b16'], xb,
                   preferred_element_type=jnp.float32)
    h = _hardswish(h + rp['b_exp'][None, :, None, None])
    hp = jnp.pad(h, ((0, 0), (0, 0), (1, 1), (1, 1)))
    acc = jnp.zeros_like(h)
    for ky in range(KSIZE):
        for kx in range(KSIZE):
            acc = acc + hp[:, :, ky:ky + hh, kx:kx + ww] * \
                rp['w_dw'][None, :, ky, kx, None, None]
    d = _hardswish(acc + rp['b_dw'][None, :, None, None])
    pooled = d.mean(axis=(2, 3))                                   # (N, C_EXP)
    s = jnp.maximum(
        jnp.einsum('nc,jc->nj', pooled, rp['w_fc1'],
                   precision=jax.lax.Precision.HIGHEST) + rp['b_fc1'], 0.0)
    s = _hardsigmoid(
        jnp.einsum('nj,cj->nc', s, rp['w_fc2'],
                   precision=jax.lax.Precision.HIGHEST) + rp['b_fc2'])
    d = d * s[:, :, None, None]
    p = jnp.einsum('oc,nchw->nohw', rp['w_proj_b16'], d.astype(jnp.bfloat16),
                   preferred_element_type=jnp.float32)
    p = p + rp['b_proj'][None, :, None, None]
    return p + x


if __name__ == "__main__":
    key = jax.random.PRNGKey(0)
    k_x, k_p = jax.random.split(key)
    # PyTorch-style NCHW input
    x_nchw = jax.random.normal(k_x, (N, C_IN, H, W), jnp.float32)
    kernel_params, ref_params = build_params(k_p)

    y = inverted_residual(x_nchw, kernel_params)
    y = jax.block_until_ready(y)

    # verify against the pure-JAX reference (same bf16 matmul weights, f32 accum)
    y_ref = reference_nchw(x_nchw, ref_params)
    np.testing.assert_allclose(np.asarray(y), np.asarray(y_ref),
                               rtol=2e-3, atol=2e-3)

    print("KERNEL_OK")
</pallas_src>

<mosaic_0001>
module attributes {stable_mosaic.version = 11 : i64} {
  func.func @inverted_residual_kernel(%arg0: i32, %arg1: memref<2x16x256xf32, #tpu.memory_space<vmem>>, %arg2: memref<64x16xbf16, #tpu.memory_space<vmem>>, %arg3: memref<16x64xbf16, #tpu.memory_space<vmem>>, %arg4: memref<64x64xf32, #tpu.memory_space<vmem>>, %arg5: memref<2x16x256xf32, #tpu.memory_space<vmem>>) attributes {dimension_semantics = [#tpu.dimension_semantics<arbitrary>], iteration_bounds = array<i64: 1>, scalar_prefetch = 0 : i64, scratch_operands = 0 : i64, tpu.core_type = #tpu.core_type<tc>, window_params = [{pipeline_mode = #tpu.pipeline_mode<synchronous>, transform_indices = @transform_0, window_bounds = array<i64: 2, 16, 256>}, {pipeline_mode = #tpu.pipeline_mode<synchronous>, transform_indices = @transform_1, window_bounds = array<i64: 64, 16>}, {pipeline_mode = #tpu.pipeline_mode<synchronous>, transform_indices = @transform_2, window_bounds = array<i64: 16, 64>}, {pipeline_mode = #tpu.pipeline_mode<synchronous>, transform_indices = @transform_3, window_bounds = array<i64: 64, 64>}, {pipeline_mode = #tpu.pipeline_mode<synchronous>, transform_indices = @transform_4, window_bounds = array<i64: 2, 16, 256>}]} {
    %c0 = arith.constant 0 : index
    %c0_0 = arith.constant 0 : index
    %0 = vector.load %arg4[%c0, %c0_0] : memref<64x64xf32, #tpu.memory_space<vmem>>, vector<64x64xf32>
    %c0_1 = arith.constant 0 : index
    %c0_2 = arith.constant 0 : index
    %1 = vector.load %arg2[%c0_1, %c0_2] : memref<64x16xbf16, #tpu.memory_space<vmem>>, vector<64x16xbf16>
    %c0_3 = arith.constant 0 : index
    %c0_4 = arith.constant 0 : index
    %2 = vector.load %arg3[%c0_3, %c0_4] : memref<16x64xbf16, #tpu.memory_space<vmem>>, vector<16x64xbf16>
    %3 = vector.extract_strided_slice %0 {offsets = [0, 10], sizes = [64, 1], strides = [1, 1]} : vector<64x64xf32> to vector<64x1xf32>
    %4 = vector.extract_strided_slice %0 {offsets = [0, 9], sizes = [64, 1], strides = [1, 1]} : vector<64x64xf32> to vector<64x1xf32>
    %5 = vector.extract_strided_slice %0 {offsets = [0, 11], sizes = [64, 1], strides = [1, 1]} : vector<64x64xf32> to vector<64x1xf32>
    %6 = vector.extract_strided_slice %0 {offsets = [0, 12], sizes = [16, 1], strides = [1, 1]} : vector<64x64xf32> to vector<16x1xf32>
    %7 = vector.extract_strided_slice %0 {offsets = [0, 16], sizes = [64, 16], strides = [1, 1]} : vector<64x64xf32> to vector<64x16xf32>
    %8 = vector.extract_strided_slice %0 {offsets = [0, 32], sizes = [64, 16], strides = [1, 1]} : vector<64x64xf32> to vector<64x16xf32>
    %9 = vector.extract_strided_slice %0 {offsets = [0, 48], sizes = [1, 16], strides = [1, 1]} : vector<64x64xf32> to vector<1x16xf32>
    %10 = tpu.iota {dimensions = array<i32: 1>} : vector<64x256xi32>
    %c15_i32 = arith.constant 15 : i32
    %11 = vector.broadcast %c15_i32 : i32 to vector<64x256xi32>
    %12 = arith.andi %10, %11 : vector<64x256xi32>
    %c0_i32 = arith.constant 0 : i32
    %13 = vector.broadcast %c0_i32 : i32 to vector<64x256xi32>
    %14 = arith.cmpi sgt, %12, %13 : vector<64x256xi32>
    %c15_i32_5 = arith.constant 15 : i32
    %15 = vector.broadcast %c15_i32_5 : i32 to vector<64x256xi32>
    %16 = arith.cmpi slt, %12, %15 : vector<64x256xi32>
    %c16_i32 = arith.constant 16 : i32
    %17 = vector.broadcast %c16_i32 : i32 to vector<64x256xi32>
    %18 = arith.cmpi sge, %10, %17 : vector<64x256xi32>
    %c240_i32 = arith.constant 240 : i32
    %19 = vector.broadcast %c240_i32 : i32 to vector<64x256xi32>
    %20 = arith.cmpi slt, %10, %19 : vector<64x256xi32>
    %21 = arith.andi %18, %14 : vector<64x256xi1>
    %22 = arith.andi %18, %16 : vector<64x256xi1>
    %23 = arith.andi %20, %14 : vector<64x256xi1>
    %24 = arith.andi %20, %16 : vector<64x256xi1>
    %c0_6 = arith.constant 0 : index
    %c0_7 = arith.constant 0 : index
    %c0_8 = arith.constant 0 : index
    %25 = vector.load %arg1[%c0_6, %c0_7, %c0_8] : memref<2x16x256xf32, #tpu.memory_space<vmem>>, vector<1x16x256xf32>
    %26 = vector.shape_cast %25 : vector<1x16x256xf32> to vector<16x256xf32>
    %27 = arith.truncf %26 : vector<16x256xf32> to vector<16x256xbf16>
    %cst = arith.constant dense<0.000000e+00> : vector<64x256xf32>
    %28 = tpu.matmul %1, %27, %cst {dimension_numbers = #tpu.dot_dimension_numbers<[1], [0], [0], [1], [0, 0, 1, 1], [], []>} : vector<64x16xbf16>, vector<16x256xbf16>, vector<64x256xf32> -> vector<64x256xf32>
    %29 = vector.broadcast %3 : vector<64x1xf32> to vector<64x256xf32>
    %30 = arith.addf %28, %29 : vector<64x256xf32>
    %cst_9 = arith.constant 3.000000e+00 : f32
    %31 = vector.broadcast %cst_9 : f32 to vector<64x256xf32>
    %32 = arith.addf %30, %31 : vector<64x256xf32>
    %cst_10 = arith.constant 0.000000e+00 : f32
    %cst_11 = arith.constant 6.000000e+00 : f32
    %33 = vector.broadcast %cst_10 : f32 to vector<64x256xf32>
    %34 = arith.maximumf %33, %32 : vector<64x256xf32>
    %35 = vector.broadcast %cst_11 : f32 to vector<64x256xf32>
    %36 = arith.minimumf %35, %34 : vector<64x256xf32>
    %37 = arith.mulf %30, %36 : vector<64x256xf32>
    %38 = vector.extract_strided_slice %0 {offsets = [0, 4], sizes = [64, 1], strides = [1, 1]} : vector<64x64xf32> to vector<64x1xf32>
    %39 = vector.broadcast %38 : vector<64x1xf32> to vector<64x256xf32>
    %40 = arith.mulf %37, %39 : vector<64x256xf32>
    %c17_i32 = arith.constant 17 : i32
    %41 = tpu.dynamic_rotate %37 by %c17_i32 dim 1 : vector<64x256xf32>, i32 -> vector<64x256xf32>
    %cst_12 = arith.constant 0.000000e+00 : f32
    %42 = vector.broadcast %cst_12 : f32 to vector<64x256xf32>
    %43 = arith.select %21, %41, %42 : vector<64x256xi1>, vector<64x256xf32>
    %44 = vector.extract_strided_slice %0 {offsets = [0, 0], sizes = [64, 1], strides = [1, 1]} : vector<64x64xf32> to vector<64x1xf32>
    %45 = vector.broadcast %44 : vector<64x1xf32> to vector<64x256xf32>
    %46 = arith.mulf %43, %45 : vector<64x256xf32>
    %47 = arith.addf %40, %46 : vector<64x256xf32>
    %c16_i32_13 = arith.constant 16 : i32
    %48 = tpu.dynamic_rotate %37 by %c16_i32_13 dim 1 : vector<64x256xf32>, i32 -> vector<64x256xf32>
    %cst_14 = arith.constant 0.000000e+00 : f32
    %49 = vector.broadcast %cst_14 : f32 to vector<64x256xf32>
    %50 = arith.select %18, %48, %49 : vector<64x256xi1>, vector<64x256xf32>
    %51 = vector.extract_strided_slice %0 {offsets = [0, 1], sizes = [64, 1], strides = [1, 1]} : vector<64x64xf32> to vector<64x1xf32>
    %52 = vector.broadcast %51 : vector<64x1xf32> to vector<64x256xf32>
    %53 = arith.mulf %50, %52 : vector<64x256xf32>
    %54 = arith.addf %47, %53 : vector<64x256xf32>
    %c15_i32_15 = arith.constant 15 : i32
    %55 = tpu.dynamic_rotate %37 by %c15_i32_15 dim 1 : vector<64x256xf32>, i32 -> vector<64x256xf32>
    %cst_16 = arith.constant 0.000000e+00 : f32
    %56 = vector.broadcast %cst_16 : f32 to vector<64x256xf32>
    %57 = arith.select %22, %55, %56 : vector<64x256xi1>, vector<64x256xf32>
    %58 = vector.extract_strided_slice %0 {offsets = [0, 2], sizes = [64, 1], strides = [1, 1]} : vector<64x64xf32> to vector<64x1xf32>
    %59 = vector.broadcast %58 : vector<64x1xf32> to vector<64x256xf32>
    %60 = arith.mulf %57, %59 : vector<64x256xf32>
    %61 = arith.addf %54, %60 : vector<64x256xf32>
    %c1_i32 = arith.constant 1 : i32
    %62 = tpu.dynamic_rotate %37 by %c1_i32 dim 1 : vector<64x256xf32>, i32 -> vector<64x256xf32>
    %cst_17 = arith.constant 0.000000e+00 : f32
    %63 = vector.broadcast %cst_17 : f32 to vector<64x256xf32>
    %64 = arith.select %14, %62, %63 : vector<64x256xi1>, vector<64x256xf32>
    %65 = vector.extract_strided_slice %0 {offsets = [0, 3], sizes = [64, 1], strides = [1, 1]} : vector<64x64xf32> to vector<64x1xf32>
    %66 = vector.broadcast %65 : vector<64x1xf32> to vector<64x256xf32>
    %67 = arith.mulf %64, %66 : vector<64x256xf32>
    %68 = arith.addf %61, %67 : vector<64x256xf32>
    %c255_i32 = arith.constant 255 : i32
    %69 = tpu.dynamic_rotate %37 by %c255_i32 dim 1 : vector<64x256xf32>, i32 -> vector<64x256xf32>
    %cst_18 = arith.constant 0.000000e+00 : f32
    %70 = vector.broadcast %cst_18 : f32 to vector<64x256xf32>
    %71 = arith.select %16, %69, %70 : vector<64x256xi1>, vector<64x256xf32>
    %72 = vector.extract_strided_slice %0 {offsets = [0, 5], sizes = [64, 1], strides = [1, 1]} : vector<64x64xf32> to vector<64x1xf32>
    %73 = vector.broadcast %72 : vector<64x1xf32> to vector<64x256xf32>
    %74 = arith.mulf %71, %73 : vector<64x256xf32>
    %75 = arith.addf %68, %74 : vector<64x256xf32>
    %c241_i32 = arith.constant 241 : i32
    %76 = tpu.dynamic_rotate %37 by %c241_i32 dim 1 : vector<64x256xf32>, i32 -> vector<64x256xf32>
    %cst_19 = arith.constant 0.000000e+00 : f32
    %77 = vector.broadcast %cst_19 : f32 to vector<64x256xf32>
    %78 = arith.select %23, %76, %77 : vector<64x256xi1>, vector<64x256xf32>
    %79 = vector.extract_strided_slice %0 {offsets = [0, 6], sizes = [64, 1], strides = [1, 1]} : vector<64x64xf32> to vector<64x1xf32>
    %80 = vector.broadcast %79 : vector<64x1xf32> to vector<64x256xf32>
    %81 = arith.mulf %78, %80 : vector<64x256xf32>
    %82 = arith.addf %75, %81 : vector<64x256xf32>
    %c240_i32_20 = arith.constant 240 : i32
    %83 = tpu.dynamic_rotate %37 by %c240_i32_20 dim 1 : vector<64x256xf32>, i32 -> vector<64x256xf32>
    %cst_21 = arith.constant 0.000000e+00 : f32
    %84 = vector.broadcast %cst_21 : f32 to vector<64x256xf32>
    %85 = arith.select %20, %83, %84 : vector<64x256xi1>, vector<64x256xf32>
    %86 = vector.extract_strided_slice %0 {offsets = [0, 7], sizes = [64, 1], strides = [1, 1]} : vector<64x64xf32> to vector<64x1xf32>
    %87 = vector.broadcast %86 : vector<64x1xf32> to vector<64x256xf32>
    %88 = arith.mulf %85, %87 : vector<64x256xf32>
    %89 = arith.addf %82, %88 : vector<64x256xf32>
    %c239_i32 = arith.constant 239 : i32
    %90 = tpu.dynamic_rotate %37 by %c239_i32 dim 1 : vector<64x256xf32>, i32 -> vector<64x256xf32>
    %cst_22 = arith.constant 0.000000e+00 : f32
    %91 = vector.broadcast %cst_22 : f32 to vector<64x256xf32>
    %92 = arith.select %24, %90, %91 : vector<64x256xi1>, vector<64x256xf32>
    %93 = vector.extract_strided_slice %0 {offsets = [0, 8], sizes = [64, 1], strides = [1, 1]} : vector<64x64xf32> to vector<64x1xf32>
    %94 = vector.broadcast %93 : vector<64x1xf32> to vector<64x256xf32>
    %95 = arith.mulf %92, %94 : vector<64x256xf32>
    %96 = arith.addf %89, %95 : vector<64x256xf32>
    %97 = vector.broadcast %4 : vector<64x1xf32> to vector<64x256xf32>
    %98 = arith.addf %96, %97 : vector<64x256xf32>
    %cst_23 = arith.constant 3.000000e+00 : f32
    %99 = vector.broadcast %cst_23 : f32 to vector<64x256xf32>
    %100 = arith.addf %98, %99 : vector<64x256xf32>
    %cst_24 = arith.constant 0.000000e+00 : f32
    %cst_25 = arith.constant 6.000000e+00 : f32
    %101 = vector.broadcast %cst_24 : f32 to vector<64x256xf32>
    %102 = arith.maximumf %101, %100 : vector<64x256xf32>
    %103 = vector.broadcast %cst_25 : f32 to vector<64x256xf32>
    %104 = arith.minimumf %103, %102 : vector<64x256xf32>
    %105 = arith.mulf %98, %104 : vector<64x256xf32>
    %cst_26 = arith.constant dense<0.000000e+00> : vector<64xf32>
    %106 = vector.multi_reduction <add>, %105, %cst_26 [1] : vector<64x256xf32> to vector<64xf32>
    %107 = vector.shape_cast %106 : vector<64xf32> to vector<64x1xf32>
    %cst_27 = arith.constant 3.906250e-03 : f32
    %108 = vector.broadcast %cst_27 : f32 to vector<64x1xf32>
    %109 = arith.mulf %107, %108 : vector<64x1xf32>
    %110 = vector.broadcast %109 : vector<64x1xf32> to vector<64x16xf32>
    %111 = arith.mulf %7, %110 : vector<64x16xf32>
    %cst_28 = arith.constant dense<0.000000e+00> : vector<16xf32>
    %112 = vector.multi_reduction <add>, %111, %cst_28 [0] : vector<64x16xf32> to vector<16xf32>
    %113 = vector.shape_cast %112 : vector<16xf32> to vector<1x16xf32>
    %114 = arith.addf %113, %9 : vector<1x16xf32>
    %cst_29 = arith.constant 0.000000e+00 : f32
    %115 = vector.broadcast %cst_29 : f32 to vector<1x16xf32>
    %116 = arith.maximumf %114, %115 : vector<1x16xf32>
    %117 = vector.broadcast %116 : vector<1x16xf32> to vector<64x16xf32>
    %118 = arith.mulf %8, %117 : vector<64x16xf32>
    %cst_30 = arith.constant dense<0.000000e+00> : vector<64xf32>
    %119 = vector.multi_reduction <add>, %118, %cst_30 [1] : vector<64x16xf32> to vector<64xf32>
    %120 = vector.shape_cast %119 : vector<64xf32> to vector<64x1xf32>
    %121 = arith.addf %120, %5 : vector<64x1xf32>
    %cst_31 = arith.constant 3.000000e+00 : f32
    %122 = vector.broadcast %cst_31 : f32 to vector<64x1xf32>
    %123 = arith.addf %121, %122 : vector<64x1xf32>
    %cst_32 = arith.constant 0.000000e+00 : f32
    %cst_33 = arith.constant 6.000000e+00 : f32
    %124 = vector.broadcast %cst_32 : f32 to vector<64x1xf32>
    %125 = arith.maximumf %124, %123 : vector<64x1xf32>
    %126 = vector.broadcast %cst_33 : f32 to vector<64x1xf32>
    %127 = arith.minimumf %126, %125 : vector<64x1xf32>
    %cst_34 = arith.constant 0.027777778 : f32
    %128 = vector.broadcast %cst_34 : f32 to vector<64x1xf32>
    %129 = arith.mulf %127, %128 : vector<64x1xf32>
    %130 = vector.broadcast %129 : vector<64x1xf32> to vector<64x256xf32>
    %131 = arith.mulf %105, %130 : vector<64x256xf32>
    %132 = arith.truncf %131 : vector<64x256xf32> to vector<64x256xbf16>
    %cst_35 = arith.constant dense<0.000000e+00> : vector<16x256xf32>
    %133 = tpu.matmul %2, %132, %cst_35 {dimension_numbers = #tpu.dot_dimension_numbers<[1], [0], [0], [1], [0, 0, 1, 1], [], []>} : vector<16x64xbf16>, vector<64x256xbf16>, vector<16x256xf32> -> vector<16x256xf32>
    %134 = vector.broadcast %6 : vector<16x1xf32> to vector<16x256xf32>
    %135 = arith.addf %133, %134 : vector<16x256xf32>
    %136 = arith.addf %135, %26 : vector<16x256xf32>
    %c0_36 = arith.constant 0 : index
    %c0_37 = arith.constant 0 : index
    %c0_38 = arith.constant 0 : index
    %137 = vector.load %arg5[%c0_36, %c0_37, %c0_38] : memref<2x16x256xf32, #tpu.memory_space<vmem>>, vector<1x16x256xf32>
    %138 = vector.shape_cast %137 : vector<1x16x256xf32> to vector<16x256xf32>
    %139 = vector.shape_cast %136 : vector<16x256xf32> to vector<1x16x256xf32>
    tpu.vector_store %arg5[%c0_36, %c0_37, %c0_38], %139 {strides = array<i32>} : memref<2x16x256xf32, #tpu.memory_space<vmem>>, vector<1x16x256xf32>,
    %c1 = arith.constant 1 : index
    %c0_39 = arith.constant 0 : index
    %c0_40 = arith.constant 0 : index
    %140 = vector.load %arg1[%c1, %c0_39, %c0_40] : memref<2x16x256xf32, #tpu.memory_space<vmem>>, vector<1x16x256xf32>
    %141 = vector.shape_cast %140 : vector<1x16x256xf32> to vector<16x256xf32>
    %142 = arith.truncf %141 : vector<16x256xf32> to vector<16x256xbf16>
    %cst_41 = arith.constant dense<0.000000e+00> : vector<64x256xf32>
    %143 = tpu.matmul %1, %142, %cst_41 {dimension_numbers = #tpu.dot_dimension_numbers<[1], [0], [0], [1], [0, 0, 1, 1], [], []>} : vector<64x16xbf16>, vector<16x256xbf16>, vector<64x256xf32> -> vector<64x256xf32>
    %144 = vector.broadcast %3 : vector<64x1xf32> to vector<64x256xf32>
    %145 = arith.addf %143, %144 : vector<64x256xf32>
    %cst_42 = arith.constant 3.000000e+00 : f32
    %146 = vector.broadcast %cst_42 : f32 to vector<64x256xf32>
    %147 = arith.addf %145, %146 : vector<64x256xf32>
    %cst_43 = arith.constant 0.000000e+00 : f32
    %cst_44 = arith.constant 6.000000e+00 : f32
    %148 = vector.broadcast %cst_43 : f32 to vector<64x256xf32>
    %149 = arith.maximumf %148, %147 : vector<64x256xf32>
    %150 = vector.broadcast %cst_44 : f32 to vector<64x256xf32>
    %151 = arith.minimumf %150, %149 : vector<64x256xf32>
    %152 = arith.mulf %145, %151 : vector<64x256xf32>
    %153 = vector.extract_strided_slice %0 {offsets = [0, 4], sizes = [64, 1], strides = [1, 1]} : vector<64x64xf32> to vector<64x1xf32>
    %154 = vector.broadcast %153 : vector<64x1xf32> to vector<64x256xf32>
    %155 = arith.mulf %152, %154 : vector<64x256xf32>
    %c17_i32_45 = arith.constant 17 : i32
    %156 = tpu.dynamic_rotate %152 by %c17_i32_45 dim 1 : vector<64x256xf32>, i32 -> vector<64x256xf32>
    %cst_46 = arith.constant 0.000000e+00 : f32
    %157 = vector.broadcast %cst_46 : f32 to vector<64x256xf32>
    %158 = arith.select %21, %156, %157 : vector<64x256xi1>, vector<64x256xf32>
    %159 = vector.extract_strided_slice %0 {offsets = [0, 0], sizes = [64, 1], strides = [1, 1]} : vector<64x64xf32> to vector<64x1xf32>
    %160 = vector.broadcast %159 : vector<64x1xf32> to vector<64x256xf32>
    %161 = arith.mulf %158, %160 : vector<64x256xf32>
    %162 = arith.addf %155, %161 : vector<64x256xf32>
    %c16_i32_47 = arith.constant 16 : i32
    %163 = tpu.dynamic_rotate %152 by %c16_i32_47 dim 1 : vector<64x256xf32>, i32 -> vector<64x256xf32>
    %cst_48 = arith.constant 0.000000e+00 : f32
    %164 = vector.broadcast %cst_48 : f32 to vector<64x256xf32>
    %165 = arith.select %18, %163, %164 : vector<64x256xi1>, vector<64x256xf32>
    %166 = vector.extract_strided_slice %0 {offsets = [0, 1], sizes = [64, 1], strides = [1, 1]} : vector<64x64xf32> to vector<64x1xf32>
    %167 = vector.broadcast %166 : vector<64x1xf32> to vector<64x256xf32>
    %168 = arith.mulf %165, %167 : vector<64x256xf32>
    %169 = arith.addf %162, %168 : vector<64x256xf32>
    %c15_i32_49 = arith.constant 15 : i32
    %170 = tpu.dynamic_rotate %152 by %c15_i32_49 dim 1 : vector<64x256xf32>, i32 -> vector<64x256xf32>
    %cst_50 = arith.constant 0.000000e+00 : f32
    %171 = vector.broadcast %cst_50 : f32 to vector<64x256xf32>
    %172 = arith.select %22, %170, %171 : vector<64x256xi1>, vector<64x256xf32>
    %173 = vector.extract_strided_slice %0 {offsets = [0, 2], sizes = [64, 1], strides = [1, 1]} : vector<64x64xf32> to vector<64x1xf32>
    %174 = vector.broadcast %173 : vector<64x1xf32> to vector<64x256xf32>
    %175 = arith.mulf %172, %174 : vector<64x256xf32>
    %176 = arith.addf %169, %175 : vector<64x256xf32>
    %c1_i32_51 = arith.constant 1 : i32
    %177 = tpu.dynamic_rotate %152 by %c1_i32_51 dim 1 : vector<64x256xf32>, i32 -> vector<64x256xf32>
    %cst_52 = arith.constant 0.000000e+00 : f32
    %178 = vector.broadcast %cst_52 : f32 to vector<64x256xf32>
    %179 = arith.select %14, %177, %178 : vector<64x256xi1>, vector<64x256xf32>
    %180 = vector.extract_strided_slice %0 {offsets = [0, 3], sizes = [64, 1], strides = [1, 1]} : vector<64x64xf32> to vector<64x1xf32>
    %181 = vector.broadcast %180 : vector<64x1xf32> to vector<64x256xf32>
    %182 = arith.mulf %179, %181 : vector<64x256xf32>
    %183 = arith.addf %176, %182 : vector<64x256xf32>
    %c255_i32_53 = arith.constant 255 : i32
    %184 = tpu.dynamic_rotate %152 by %c255_i32_53 dim 1 : vector<64x256xf32>, i32 -> vector<64x256xf32>
    %cst_54 = arith.constant 0.000000e+00 : f32
    %185 = vector.broadcast %cst_54 : f32 to vector<64x256xf32>
    %186 = arith.select %16, %184, %185 : vector<64x256xi1>, vector<64x256xf32>
    %187 = vector.extract_strided_slice %0 {offsets = [0, 5], sizes = [64, 1], strides = [1, 1]} : vector<64x64xf32> to vector<64x1xf32>
    %188 = vector.broadcast %187 : vector<64x1xf32> to vector<64x256xf32>
    %189 = arith.mulf %186, %188 : vector<64x256xf32>
    %190 = arith.addf %183, %189 : vector<64x256xf32>
    %c241_i32_55 = arith.constant 241 : i32
    %191 = tpu.dynamic_rotate %152 by %c241_i32_55 dim 1 : vector<64x256xf32>, i32 -> vector<64x256xf32>
    %cst_56 = arith.constant 0.000000e+00 : f32
    %192 = vector.broadcast %cst_56 : f32 to vector<64x256xf32>
    %193 = arith.select %23, %191, %192 : vector<64x256xi1>, vector<64x256xf32>
    %194 = vector.extract_strided_slice %0 {offsets = [0, 6], sizes = [64, 1], strides = [1, 1]} : vector<64x64xf32> to vector<64x1xf32>
    %195 = vector.broadcast %194 : vector<64x1xf32> to vector<64x256xf32>
    %196 = arith.mulf %193, %195 : vector<64x256xf32>
    %197 = arith.addf %190, %196 : vector<64x256xf32>
    %c240_i32_57 = arith.constant 240 : i32
    %198 = tpu.dynamic_rotate %152 by %c240_i32_57 dim 1 : vector<64x256xf32>, i32 -> vector<64x256xf32>
    %cst_58 = arith.constant 0.000000e+00 : f32
    %199 = vector.broadcast %cst_58 : f32 to vector<64x256xf32>
    %200 = arith.select %20, %198, %199 : vector<64x256xi1>, vector<64x256xf32>
    %201 = vector.extract_strided_slice %0 {offsets = [0, 7], sizes = [64, 1], strides = [1, 1]} : vector<64x64xf32> to vector<64x1xf32>
    %202 = vector.broadcast %201 : vector<64x1xf32> to vector<64x256xf32>
    %203 = arith.mulf %200, %202 : vector<64x256xf32>
    %204 = arith.addf %197, %203 : vector<64x256xf32>
    %c239_i32_59 = arith.constant 239 : i32
    %205 = tpu.dynamic_rotate %152 by %c239_i32_59 dim 1 : vector<64x256xf32>, i32 -> vector<64x256xf32>
    %cst_60 = arith.constant 0.000000e+00 : f32
    %206 = vector.broadcast %cst_60 : f32 to vector<64x256xf32>
    %207 = arith.select %24, %205, %206 : vector<64x256xi1>, vector<64x256xf32>
    %208 = vector.extract_strided_slice %0 {offsets = [0, 8], sizes = [64, 1], strides = [1, 1]} : vector<64x64xf32> to vector<64x1xf32>
    %209 = vector.broadcast %208 : vector<64x1xf32> to vector<64x256xf32>
    %210 = arith.mulf %207, %209 : vector<64x256xf32>
    %211 = arith.addf %204, %210 : vector<64x256xf32>
    %212 = vector.broadcast %4 : vector<64x1xf32> to vector<64x256xf32>
    %213 = arith.addf %211, %212 : vector<64x256xf32>
    %cst_61 = arith.constant 3.000000e+00 : f32
    %214 = vector.broadcast %cst_61 : f32 to vector<64x256xf32>
    %215 = arith.addf %213, %214 : vector<64x256xf32>
    %cst_62 = arith.constant 0.000000e+00 : f32
    %cst_63 = arith.constant 6.000000e+00 : f32
    %216 = vector.broadcast %cst_62 : f32 to vector<64x256xf32>
    %217 = arith.maximumf %216, %215 : vector<64x256xf32>
    %218 = vector.broadcast %cst_63 : f32 to vector<64x256xf32>
    %219 = arith.minimumf %218, %217 : vector<64x256xf32>
    %220 = arith.mulf %213, %219 : vector<64x256xf32>
    %cst_64 = arith.constant dense<0.000000e+00> : vector<64xf32>
    %221 = vector.multi_reduction <add>, %220, %cst_64 [1] : vector<64x256xf32> to vector<64xf32>
    %222 = vector.shape_cast %221 : vector<64xf32> to vector<64x1xf32>
    %cst_65 = arith.constant 3.906250e-03 : f32
    %223 = vector.broadcast %cst_65 : f32 to vector<64x1xf32>
    %224 = arith.mulf %222, %223 : vector<64x1xf32>
    %225 = vector.broadcast %224 : vector<64x1xf32> to vector<64x16xf32>
    %226 = arith.mulf %7, %225 : vector<64x16xf32>
    %cst_66 = arith.constant dense<0.000000e+00> : vector<16xf32>
    %227 = vector.multi_reduction <add>, %226, %cst_66 [0] : vector<64x16xf32> to vector<16xf32>
    %228 = vector.shape_cast %227 : vector<16xf32> to vector<1x16xf32>
    %229 = arith.addf %228, %9 : vector<1x16xf32>
    %cst_67 = arith.constant 0.000000e+00 : f32
    %230 = vector.broadcast %cst_67 : f32 to vector<1x16xf32>
    %231 = arith.maximumf %229, %230 : vector<1x16xf32>
    %232 = vector.broadcast %231 : vector<1x16xf32> to vector<64x16xf32>
    %233 = arith.mulf %8, %232 : vector<64x16xf32>
    %cst_68 = arith.constant dense<0.000000e+00> : vector<64xf32>
    %234 = vector.multi_reduction <add>, %233, %cst_68 [1] : vector<64x16xf32> to vector<64xf32>
    %235 = vector.shape_cast %234 : vector<64xf32> to vector<64x1xf32>
    %236 = arith.addf %235, %5 : vector<64x1xf32>
    %cst_69 = arith.constant 3.000000e+00 : f32
    %237 = vector.broadcast %cst_69 : f32 to vector<64x1xf32>
    %238 = arith.addf %236, %237 : vector<64x1xf32>
    %cst_70 = arith.constant 0.000000e+00 : f32
    %cst_71 = arith.constant 6.000000e+00 : f32
    %239 = vector.broadcast %cst_70 : f32 to vector<64x1xf32>
    %240 = arith.maximumf %239, %238 : vector<64x1xf32>
    %241 = vector.broadcast %cst_71 : f32 to vector<64x1xf32>
    %242 = arith.minimumf %241, %240 : vector<64x1xf32>
    %cst_72 = arith.constant 0.027777778 : f32
    %243 = vector.broadcast %cst_72 : f32 to vector<64x1xf32>
    %244 = arith.mulf %242, %243 : vector<64x1xf32>
    %245 = vector.broadcast %244 : vector<64x1xf32> to vector<64x256xf32>
    %246 = arith.mulf %220, %245 : vector<64x256xf32>
    %247 = arith.truncf %246 : vector<64x256xf32> to vector<64x256xbf16>
    %cst_73 = arith.constant dense<0.000000e+00> : vector<16x256xf32>
    %248 = tpu.matmul %2, %247, %cst_73 {dimension_numbers = #tpu.dot_dimension_numbers<[1], [0], [0], [1], [0, 0, 1, 1], [], []>} : vector<16x64xbf16>, vector<64x256xbf16>, vector<16x256xf32> -> vector<16x256xf32>
    %249 = vector.broadcast %6 : vector<16x1xf32> to vector<16x256xf32>
    %250 = arith.addf %248, %249 : vector<16x256xf32>
    %251 = arith.addf %250, %141 : vector<16x256xf32>
    %c1_74 = arith.constant 1 : index
    %c0_75 = arith.constant 0 : index
    %c0_76 = arith.constant 0 : index
    %252 = vector.load %arg5[%c1_74, %c0_75, %c0_76] : memref<2x16x256xf32, #tpu.memory_space<vmem>>, vector<1x16x256xf32>
    %253 = vector.shape_cast %252 : vector<1x16x256xf32> to vector<16x256xf32>
    %254 = vector.shape_cast %251 : vector<16x256xf32> to vector<1x16x256xf32>
    tpu.vector_store %arg5[%c1_74, %c0_75, %c0_76], %254 {strides = array<i32>} : memref<2x16x256xf32, #tpu.memory_space<vmem>>, vector<1x16x256xf32>,
    return
  }
  func.func @transform_0(%arg0: i32) -> (i32, i32, i32) {
    %c0_i32 = arith.constant 0 : i32
    %c0_i32_0 = arith.constant 0 : i32
    %c0_i32_1 = arith.constant 0 : i32
    %c0_i32_2 = arith.constant 0 : i32
    return %c0_i32, %c0_i32_0, %c0_i32_1 : i32, i32, i32
  }
  func.func @transform_1(%arg0: i32) -> (i32, i32) {
    %c0_i32 = arith.constant 0 : i32
    %c0_i32_0 = arith.constant 0 : i32
    %c0_i32_1 = arith.constant 0 : i32
    return %c0_i32, %c0_i32_0 : i32, i32
  }
  func.func @transform_2(%arg0: i32) -> (i32, i32) {
    %c0_i32 = arith.constant 0 : i32
    %c0_i32_0 = arith.constant 0 : i32
    %c0_i32_1 = arith.constant 0 : i32
    return %c0_i32, %c0_i32_0 : i32, i32
  }
  func.func @transform_3(%arg0: i32) -> (i32, i32) {
    %c0_i32 = arith.constant 0 : i32
    %c0_i32_0 = arith.constant 0 : i32
    %c0_i32_1 = arith.constant 0 : i32
    return %c0_i32, %c0_i32_0 : i32, i32
  }
  func.func @transform_4(%arg0: i32) -> (i32, i32, i32) {
    %c0_i32 = arith.constant 0 : i32
    %c0_i32_0 = arith.constant 0 : i32
    %c0_i32_1 = arith.constant 0 : i32
    %c0_i32_2 = arith.constant 0 : i32
    return %c0_i32, %c0_i32_0, %c0_i32_1 : i32, i32, i32
  }
}

</mosaic_0001>

<llo_original>
// kernel: tpu_custom_call.1
$region0: #{tpu_custom_call.1}
  #allocation0 [shape = 'u32[]', space=smem, size = 0x4, offset = 0x4, fixed_abs, tag = 'smem constant byte address 0x4 - core index']
  #allocation1 [shape = 'u32[144,128]{1,0:T(1,128)}', space=vmem, size = 0x12000, scoped, tag = 'internal scratch']
  %s0 = inlined_call_operand.hbm [shape: f32[2,16,256], index: 0, kind: input, shape index: {}]
  %s1 = inlined_call_operand.vmem [shape: bf16[64,16], index: 1, kind: input, shape index: {}]
  %s2 = inlined_call_operand.vmem [shape: bf16[16,64], index: 2, kind: input, shape index: {}]
  %s3 = inlined_call_operand.hbm [shape: f32[64,64], index: 3, kind: input, shape index: {}]
  %s4 = inlined_call_operand.hbm [shape: f32[2,16,256], index: 4, kind: output, shape index: {}]
  %s5 = sld [smem:[#allocation0]]
  $region34: #{tpu_custom_call.1} parent=0
    _
  %s7 = ssub.s32 1, %s5
  %s8 = scalar_select 0, %s7, %s5
  $region1: #{tpu_custom_call.1} parent=0
    #allocation2 [shape = 'u8[32768]{0}', space=vmem, size = 0x8000, scoped, tag = 'input window, operand 0, single buffered']
    #allocation3 [shape = 's32[1]{0}', space=sflag, size = 0x4, scoped, tag = 'scoped memory for tpu_custom_call.1']
    #allocation4 [shape = 's32[1]{0}', space=sflag, size = 0x4, scoped, tag = 'scoped memory for tpu_custom_call.1']
    #allocation5 [shape = 'u8[32768]{0}', space=vmem, size = 0x8000, scoped, tag = 'input window, operand 3, single buffered']
    #allocation6 [shape = 's32[1]{0}', space=sflag, size = 0x4, scoped, tag = 'scoped memory for tpu_custom_call.1']
    #allocation7 [shape = 'u8[32768]{0}', space=vmem, size = 0x8000, scoped, tag = 'output window, operand 0, single buffered']
    %9 = vsyncpa [#allocation3], 0
    %10 = vsyncpa [#allocation6], 0
    %11 = vsyncpa [#allocation4], 0
    // Predicated region
    $region2: #{tpu_custom_call.1} parent=1 // pred_check
      _
    $region3: #{tpu_custom_call.1} parent=1 // pred_check_branch
      %13 = sbr.rel (0) target = $region5
    $region4: #{tpu_custom_call.1} parent=1 // pred_region
      %s15 = ssub.s32 1024, 1024
      %16 = vsyncadd [#allocation3], %s15
      %s17 = sshll.u32 [#allocation2], 4
      %s18 = int_to_ptr.vmem [resolvable:$true] %s17
      %23 = dma.hbm_to_vmem [thread:$0]  %s0, 1024, %s18, [#allocation3], 256, 256, 16
    $region5: #{tpu_custom_call.1} parent=1 // pred_fallthru
      _
    // Predicated region
    $region6: #{tpu_custom_call.1} parent=1 // pred_check
      _
    $region7: #{tpu_custom_call.1} parent=1 // pred_check_branch
      %25 = sbr.rel (0) target = $region9
    $region8: #{tpu_custom_call.1} parent=1 // pred_region
      _
    $region9: #{tpu_custom_call.1} parent=1 // pred_fallthru
      _
    // Predicated region
    $region10: #{tpu_custom_call.1} parent=1 // pred_check
      _
    $region11: #{tpu_custom_call.1} parent=1 // pred_check_branch
      %27 = sbr.rel (0) target = $region13
    $region12: #{tpu_custom_call.1} parent=1 // pred_region
      _
    $region13: #{tpu_custom_call.1} parent=1 // pred_fallthru
      _
    // Predicated region
    $region14: #{tpu_custom_call.1} parent=1 // pred_check
      _
    $region15: #{tpu_custom_call.1} parent=1 // pred_check_branch
      %29 = sbr.rel (0) target = $region17
    $region16: #{tpu_custom_call.1} parent=1 // pred_region
      %s31 = ssub.s32 1024, 1024
      %32 = vsyncadd [#allocation6], %s31
      %s33 = sshll.u32 [#allocation5], 4
      %s34 = int_to_ptr.vmem [resolvable:$true] %s33
      %39 = dma.hbm_to_vmem [thread:$0]  %s3, 1024, %s34, [#allocation6], 128, 128, 8
    $region17: #{tpu_custom_call.1} parent=1 // pred_fallthru
      _
    // Predicated region
    $region18: #{tpu_custom_call.1} parent=1 // pred_check
      _
    $region19: #{tpu_custom_call.1} parent=1 // pred_check_branch
      %41 = sbr.rel (0) target = $region21
    $region20: #{tpu_custom_call.1} parent=1 // pred_region
      %42 = dma.done [#allocation3], 1024
    $region21: #{tpu_custom_call.1} parent=1 // pred_fallthru
      _
    // Predicated region
    $region22: #{tpu_custom_call.1} parent=1 // pred_check
      _
    $region23: #{tpu_custom_call.1} parent=1 // pred_check_branch
      %44 = sbr.rel (0) target = $region25
    $region24: #{tpu_custom_call.1} parent=1 // pred_region
      %45 = dma.done [#allocation6], 1024
    $region25: #{tpu_custom_call.1} parent=1 // pred_fallthru
      _
    %v47 = vld [vmem:[#allocation5] sm:$0xff]
    %v48 = vld [vmem:[#allocation5 + $0x8] sm:$0xff]
    %v49 = vld [vmem:[#allocation5 + $0x10] sm:$0xff]
    %v50 = vld [vmem:[#allocation5 + $0x18] sm:$0xff]
    %v51 = vld [vmem:[#allocation5 + $0x20] sm:$0xff]
    %v52 = vld [vmem:[#allocation5 + $0x28] sm:$0xff]
    %v53 = vld [vmem:[#allocation5 + $0x30] sm:$0xff]
    %v54 = vld [vmem:[#allocation5 + $0x38] sm:$0xff]
    %v55 = vld [vmem:[%s1] sm:$0xf]
    %v56 = vld [vmem:[%s1 + $0x4] sm:$0xf]
    %v57 = vld [vmem:[%s1 + $0x8] sm:$0xf]
    %v58 = vld [vmem:[%s1 + $0xc] sm:$0xf]
    %v59 = vld [vmem:[%s1 + $0x10] sm:$0xf]
    %v60 = vld [vmem:[%s1 + $0x14] sm:$0xf]
    %v61 = vld [vmem:[%s1 + $0x18] sm:$0xf]
    %v62 = vld [vmem:[%s1 + $0x1c] sm:$0xf]
    %v63 = vld [vmem:[%s2] sm:$0xf]
    %v64 = vld [vmem:[%s2 + $0x4] sm:$0xf]
    %v65 = vlaneseq
    %v66 = vand.u32 %v65, 127
    %v67 = vadd.s32 %v66, 128
    %v68 = vand.u32 %v66, 15
    %v69 = vand.u32 %v67, 15
    %vm70 = vcmp.gt.s32.totalorder %v68, 0
    %vm71 = vcmp.gt.s32.totalorder %v69, 0
    %vm72 = vcmp.lt.s32.totalorder %v68, 15
    %vm73 = vcmp.lt.s32.totalorder %v69, 15
    %vm74 = vcmp.ge.s32.totalorder %v66, 16
    %vm75 = vcmp.ge.s32.totalorder %v67, 16
    %vm76 = vcmp.lt.s32.totalorder %v66, 240
    %vm77 = vcmp.lt.s32.totalorder %v67, 240
    %vm78 = vmand %vm74, %vm70
    %vm79 = vmand %vm75, %vm71
    %vm80 = vmand %vm74, %vm72
    %vm81 = vmand %vm75, %vm73
    %vm82 = vmand %vm76, %vm70
    %vm83 = vmand %vm77, %vm71
    %vm84 = vmand %vm76, %vm72
    %vm85 = vmand %vm77, %vm73
    %v86 = vld [vmem:[#allocation2] sm:$0xff]
    %v87 = vld [vmem:[#allocation2 + $0x8] sm:$0xff]
    %v88 = vld [vmem:[#allocation2 + $0x10] sm:$0xff]
    %v89 = vld [vmem:[#allocation2 + $0x18] sm:$0xff]
    %v90 = vpack.c.bf16 %v88, %v86
    %v91 = vpack.c.bf16 %v89, %v87
    %93 = vset.pattern.permute.xlu0 10
    %94 = vperm.xlu0 %93, %v47
    %v95 = vpop.permute.xlu0 %94
    %98 = vset.pattern.permute.xlu0 10
    %99 = vperm.xlu0 %98, %v48
    %v100 = vpop.permute.xlu0 %99
    %103 = vset.pattern.permute.xlu0 10
    %104 = vperm.xlu0 %103, %v49
    %v105 = vpop.permute.xlu0 %104
    %108 = vset.pattern.permute.xlu0 10
    %109 = vperm.xlu0 %108, %v50
    %v110 = vpop.permute.xlu0 %109
    %113 = vset.pattern.permute.xlu0 10
    %114 = vperm.xlu0 %113, %v51
    %v115 = vpop.permute.xlu0 %114
    %118 = vset.pattern.permute.xlu0 10
    %119 = vperm.xlu0 %118, %v52
    %v120 = vpop.permute.xlu0 %119
    %123 = vset.pattern.permute.xlu0 10
    %124 = vperm.xlu0 %123, %v53
    %v125 = vpop.permute.xlu0 %124
    %128 = vset.pattern.permute.xlu0 10
    %129 = vperm.xlu0 %128, %v54
    %v130 = vpop.permute.xlu0 %129
    %v140 = vunpack.c.l.b16 %v55
    %v141 = vunpack.c.l.b16 %v56
    %v142 = vunpack.c.l.b16 %v57
    %v143 = vunpack.c.l.b16 %v58
    %v144 = vunpack.c.l.b16 %v59
    %v145 = vunpack.c.l.b16 %v60
    %v146 = vunpack.c.l.b16 %v61
    %v147 = vunpack.c.l.b16 %v62
    %v148 = vpack.c.b16 %v141, %v140
    %v149 = vpack.c.b16 %v143, %v142
    %v150 = vpack.c.b16 %v145, %v144
    %v151 = vpack.c.b16 %v147, %v146
    %vm152 = vcmask 130048
    %v154 = vsel %vm152, %v148, 0
    %v157 = vsel %vm152, %v149, 0
    %v160 = vsel %vm152, %v150, 0
    %v163 = vsel %vm152, %v151, 0
    %165 = vmatprep.subr.bf16.mxu0 0
    %166 = vmatpush1.bf16.msra.mxu0 0
    %167 = vmatprep.subr.bf16.mxu0 0
    %168 = vmatpush1.bf16.msra.mxu0 0
    %169 = vmatprep.subr.bf16.mxu0 0
    %170 = vmatpush1.bf16.msra.mxu0 0
    %171 = vmatprep.subr.bf16.mxu0 0
    %172 = vmatpush1.bf16.msra.mxu0 0
    %173 = vmatprep.subr.bf16.mxu0 0
    %174 = vmatpush1.bf16.msra.mxu0 0
    %175 = vmatprep.subr.bf16.mxu0 0
    %176 = vmatpush1.bf16.msra.mxu0 0
    %177 = vmatprep.subr.bf16.mxu0 0
    %178 = vmatpush1.bf16.msra.mxu0 0
    %179 = vmatprep.subr.bf16.mxu0 %v91
    %180 = vmatpush1.bf16.msra.mxu0 %v90
    %181 = vmatprep.subr.bf16.mxu0 0
    %182 = vmatpush2.bf16.msra.mxu0 0
    %183 = vmatprep.subr.bf16.mxu0 0
    %184 = vmatpush2.bf16.msra.mxu0 0
    %185 = vmatprep.subr.bf16.mxu0 0
    %186 = vmatpush2.bf16.msra.mxu0 0
    %187 = vmatprep.subr.bf16.mxu0 0
    %188 = vmatpush2.bf16.msra.mxu0 0
    %189 = vmatprep.subr.bf16.mxu0 0
    %190 = vmatpush2.bf16.msra.mxu0 0
    %191 = vmatprep.subr.bf16.mxu0 0
    %192 = vmatpush2.bf16.msra.mxu0 0
    %193 = vmatprep.subr.bf16.mxu0 0
    %194 = vmatpush2.bf16.msra.mxu0 0
    %195 = vmatprep.subr.bf16.mxu0 0
    %196 = vmatpush2.bf16.msra.mxu0 0
    %197 = vmatprep.mubr.bf16.mxu0 0
    %198 = vmatmul.mubr.bf16.gmra.mxu0 %v154
    %v199 = vpop.f32.mrf.mxu0
    %v200 = vadd.f32 %v95, %v199
    %v201 = vpop.f32.mrf.mxu0
    %v202 = vadd.f32 %v95, %v201
    %v203 = vpop.f32.mrf.mxu0
    %v204 = vadd.f32 %v100, %v203
    %v205 = vpop.f32.mrf.mxu0
    %v206 = vadd.f32 %v100, %v205
    %207 = vmatprep.mubr.bf16.mxu0 0
    %208 = vmatmul.mubr.bf16.gmra.mxu0 %v157
    %v209 = vpop.f32.mrf.mxu0
    %v210 = vadd.f32 %v105, %v209
    %v211 = vpop.f32.mrf.mxu0
    %v212 = vadd.f32 %v105, %v211
    %v213 = vpop.f32.mrf.mxu0
    %v214 = vadd.f32 %v110, %v213
    %v215 = vpop.f32.mrf.mxu0
    %v216 = vadd.f32 %v110, %v215
    %217 = vmatprep.mubr.bf16.mxu0 0
    %218 = vmatmul.mubr.bf16.gmra.mxu0 %v160
    %v219 = vpop.f32.mrf.mxu0
    %v220 = vadd.f32 %v115, %v219
    %v221 = vpop.f32.mrf.mxu0
    %v222 = vadd.f32 %v115, %v221
    %v223 = vpop.f32.mrf.mxu0
    %v224 = vadd.f32 %v120, %v223
    %v225 = vpop.f32.mrf.mxu0
    %v226 = vadd.f32 %v120, %v225
    %227 = vmatprep.mubr.bf16.mxu0 0
    %228 = vmatmul.mubr.bf16.gmra.mxu0 %v163
    %v229 = vpop.f32.mrf.mxu0
    %v230 = vadd.f32 %v125, %v229
    %v231 = vpop.f32.mrf.mxu0
    %v232 = vadd.f32 %v125, %v231
    %v233 = vpop.f32.mrf.mxu0
    %v234 = vadd.f32 %v130, %v233
    %v235 = vpop.f32.mrf.mxu0
    %v236 = vadd.f32 %v130, %v235
    %237 = vdwg.mxu0
    %v238 = vadd.f32 %v200, 3.0
    %v239 = vadd.f32 %v202, 3.0
    %v240 = vadd.f32 %v204, 3.0
    %v241 = vadd.f32 %v206, 3.0
    %v242 = vadd.f32 %v210, 3.0
    %v243 = vadd.f32 %v212, 3.0
    %v244 = vadd.f32 %v214, 3.0
    %v245 = vadd.f32 %v216, 3.0
    %v246 = vadd.f32 %v220, 3.0
    %v247 = vadd.f32 %v222, 3.0
    %v248 = vadd.f32 %v224, 3.0
    %v249 = vadd.f32 %v226, 3.0
    %v250 = vadd.f32 %v230, 3.0
    %v251 = vadd.f32 %v232, 3.0
    %v252 = vadd.f32 %v234, 3.0
    %v253 = vadd.f32 %v236, 3.0
    %v254 = vmax.f32 %v238, 0.0
    %v255 = vmax.f32 %v239, 0.0
    %v256 = vmax.f32 %v240, 0.0
    %v257 = vmax.f32 %v241, 0.0
    %v258 = vmax.f32 %v242, 0.0
    %v259 = vmax.f32 %v243, 0.0
    %v260 = vmax.f32 %v244, 0.0
    %v261 = vmax.f32 %v245, 0.0
    %v262 = vmax.f32 %v246, 0.0
    %v263 = vmax.f32 %v247, 0.0
    %v264 = vmax.f32 %v248, 0.0
    %v265 = vmax.f32 %v249, 0.0
    %v266 = vmax.f32 %v250, 0.0
    %v267 = vmax.f32 %v251, 0.0
    %v268 = vmax.f32 %v252, 0.0
    %v269 = vmax.f32 %v253, 0.0
    %v270 = vmin.f32 %v254, 6.0
    %v271 = vmin.f32 %v255, 6.0
    %v272 = vmin.f32 %v256, 6.0
    %v273 = vmin.f32 %v257, 6.0
    %v274 = vmin.f32 %v258, 6.0
    %v275 = vmin.f32 %v259, 6.0
    %v276 = vmin.f32 %v260, 6.0
    %v277 = vmin.f32 %v261, 6.0
    %v278 = vmin.f32 %v262, 6.0
    %v279 = vmin.f32 %v263, 6.0
    %v280 = vmin.f32 %v264, 6.0
    %v281 = vmin.f32 %v265, 6.0
    %v282 = vmin.f32 %v266, 6.0
    %v283 = vmin.f32 %v267, 6.0
    %v284 = vmin.f32 %v268, 6.0
    %v285 = vmin.f32 %v269, 6.0
    %v286 = vmul.f32 %v200, %v270
    %v287 = vmul.f32 %v202, %v271
    %v288 = vmul.f32 %v204, %v272
    %v289 = vmul.f32 %v206, %v273
    %v290 = vmul.f32 %v210, %v274
    %v291 = vmul.f32 %v212, %v275
    %v292 = vmul.f32 %v214, %v276
    %v293 = vmul.f32 %v216, %v277
    %v294 = vmul.f32 %v220, %v278
    %v295 = vmul.f32 %v222, %v279
    %v296 = vmul.f32 %v224, %v280
    %v297 = vmul.f32 %v226, %v281
    %v298 = vmul.f32 %v230, %v282
    %v299 = vmul.f32 %v232, %v283
    %v300 = vmul.f32 %v234, %v284
    %v301 = vmul.f32 %v236, %v285
    %302 = vset.pattern.permute.xlu0 4
    %303 = vperm.xlu0 %302, %v47
    %v304 = vpop.permute.xlu0 %303
    %306 = vset.pattern.permute.xlu0 4
    %307 = vperm.xlu0 %306, %v48
    %v308 = vpop.permute.xlu0 %307
    %310 = vset.pattern.permute.xlu0 4
    %311 = vperm.xlu0 %310, %v49
    %v312 = vpop.permute.xlu0 %311
    %314 = vset.pattern.permute.xlu0 4
    %315 = vperm.xlu0 %314, %v50
    %v316 = vpop.permute.xlu0 %315
    %318 = vset.pattern.permute.xlu0 4
    %319 = vperm.xlu0 %318, %v51
    %v320 = vpop.permute.xlu0 %319
    %322 = vset.pattern.permute.xlu0 4
    %323 = vperm.xlu0 %322, %v52
    %v324 = vpop.permute.xlu0 %323
    %326 = vset.pattern.permute.xlu0 4
    %327 = vperm.xlu0 %326, %v53
    %v328 = vpop.permute.xlu0 %327
    %330 = vset.pattern.permute.xlu0 4
    %331 = vperm.xlu0 %330, %v54
    %v332 = vpop.permute.xlu0 %331
    %v334 = vmul.f32 %v286, %v304
    %v335 = vmul.f32 %v287, %v304
    %v336 = vmul.f32 %v288, %v308
    %v337 = vmul.f32 %v289, %v308
    %v338 = vmul.f32 %v290, %v312
    %v339 = vmul.f32 %v291, %v312
    %v340 = vmul.f32 %v292, %v316
    %v341 = vmul.f32 %v293, %v316
    %v342 = vmul.f32 %v294, %v320
    %v343 = vmul.f32 %v295, %v320
    %v344 = vmul.f32 %v296, %v324
    %v345 = vmul.f32 %v297, %v324
    %v346 = vmul.f32 %v298, %v328
    %v347 = vmul.f32 %v299, %v328
    %v348 = vmul.f32 %v300, %v332
    %v349 = vmul.f32 %v301, %v332
    %350 = vrot.lane.b32.xlu0 %v286, 17
    %v351 = vpop.permute.xlu0 %350
    %352 = vrot.lane.b32.xlu0 %v288, 17
    %v353 = vpop.permute.xlu0 %352
    %354 = vrot.lane.b32.xlu0 %v290, 17
    %v355 = vpop.permute.xlu0 %354
    %356 = vrot.lane.b32.xlu0 %v292, 17
    %v357 = vpop.permute.xlu0 %356
    %358 = vrot.lane.b32.xlu0 %v294, 17
    %v359 = vpop.permute.xlu0 %358
    %360 = vrot.lane.b32.xlu0 %v296, 17
    %v361 = vpop.permute.xlu0 %360
    %362 = vrot.lane.b32.xlu0 %v298, 17
    %v363 = vpop.permute.xlu0 %362
    %364 = vrot.lane.b32.xlu0 %v300, 17
    %v365 = vpop.permute.xlu0 %364
    %366 = vrot.lane.b32.xlu0 %v287, 17
    %v367 = vpop.permute.xlu0 %366
    %368 = vrot.lane.b32.xlu0 %v289, 17
    %v369 = vpop.permute.xlu0 %368
    %370 = vrot.lane.b32.xlu0 %v291, 17
    %v371 = vpop.permute.xlu0 %370
    %372 = vrot.lane.b32.xlu0 %v293, 17
    %v373 = vpop.permute.xlu0 %372
    %374 = vrot.lane.b32.xlu0 %v295, 17
    %v375 = vpop.permute.xlu0 %374
    %376 = vrot.lane.b32.xlu0 %v297, 17
    %v377 = vpop.permute.xlu0 %376
    %378 = vrot.lane.b32.xlu0 %v299, 17
    %v379 = vpop.permute.xlu0 %378
    %380 = vrot.lane.b32.xlu0 %v301, 17
    %v381 = vpop.permute.xlu0 %380
    %vm382 = vcmp.lt.s32.totalorder %v66, 17
    %v383 = vsel %vm382, %v351, %v367
    %v384 = vsel %vm382, %v353, %v369
    %v385 = vsel %vm382, %v355, %v371
    %v386 = vsel %vm382, %v357, %v373
    %v387 = vsel %vm382, %v359, %v375
    %v388 = vsel %vm382, %v361, %v377
    %v389 = vsel %vm382, %v363, %v379
    %v390 = vsel %vm382, %v365, %v381
    %v391 = vsel %vm382, %v367, %v351
    %v392 = vsel %vm382, %v369, %v353
    %v393 = vsel %vm382, %v371, %v355
    %v394 = vsel %vm382, %v373, %v357
    %v395 = vsel %vm382, %v375, %v359
    %v396 = vsel %vm382, %v377, %v361
    %v397 = vsel %vm382, %v379, %v363
    %v398 = vsel %vm382, %v381, %v365
    %v399 = vsel %vm78, %v391, 0.0
    %v400 = vsel %vm79, %v383, 0.0
    %v401 = vsel %vm78, %v392, 0.0
    %v402 = vsel %vm79, %v384, 0.0
    %v403 = vsel %vm78, %v393, 0.0
    %v404 = vsel %vm79, %v385, 0.0
    %v405 = vsel %vm78, %v394, 0.0
    %v406 = vsel %vm79, %v386, 0.0
    %v407 = vsel %vm78, %v395, 0.0
    %v408 = vsel %vm79, %v387, 0.0
    %v409 = vsel %vm78, %v396, 0.0
    %v410 = vsel %vm79, %v388, 0.0
    %v411 = vsel %vm78, %v397, 0.0
    %v412 = vsel %vm79, %v389, 0.0
    %v413 = vsel %vm78, %v398, 0.0
    %v414 = vsel %vm79, %v390, 0.0
    %415 = vset.pattern.permute.xlu0 0
    %416 = vperm.xlu0 %415, %v47
    %v417 = vpop.permute.xlu0 %416
    %419 = vset.pattern.permute.xlu0 0
    %420 = vperm.xlu0 %419, %v48
    %v421 = vpop.permute.xlu0 %420
    %423 = vset.pattern.permute.xlu0 0
    %424 = vperm.xlu0 %423, %v49
    %v425 = vpop.permute.xlu0 %424
    %427 = vset.pattern.permute.xlu0 0
    %428 = vperm.xlu0 %427, %v50
    %v429 = vpop.permute.xlu0 %428
    %431 = vset.pattern.permute.xlu0 0
    %432 = vperm.xlu0 %431, %v51
    %v433 = vpop.permute.xlu0 %432
    %435 = vset.pattern.permute.xlu0 0
    %436 = vperm.xlu0 %435, %v52
    %v437 = vpop.permute.xlu0 %436
    %439 = vset.pattern.permute.xlu0 0
    %440 = vperm.xlu0 %439, %v53
    %v441 = vpop.permute.xlu0 %440
    %443 = vset.pattern.permute.xlu0 0
    %444 = vperm.xlu0 %443, %v54
    %v445 = vpop.permute.xlu0 %444
    %v447 = vmul.f32 %v399, %v417
    %v448 = vmul.f32 %v400, %v417
    %v449 = vmul.f32 %v401, %v421
    %v450 = vmul.f32 %v402, %v421
    %v451 = vmul.f32 %v403, %v425
    %v452 = vmul.f32 %v404, %v425
    %v453 = vmul.f32 %v405, %v429
    %v454 = vmul.f32 %v406, %v429
    %v455 = vmul.f32 %v407, %v433
    %v456 = vmul.f32 %v408, %v433
    %v457 = vmul.f32 %v409, %v437
    %v458 = vmul.f32 %v410, %v437
    %v459 = vmul.f32 %v411, %v441
    %v460 = vmul.f32 %v412, %v441
    %v461 = vmul.f32 %v413, %v445
    %v462 = vmul.f32 %v414, %v445
    %v463 = vadd.f32 %v334, %v447
    %v464 = vadd.f32 %v335, %v448
    %v465 = vadd.f32 %v336, %v449
    %v466 = vadd.f32 %v337, %v450
    %v467 = vadd.f32 %v338, %v451
    %v468 = vadd.f32 %v339, %v452
    %v469 = vadd.f32 %v340, %v453
    %v470 = vadd.f32 %v341, %v454
    %v471 = vadd.f32 %v342, %v455
    %v472 = vadd.f32 %v343, %v456
    %v473 = vadd.f32 %v344, %v457
    %v474 = vadd.f32 %v345, %v458
    %v475 = vadd.f32 %v346, %v459
    %v476 = vadd.f32 %v347, %v460
    %v477 = vadd.f32 %v348, %v461
    %v478 = vadd.f32 %v349, %v462
    %479 = vrot.lane.b32.xlu0 %v286, 16
    %v480 = vpop.permute.xlu0 %479
    %481 = vrot.lane.b32.xlu0 %v288, 16
    %v482 = vpop.permute.xlu0 %481
    %483 = vrot.lane.b32.xlu0 %v290, 16
    %v484 = vpop.permute.xlu0 %483
    %485 = vrot.lane.b32.xlu0 %v292, 16
    %v486 = vpop.permute.xlu0 %485
    %487 = vrot.lane.b32.xlu0 %v294, 16
    %v488 = vpop.permute.xlu0 %487
    %489 = vrot.lane.b32.xlu0 %v296, 16
    %v490 = vpop.permute.xlu0 %489
    %491 = vrot.lane.b32.xlu0 %v298, 16
    %v492 = vpop.permute.xlu0 %491
    %493 = vrot.lane.b32.xlu0 %v300, 16
    %v494 = vpop.permute.xlu0 %493
    %495 = vrot.lane.b32.xlu0 %v287, 16
    %v496 = vpop.permute.xlu0 %495
    %497 = vrot.lane.b32.xlu0 %v289, 16
    %v498 = vpop.permute.xlu0 %497
    %499 = vrot.lane.b32.xlu0 %v291, 16
    %v500 = vpop.permute.xlu0 %499
    %501 = vrot.lane.b32.xlu0 %v293, 16
    %v502 = vpop.permute.xlu0 %501
    %503 = vrot.lane.b32.xlu0 %v295, 16
    %v504 = vpop.permute.xlu0 %503
    %505 = vrot.lane.b32.xlu0 %v297, 16
    %v506 = vpop.permute.xlu0 %505
    %507 = vrot.lane.b32.xlu0 %v299, 16
    %v508 = vpop.permute.xlu0 %507
    %509 = vrot.lane.b32.xlu0 %v301, 16
    %v510 = vpop.permute.xlu0 %509
    %vm511 = vcmp.lt.s32.totalorder %v66, 16
    %v512 = vsel %vm511, %v480, %v496
    %v513 = vsel %vm511, %v482, %v498
    %v514 = vsel %vm511, %v484, %v500
    %v515 = vsel %vm511, %v486, %v502
    %v516 = vsel %vm511, %v488, %v504
    %v517 = vsel %vm511, %v490, %v506
    %v518 = vsel %vm511, %v492, %v508
    %v519 = vsel %vm511, %v494, %v510
    %v520 = vsel %vm511, %v496, %v480
    %v521 = vsel %vm511, %v498, %v482
    %v522 = vsel %vm511, %v500, %v484
    %v523 = vsel %vm511, %v502, %v486
    %v524 = vsel %vm511, %v504, %v488
    %v525 = vsel %vm511, %v506, %v490
    %v526 = vsel %vm511, %v508, %v492
    %v527 = vsel %vm511, %v510, %v494
    %v528 = vsel %vm74, %v520, 0.0
    %v529 = vsel %vm75, %v512, 0.0
    %v530 = vsel %vm74, %v521, 0.0
    %v531 = vsel %vm75, %v513, 0.0
    %v532 = vsel %vm74, %v522, 0.0
    %v533 = vsel %vm75, %v514, 0.0
    %v534 = vsel %vm74, %v523, 0.0
    %v535 = vsel %vm75, %v515, 0.0
    %v536 = vsel %vm74, %v524, 0.0
    %v537 = vsel %vm75, %v516, 0.0
    %v538 = vsel %vm74, %v525, 0.0
    %v539 = vsel %vm75, %v517, 0.0
    %v540 = vsel %vm74, %v526, 0.0
    %v541 = vsel %vm75, %v518, 0.0
    %v542 = vsel %vm74, %v527, 0.0
    %v543 = vsel %vm75, %v519, 0.0
    %544 = vset.pattern.permute.xlu0 1
    %545 = vperm.xlu0 %544, %v47
    %v546 = vpop.permute.xlu0 %545
    %548 = vset.pattern.permute.xlu0 1
    %549 = vperm.xlu0 %548, %v48
    %v550 = vpop.permute.xlu0 %549
    %552 = vset.pattern.permute.xlu0 1
    %553 = vperm.xlu0 %552, %v49
    %v554 = vpop.permute.xlu0 %553
    %556 = vset.pattern.permute.xlu0 1
    %557 = vperm.xlu0 %556, %v50
    %v558 = vpop.permute.xlu0 %557
    %560 = vset.pattern.permute.xlu0 1
    %561 = vperm.xlu0 %560, %v51
    %v562 = vpop.permute.xlu0 %561
    %564 = vset.pattern.permute.xlu0 1
    %565 = vperm.xlu0 %564, %v52
    %v566 = vpop.permute.xlu0 %565
    %568 = vset.pattern.permute.xlu0 1
    %569 = vperm.xlu0 %568, %v53
    %v570 = vpop.permute.xlu0 %569
    %572 = vset.pattern.permute.xlu0 1
    %573 = vperm.xlu0 %572, %v54
    %v574 = vpop.permute.xlu0 %573
    %v576 = vmul.f32 %v528, %v546
    %v577 = vmul.f32 %v529, %v546
    %v578 = vmul.f32 %v530, %v550
    %v579 = vmul.f32 %v531, %v550
    %v580 = vmul.f32 %v532, %v554
    %v581 = vmul.f32 %v533, %v554
    %v582 = vmul.f32 %v534, %v558
    %v583 = vmul.f32 %v535, %v558
    %v584 = vmul.f32 %v536, %v562
    %v585 = vmul.f32 %v537, %v562
    %v586 = vmul.f32 %v538, %v566
    %v587 = vmul.f32 %v539, %v566
    %v588 = vmul.f32 %v540, %v570
    %v589 = vmul.f32 %v541, %v570
    %v590 = vmul.f32 %v542, %v574
    %v591 = vmul.f32 %v543, %v574
    %v592 = vadd.f32 %v463, %v576
    %v593 = vadd.f32 %v464, %v577
    %v594 = vadd.f32 %v465, %v578
    %v595 = vadd.f32 %v466, %v579
    %v596 = vadd.f32 %v467, %v580
    %v597 = vadd.f32 %v468, %v581
    %v598 = vadd.f32 %v469, %v582
    %v599 = vadd.f32 %v470, %v583
    %v600 = vadd.f32 %v471, %v584
    %v601 = vadd.f32 %v472, %v585
    %v602 = vadd.f32 %v473, %v586
    %v603 = vadd.f32 %v474, %v587
    %v604 = vadd.f32 %v475, %v588
    %v605 = vadd.f32 %v476, %v589
    %v606 = vadd.f32 %v477, %v590
    %v607 = vadd.f32 %v478, %v591
    %608 = vrot.lane.b32.xlu0 %v286, 15
    %v609 = vpop.permute.xlu0 %608
    %610 = vrot.lane.b32.xlu0 %v288, 15
    %v611 = vpop.permute.xlu0 %610
    %612 = vrot.lane.b32.xlu0 %v290, 15
    %v613 = vpop.permute.xlu0 %612
    %614 = vrot.lane.b32.xlu0 %v292, 15
    %v615 = vpop.permute.xlu0 %614
    %616 = vrot.lane.b32.xlu0 %v294, 15
    %v617 = vpop.permute.xlu0 %616
    %618 = vrot.lane.b32.xlu0 %v296, 15
    %v619 = vpop.permute.xlu0 %618
    %620 = vrot.lane.b32.xlu0 %v298, 15
    %v621 = vpop.permute.xlu0 %620
    %622 = vrot.lane.b32.xlu0 %v300, 15
    %v623 = vpop.permute.xlu0 %622
    %624 = vrot.lane.b32.xlu0 %v287, 15
    %v625 = vpop.permute.xlu0 %624
    %626 = vrot.lane.b32.xlu0 %v289, 15
    %v627 = vpop.permute.xlu0 %626
    %628 = vrot.lane.b32.xlu0 %v291, 15
    %v629 = vpop.permute.xlu0 %628
    %630 = vrot.lane.b32.xlu0 %v293, 15
    %v631 = vpop.permute.xlu0 %630
    %632 = vrot.lane.b32.xlu0 %v295, 15
    %v633 = vpop.permute.xlu0 %632
    %634 = vrot.lane.b32.xlu0 %v297, 15
    %v635 = vpop.permute.xlu0 %634
    %636 = vrot.lane.b32.xlu0 %v299, 15
    %v637 = vpop.permute.xlu0 %636
    %638 = vrot.lane.b32.xlu0 %v301, 15
    %v639 = vpop.permute.xlu0 %638
    %vm640 = vcmp.lt.s32.totalorder %v66, 15
    %v641 = vsel %vm640, %v609, %v625
    %v642 = vsel %vm640, %v611, %v627
    %v643 = vsel %vm640, %v613, %v629
    %v644 = vsel %vm640, %v615, %v631
    %v645 = vsel %vm640, %v617, %v633
    %v646 = vsel %vm640, %v619, %v635
    %v647 = vsel %vm640, %v621, %v637
    %v648 = vsel %vm640, %v623, %v639
    %v649 = vsel %vm640, %v625, %v609
    %v650 = vsel %vm640, %v627, %v611
    %v651 = vsel %vm640, %v629, %v613
    %v652 = vsel %vm640, %v631, %v615
    %v653 = vsel %vm640, %v633, %v617
    %v654 = vsel %vm640, %v635, %v619
    %v655 = vsel %vm640, %v637, %v621
    %v656 = vsel %vm640, %v639, %v623
    %v657 = vsel %vm80, %v649, 0.0
    %v658 = vsel %vm81, %v641, 0.0
    %v659 = vsel %vm80, %v650, 0.0
    %v660 = vsel %vm81, %v642, 0.0
    %v661 = vsel %vm80, %v651, 0.0
    %v662 = vsel %vm81, %v643, 0.0
    %v663 = vsel %vm80, %v652, 0.0
    %v664 = vsel %vm81, %v644, 0.0
    %v665 = vsel %vm80, %v653, 0.0
    %v666 = vsel %vm81, %v645, 0.0
    %v667 = vsel %vm80, %v654, 0.0
    %v668 = vsel %vm81, %v646, 0.0
    %v669 = vsel %vm80, %v655, 0.0
    %v670 = vsel %vm81, %v647, 0.0
    %v671 = vsel %vm80, %v656, 0.0
    %v672 = vsel %vm81, %v648, 0.0
    %673 = vset.pattern.permute.xlu0 2
    %674 = vperm.xlu0 %673, %v47
    %v675 = vpop.permute.xlu0 %674
    %677 = vset.pattern.permute.xlu0 2
    %678 = vperm.xlu0 %677, %v48
    %v679 = vpop.permute.xlu0 %678
    %681 = vset.pattern.permute.xlu0 2
    %682 = vperm.xlu0 %681, %v49
    %v683 = vpop.permute.xlu0 %682
    %685 = vset.pattern.permute.xlu0 2
    %686 = vperm.xlu0 %685, %v50
    %v687 = vpop.permute.xlu0 %686
    %689 = vset.pattern.permute.xlu0 2
    %690 = vperm.xlu0 %689, %v51
    %v691 = vpop.permute.xlu0 %690
    %693 = vset.pattern.permute.xlu0 2
    %694 = vperm.xlu0 %693, %v52
    %v695 = vpop.permute.xlu0 %694
    %697 = vset.pattern.permute.xlu0 2
    %698 = vperm.xlu0 %697, %v53
    %v699 = vpop.permute.xlu0 %698
    %701 = vset.pattern.permute.xlu0 2
    %702 = vperm.xlu0 %701, %v54
    %v703 = vpop.permute.xlu0 %702
    %v705 = vmul.f32 %v657, %v675
    %v706 = vmul.f32 %v658, %v675
    %v707 = vmul.f32 %v659, %v679
    %v708 = vmul.f32 %v660, %v679
    %v709 = vmul.f32 %v661, %v683
    %v710 = vmul.f32 %v662, %v683
    %v711 = vmul.f32 %v663, %v687
    %v712 = vmul.f32 %v664, %v687
    %v713 = vmul.f32 %v665, %v691
    %v714 = vmul.f32 %v666, %v691
    %v715 = vmul.f32 %v667, %v695
    %v716 = vmul.f32 %v668, %v695
    %v717 = vmul.f32 %v669, %v699
    %v718 = vmul.f32 %v670, %v699
    %v719 = vmul.f32 %v671, %v703
    %v720 = vmul.f32 %v672, %v703
    %v721 = vadd.f32 %v592, %v705
    %v722 = vadd.f32 %v593, %v706
    %v723 = vadd.f32 %v594, %v707
    %v724 = vadd.f32 %v595, %v708
    %v725 = vadd.f32 %v596, %v709
    %v726 = vadd.f32 %v597, %v710
    %v727 = vadd.f32 %v598, %v711
    %v728 = vadd.f32 %v599, %v712
    %v729 = vadd.f32 %v600, %v713
    %v730 = vadd.f32 %v601, %v714
    %v731 = vadd.f32 %v602, %v715
    %v732 = vadd.f32 %v603, %v716
    %v733 = vadd.f32 %v604, %v717
    %v734 = vadd.f32 %v605, %v718
    %v735 = vadd.f32 %v606, %v719
    %v736 = vadd.f32 %v607, %v720
    %737 = vrot.lane.b32.xlu0 %v286, 1
    %v738 = vpop.permute.xlu0 %737
    %739 = vrot.lane.b32.xlu0 %v288, 1
    %v740 = vpop.permute.xlu0 %739
    %741 = vrot.lane.b32.xlu0 %v290, 1
    %v742 = vpop.permute.xlu0 %741
    %743 = vrot.lane.b32.xlu0 %v292, 1
    %v744 = vpop.permute.xlu0 %743
    %745 = vrot.lane.b32.xlu0 %v294, 1
    %v746 = vpop.permute.xlu0 %745
    %747 = vrot.lane.b32.xlu0 %v296, 1
    %v748 = vpop.permute.xlu0 %747
    %749 = vrot.lane.b32.xlu0 %v298, 1
    %v750 = vpop.permute.xlu0 %749
    %751 = vrot.lane.b32.xlu0 %v300, 1
    %v752 = vpop.permute.xlu0 %751
    %753 = vrot.lane.b32.xlu0 %v287, 1
    %v754 = vpop.permute.xlu0 %753
    %755 = vrot.lane.b32.xlu0 %v289, 1
    %v756 = vpop.permute.xlu0 %755
    %757 = vrot.lane.b32.xlu0 %v291, 1
    %v758 = vpop.permute.xlu0 %757
    %759 = vrot.lane.b32.xlu0 %v293, 1
    %v760 = vpop.permute.xlu0 %759
    %761 = vrot.lane.b32.xlu0 %v295, 1
    %v762 = vpop.permute.xlu0 %761
    %763 = vrot.lane.b32.xlu0 %v297, 1
    %v764 = vpop.permute.xlu0 %763
    %765 = vrot.lane.b32.xlu0 %v299, 1
    %v766 = vpop.permute.xlu0 %765
    %767 = vrot.lane.b32.xlu0 %v301, 1
    %v768 = vpop.permute.xlu0 %767
    %vm769 = vcmp.lt.s32.totalorder %v66, 1
    %v770 = vsel %vm769, %v738, %v754
    %v771 = vsel %vm769, %v740, %v756
    %v772 = vsel %vm769, %v742, %v758
    %v773 = vsel %vm769, %v744, %v760
    %v774 = vsel %vm769, %v746, %v762
    %v775 = vsel %vm769, %v748, %v764
    %v776 = vsel %vm769, %v750, %v766
    %v777 = vsel %vm769, %v752, %v768
    %v778 = vsel %vm769, %v754, %v738
    %v779 = vsel %vm769, %v756, %v740
    %v780 = vsel %vm769, %v758, %v742
    %v781 = vsel %vm769, %v760, %v744
    %v782 = vsel %vm769, %v762, %v746
    %v783 = vsel %vm769, %v764, %v748
    %v784 = vsel %vm769, %v766, %v750
    %v785 = vsel %vm769, %v768, %v752
    %v786 = vsel %vm70, %v778, 0.0
    %v787 = vsel %vm71, %v770, 0.0
    %v788 = vsel %vm70, %v779, 0.0
    %v789 = vsel %vm71, %v771, 0.0
    %v790 = vsel %vm70, %v780, 0.0
    %v791 = vsel %vm71, %v772, 0.0
    %v792 = vsel %vm70, %v781, 0.0
    %v793 = vsel %vm71, %v773, 0.0
    %v794 = vsel %vm70, %v782, 0.0
    %v795 = vsel %vm71, %v774, 0.0
    %v796 = vsel %vm70, %v783, 0.0
    %v797 = vsel %vm71, %v775, 0.0
    %v798 = vsel %vm70, %v784, 0.0
    %v799 = vsel %vm71, %v776, 0.0
    %v800 = vsel %vm70, %v785, 0.0
    %v801 = vsel %vm71, %v777, 0.0
    %802 = vset.pattern.permute.xlu0 3
    %803 = vperm.xlu0 %802, %v47
    %v804 = vpop.permute.xlu0 %803
    %806 = vset.pattern.permute.xlu0 3
    %807 = vperm.xlu0 %806, %v48
    %v808 = vpop.permute.xlu0 %807
    %810 = vset.pattern.permute.xlu0 3
    %811 = vperm.xlu0 %810, %v49
    %v812 = vpop.permute.xlu0 %811
    %814 = vset.pattern.permute.xlu0 3
    %815 = vperm.xlu0 %814, %v50
    %v816 = vpop.permute.xlu0 %815
    %818 = vset.pattern.permute.xlu0 3
    %819 = vperm.xlu0 %818, %v51
    %v820 = vpop.permute.xlu0 %819
    %822 = vset.pattern.permute.xlu0 3
    %823 = vperm.xlu0 %822, %v52
    %v824 = vpop.permute.xlu0 %823
    %826 = vset.pattern.permute.xlu0 3
    %827 = vperm.xlu0 %826, %v53
    %v828 = vpop.permute.xlu0 %827
    %830 = vset.pattern.permute.xlu0 3
    %831 = vperm.xlu0 %830, %v54
    %v832 = vpop.permute.xlu0 %831
    %v834 = vmul.f32 %v786, %v804
    %v835 = vmul.f32 %v787, %v804
    %v836 = vmul.f32 %v788, %v808
    %v837 = vmul.f32 %v789, %v808
    %v838 = vmul.f32 %v790, %v812
    %v839 = vmul.f32 %v791, %v812
    %v840 = vmul.f32 %v792, %v816
    %v841 = vmul.f32 %v793, %v816
    %v842 = vmul.f32 %v794, %v820
    %v843 = vmul.f32 %v795, %v820
    %v844 = vmul.f32 %v796, %v824
    %v845 = vmul.f32 %v797, %v824
    %v846 = vmul.f32 %v798, %v828
    %v847 = vmul.f32 %v799, %v828
    %v848 = vmul.f32 %v800, %v832
    %v849 = vmul.f32 %v801, %v832
    %v850 = vadd.f32 %v721, %v834
    %v851 = vadd.f32 %v722, %v835
    %v852 = vadd.f32 %v723, %v836
    %v853 = vadd.f32 %v724, %v837
    %v854 = vadd.f32 %v725, %v838
    %v855 = vadd.f32 %v726, %v839
    %v856 = vadd.f32 %v727, %v840
    %v857 = vadd.f32 %v728, %v841
    %v858 = vadd.f32 %v729, %v842
    %v859 = vadd.f32 %v730, %v843
    %v860 = vadd.f32 %v731, %v844
    %v861 = vadd.f32 %v732, %v845
    %v862 = vadd.f32 %v733, %v846
    %v863 = vadd.f32 %v734, %v847
    %v864 = vadd.f32 %v735, %v848
    %v865 = vadd.f32 %v736, %v849
    %866 = vrot.lane.b32.xlu0 %v286, 127
    %v867 = vpop.permute.xlu0 %866
    %868 = vrot.lane.b32.xlu0 %v288, 127
    %v869 = vpop.permute.xlu0 %868
    %870 = vrot.lane.b32.xlu0 %v290, 127
    %v871 = vpop.permute.xlu0 %870
    %872 = vrot.lane.b32.xlu0 %v292, 127
    %v873 = vpop.permute.xlu0 %872
    %874 = vrot.lane.b32.xlu0 %v294, 127
    %v875 = vpop.permute.xlu0 %874
    %876 = vrot.lane.b32.xlu0 %v296, 127
    %v877 = vpop.permute.xlu0 %876
    %878 = vrot.lane.b32.xlu0 %v298, 127
    %v879 = vpop.permute.xlu0 %878
    %880 = vrot.lane.b32.xlu0 %v300, 127
    %v881 = vpop.permute.xlu0 %880
    %882 = vrot.lane.b32.xlu0 %v287, 127
    %v883 = vpop.permute.xlu0 %882
    %884 = vrot.lane.b32.xlu0 %v289, 127
    %v885 = vpop.permute.xlu0 %884
    %886 = vrot.lane.b32.xlu0 %v291, 127
    %v887 = vpop.permute.xlu0 %886
    %888 = vrot.lane.b32.xlu0 %v293, 127
    %v889 = vpop.permute.xlu0 %888
    %890 = vrot.lane.b32.xlu0 %v295, 127
    %v891 = vpop.permute.xlu0 %890
    %892 = vrot.lane.b32.xlu0 %v297, 127
    %v893 = vpop.permute.xlu0 %892
    %894 = vrot.lane.b32.xlu0 %v299, 127
    %v895 = vpop.permute.xlu0 %894
    %896 = vrot.lane.b32.xlu0 %v301, 127
    %v897 = vpop.permute.xlu0 %896
    %vm898 = vcmp.lt.s32.totalorder %v66, 127
    %v899 = vsel %vm898, %v867, %v883
    %v900 = vsel %vm898, %v869, %v885
    %v901 = vsel %vm898, %v871, %v887
    %v902 = vsel %vm898, %v873, %v889
    %v903 = vsel %vm898, %v875, %v891
    %v904 = vsel %vm898, %v877, %v893
    %v905 = vsel %vm898, %v879, %v895
    %v906 = vsel %vm898, %v881, %v897
    %v907 = vsel %vm898, %v883, %v867
    %v908 = vsel %vm898, %v885, %v869
    %v909 = vsel %vm898, %v887, %v871
    %v910 = vsel %vm898, %v889, %v873
    %v911 = vsel %vm898, %v891, %v875
    %v912 = vsel %vm898, %v893, %v877
    %v913 = vsel %vm898, %v895, %v879
    %v914 = vsel %vm898, %v897, %v881
    %v915 = vsel %vm72, %v899, 0.0
    %v916 = vsel %vm73, %v907, 0.0
    %v917 = vsel %vm72, %v900, 0.0
    %v918 = vsel %vm73, %v908, 0.0
    %v919 = vsel %vm72, %v901, 0.0
    %v920 = vsel %vm73, %v909, 0.0
    %v921 = vsel %vm72, %v902, 0.0
    %v922 = vsel %vm73, %v910, 0.0
    %v923 = vsel %vm72, %v903, 0.0
    %v924 = vsel %vm73, %v911, 0.0
    %v925 = vsel %vm72, %v904, 0.0
    %v926 = vsel %vm73, %v912, 0.0
    %v927 = vsel %vm72, %v905, 0.0
    %v928 = vsel %vm73, %v913, 0.0
    %v929 = vsel %vm72, %v906, 0.0
    %v930 = vsel %vm73, %v914, 0.0
    %931 = vset.pattern.permute.xlu0 5
    %932 = vperm.xlu0 %931, %v47
    %v933 = vpop.permute.xlu0 %932
    %935 = vset.pattern.permute.xlu0 5
    %936 = vperm.xlu0 %935, %v48
    %v937 = vpop.permute.xlu0 %936
    %939 = vset.pattern.permute.xlu0 5
    %940 = vperm.xlu0 %939, %v49
    %v941 = vpop.permute.xlu0 %940
    %943 = vset.pattern.permute.xlu0 5
    %944 = vperm.xlu0 %943, %v50
    %v945 = vpop.permute.xlu0 %944
    %947 = vset.pattern.permute.xlu0 5
    %948 = vperm.xlu0 %947, %v51
    %v949 = vpop.permute.xlu0 %948
    %951 = vset.pattern.permute.xlu0 5
    %952 = vperm.xlu0 %951, %v52
    %v953 = vpop.permute.xlu0 %952
    %955 = vset.pattern.permute.xlu0 5
    %956 = vperm.xlu0 %955, %v53
    %v957 = vpop.permute.xlu0 %956
    %959 = vset.pattern.permute.xlu0 5
    %960 = vperm.xlu0 %959, %v54
    %v961 = vpop.permute.xlu0 %960
    %v963 = vmul.f32 %v915, %v933
    %v964 = vmul.f32 %v916, %v933
    %v965 = vmul.f32 %v917, %v937
    %v966 = vmul.f32 %v918, %v937
    %v967 = vmul.f32 %v919, %v941
    %v968 = vmul.f32 %v920, %v941
    %v969 = vmul.f32 %v921, %v945
    %v970 = vmul.f32 %v922, %v945
    %v971 = vmul.f32 %v923, %v949
    %v972 = vmul.f32 %v924, %v949
    %v973 = vmul.f32 %v925, %v953
    %v974 = vmul.f32 %v926, %v953
    %v975 = vmul.f32 %v927, %v957
    %v976 = vmul.f32 %v928, %v957
    %v977 = vmul.f32 %v929, %v961
    %v978 = vmul.f32 %v930, %v961
    %v979 = vadd.f32 %v850, %v963
    %v980 = vadd.f32 %v851, %v964
    %v981 = vadd.f32 %v852, %v965
    %v982 = vadd.f32 %v853, %v966
    %v983 = vadd.f32 %v854, %v967
    %v984 = vadd.f32 %v855, %v968
    %v985 = vadd.f32 %v856, %v969
    %v986 = vadd.f32 %v857, %v970
    %v987 = vadd.f32 %v858, %v971
    %v988 = vadd.f32 %v859, %v972
    %v989 = vadd.f32 %v860, %v973
    %v990 = vadd.f32 %v861, %v974
    %v991 = vadd.f32 %v862, %v975
    %v992 = vadd.f32 %v863, %v976
    %v993 = vadd.f32 %v864, %v977
    %v994 = vadd.f32 %v865, %v978
    %995 = vrot.lane.b32.xlu0 %v286, 113
    %v996 = vpop.permute.xlu0 %995
    %997 = vrot.lane.b32.xlu0 %v288, 113
    %v998 = vpop.permute.xlu0 %997
    %999 = vrot.lane.b32.xlu0 %v290, 113
    %v1000 = vpop.permute.xlu0 %999
    %1001 = vrot.lane.b32.xlu0 %v292, 113
    %v1002 = vpop.permute.xlu0 %1001
    %1003 = vrot.lane.b32.xlu0 %v294, 113
    %v1004 = vpop.permute.xlu0 %1003
    %1005 = vrot.lane.b32.xlu0 %v296, 113
    %v1006 = vpop.permute.xlu0 %1005
    %1007 = vrot.lane.b32.xlu0 %v298, 113
    %v1008 = vpop.permute.xlu0 %1007
    %1009 = vrot.lane.b32.xlu0 %v300, 113
    %v1010 = vpop.permute.xlu0 %1009
    %1011 = vrot.lane.b32.xlu0 %v287, 113
    %v1012 = vpop.permute.xlu0 %1011
    %1013 = vrot.lane.b32.xlu0 %v289, 113
    %v1014 = vpop.permute.xlu0 %1013
    %1015 = vrot.lane.b32.xlu0 %v291, 113
    %v1016 = vpop.permute.xlu0 %1015
    %1017 = vrot.lane.b32.xlu0 %v293, 113
    %v1018 = vpop.permute.xlu0 %1017
    %1019 = vrot.lane.b32.xlu0 %v295, 113
    %v1020 = vpop.permute.xlu0 %1019
    %1021 = vrot.lane.b32.xlu0 %v297, 113
    %v1022 = vpop.permute.xlu0 %1021
    %1023 = vrot.lane.b32.xlu0 %v299, 113
    %v1024 = vpop.permute.xlu0 %1023
    %1025 = vrot.lane.b32.xlu0 %v301, 113
    %v1026 = vpop.permute.xlu0 %1025
    %vm1027 = vcmp.lt.s32.totalorder %v66, 113
    %v1028 = vsel %vm1027, %v996, %v1012
    %v1029 = vsel %vm1027, %v998, %v1014
    %v1030 = vsel %vm1027, %v1000, %v1016
    %v1031 = vsel %vm1027, %v1002, %v1018
    %v1032 = vsel %vm1027, %v1004, %v1020
    %v1033 = vsel %vm1027, %v1006, %v1022
    %v1034 = vsel %vm1027, %v1008, %v1024
    %v1035 = vsel %vm1027, %v1010, %v1026
    %v1036 = vsel %vm1027, %v1012, %v996
    %v1037 = vsel %vm1027, %v1014, %v998
    %v1038 = vsel %vm1027, %v1016, %v1000
    %v1039 = vsel %vm1027, %v1018, %v1002
    %v1040 = vsel %vm1027, %v1020, %v1004
    %v1041 = vsel %vm1027, %v1022, %v1006
    %v1042 = vsel %vm1027, %v1024, %v1008
    %v1043 = vsel %vm1027, %v1026, %v1010
    %v1044 = vsel %vm82, %v1028, 0.0
    %v1045 = vsel %vm83, %v1036, 0.0
    %v1046 = vsel %vm82, %v1029, 0.0
    %v1047 = vsel %vm83, %v1037, 0.0
    %v1048 = vsel %vm82, %v1030, 0.0
    %v1049 = vsel %vm83, %v1038, 0.0
    %v1050 = vsel %vm82, %v1031, 0.0
    %v1051 = vsel %vm83, %v1039, 0.0
    %v1052 = vsel %vm82, %v1032, 0.0
    %v1053 = vsel %vm83, %v1040, 0.0
    %v1054 = vsel %vm82, %v1033, 0.0
    %v1055 = vsel %vm83, %v1041, 0.0
    %v1056 = vsel %vm82, %v1034, 0.0
    %v1057 = vsel %vm83, %v1042, 0.0
    %v1058 = vsel %vm82, %v1035, 0.0
    %v1059 = vsel %vm83, %v1043, 0.0
    %1060 = vset.pattern.permute.xlu0 6
    %1061 = vperm.xlu0 %1060, %v47
    %v1062 = vpop.permute.xlu0 %1061
    %1064 = vset.pattern.permute.xlu0 6
    %1065 = vperm.xlu0 %1064, %v48
    %v1066 = vpop.permute.xlu0 %1065
    %1068 = vset.pattern.permute.xlu0 6
    %1069 = vperm.xlu0 %1068, %v49
    %v1070 = vpop.permute.xlu0 %1069
    %1072 = vset.pattern.permute.xlu0 6
    %1073 = vperm.xlu0 %1072, %v50
    %v1074 = vpop.permute.xlu0 %1073
    %1076 = vset.pattern.permute.xlu0 6
    %1077 = vperm.xlu0 %1076, %v51
    %v1078 = vpop.permute.xlu0 %1077
    %1080 = vset.pattern.permute.xlu0 6
    %1081 = vperm.xlu0 %1080, %v52
    %v1082 = vpop.permute.xlu0 %1081
    %1084 = vset.pattern.permute.xlu0 6
    %1085 = vperm.xlu0 %1084, %v53
    %v1086 = vpop.permute.xlu0 %1085
    %1088 = vset.pattern.permute.xlu0 6
    %1089 = vperm.xlu0 %1088, %v54
    %v1090 = vpop.permute.xlu0 %1089
    %v1092 = vmul.f32 %v1044, %v1062
    %v1093 = vmul.f32 %v1045, %v1062
    %v1094 = vmul.f32 %v1046, %v1066
    %v1095 = vmul.f32 %v1047, %v1066
    %v1096 = vmul.f32 %v1048, %v1070
    %v1097 = vmul.f32 %v1049, %v1070
    %v1098 = vmul.f32 %v1050, %v1074
    %v1099 = vmul.f32 %v1051, %v1074
    %v1100 = vmul.f32 %v1052, %v1078
    %v1101 = vmul.f32 %v1053, %v1078
    %v1102 = vmul.f32 %v1054, %v1082
    %v1103 = vmul.f32 %v1055, %v1082
    %v1104 = vmul.f32 %v1056, %v1086
    %v1105 = vmul.f32 %v1057, %v1086
    %v1106 = vmul.f32 %v1058, %v1090
    %v1107 = vmul.f32 %v1059, %v1090
    %v1108 = vadd.f32 %v979, %v1092
    %v1109 = vadd.f32 %v980, %v1093
    %v1110 = vadd.f32 %v981, %v1094
    %v1111 = vadd.f32 %v982, %v1095
    %v1112 = vadd.f32 %v983, %v1096
    %v1113 = vadd.f32 %v984, %v1097
    %v1114 = vadd.f32 %v985, %v1098
    %v1115 = vadd.f32 %v986, %v1099
    %v1116 = vadd.f32 %v987, %v1100
    %v1117 = vadd.f32 %v988, %v1101
    %v1118 = vadd.f32 %v989, %v1102
    %v1119 = vadd.f32 %v990, %v1103
    %v1120 = vadd.f32 %v991, %v1104
    %v1121 = vadd.f32 %v992, %v1105
    %v1122 = vadd.f32 %v993, %v1106
    %v1123 = vadd.f32 %v994, %v1107
    %1124 = vrot.lane.b32.xlu0 %v286, 112
    %v1125 = vpop.permute.xlu0 %1124
    %1126 = vrot.lane.b32.xlu0 %v288, 112
    %v1127 = vpop.permute.xlu0 %1126
    %1128 = vrot.lane.b32.xlu0 %v290, 112
    %v1129 = vpop.permute.xlu0 %1128
    %1130 = vrot.lane.b32.xlu0 %v292, 112
    %v1131 = vpop.permute.xlu0 %1130
    %1132 = vrot.lane.b32.xlu0 %v294, 112
    %v1133 = vpop.permute.xlu0 %1132
    %1134 = vrot.lane.b32.xlu0 %v296, 112
    %v1135 = vpop.permute.xlu0 %1134
    %1136 = vrot.lane.b32.xlu0 %v298, 112
    %v1137 = vpop.permute.xlu0 %1136
    %1138 = vrot.lane.b32.xlu0 %v300, 112
    %v1139 = vpop.permute.xlu0 %1138
    %1140 = vrot.lane.b32.xlu0 %v287, 112
    %v1141 = vpop.permute.xlu0 %1140
    %1142 = vrot.lane.b32.xlu0 %v289, 112
    %v1143 = vpop.permute.xlu0 %1142
    %1144 = vrot.lane.b32.xlu0 %v291, 112
    %v1145 = vpop.permute.xlu0 %1144
    %1146 = vrot.lane.b32.xlu0 %v293, 112
    %v1147 = vpop.permute.xlu0 %1146
    %1148 = vrot.lane.b32.xlu0 %v295, 112
    %v1149 = vpop.permute.xlu0 %1148
    %1150 = vrot.lane.b32.xlu0 %v297, 112
    %v1151 = vpop.permute.xlu0 %1150
    %1152 = vrot.lane.b32.xlu0 %v299, 112
    %v1153 = vpop.permute.xlu0 %1152
    %1154 = vrot.lane.b32.xlu0 %v301, 112
    %v1155 = vpop.permute.xlu0 %1154
    %vm1156 = vcmp.lt.s32.totalorder %v66, 112
    %v1157 = vsel %vm1156, %v1125, %v1141
    %v1158 = vsel %vm1156, %v1127, %v1143
    %v1159 = vsel %vm1156, %v1129, %v1145
    %v1160 = vsel %vm1156, %v1131, %v1147
    %v1161 = vsel %vm1156, %v1133, %v1149
    %v1162 = vsel %vm1156, %v1135, %v1151
    %v1163 = vsel %vm1156, %v1137, %v1153
    %v1164 = vsel %vm1156, %v1139, %v1155
    %v1165 = vsel %vm1156, %v1141, %v1125
    %v1166 = vsel %vm1156, %v1143, %v1127
    %v1167 = vsel %vm1156, %v1145, %v1129
    %v1168 = vsel %vm1156, %v1147, %v1131
    %v1169 = vsel %vm1156, %v1149, %v1133
    %v1170 = vsel %vm1156, %v1151, %v1135
    %v1171 = vsel %vm1156, %v1153, %v1137
    %v1172 = vsel %vm1156, %v1155, %v1139
    %v1173 = vsel %vm76, %v1157, 0.0
    %v1174 = vsel %vm77, %v1165, 0.0
    %v1175 = vsel %vm76, %v1158, 0.0
    %v1176 = vsel %vm77, %v1166, 0.0
    %v1177 = vsel %vm76, %v1159, 0.0
    %v1178 = vsel %vm77, %v1167, 0.0
    %v1179 = vsel %vm76, %v1160, 0.0
    %v1180 = vsel %vm77, %v1168, 0.0
    %v1181 = vsel %vm76, %v1161, 0.0
    %v1182 = vsel %vm77, %v1169, 0.0
    %v1183 = vsel %vm76, %v1162, 0.0
    %v1184 = vsel %vm77, %v1170, 0.0
    %v1185 = vsel %vm76, %v1163, 0.0
    %v1186 = vsel %vm77, %v1171, 0.0
    %v1187 = vsel %vm76, %v1164, 0.0
    %v1188 = vsel %vm77, %v1172, 0.0
    %1189 = vset.pattern.permute.xlu0 7
    %1190 = vperm.xlu0 %1189, %v47
    %v1191 = vpop.permute.xlu0 %1190
    %1193 = vset.pattern.permute.xlu0 7
    %1194 = vperm.xlu0 %1193, %v48
    %v1195 = vpop.permute.xlu0 %1194
    %1197 = vset.pattern.permute.xlu0 7
    %1198 = vperm.xlu0 %1197, %v49
    %v1199 = vpop.permute.xlu0 %1198
    %1201 = vset.pattern.permute.xlu0 7
    %1202 = vperm.xlu0 %1201, %v50
    %v1203 = vpop.permute.xlu0 %1202
    %1205 = vset.pattern.permute.xlu0 7
    %1206 = vperm.xlu0 %1205, %v51
    %v1207 = vpop.permute.xlu0 %1206
    %1209 = vset.pattern.permute.xlu0 7
    %1210 = vperm.xlu0 %1209, %v52
    %v1211 = vpop.permute.xlu0 %1210
    %1213 = vset.pattern.permute.xlu0 7
    %1214 = vperm.xlu0 %1213, %v53
    %v1215 = vpop.permute.xlu0 %1214
    %1217 = vset.pattern.permute.xlu0 7
    %1218 = vperm.xlu0 %1217, %v54
    %v1219 = vpop.permute.xlu0 %1218
    %v1221 = vmul.f32 %v1173, %v1191
    %v1222 = vmul.f32 %v1174, %v1191
    %v1223 = vmul.f32 %v1175, %v1195
    %v1224 = vmul.f32 %v1176, %v1195
    %v1225 = vmul.f32 %v1177, %v1199
    %v1226 = vmul.f32 %v1178, %v1199
    %v1227 = vmul.f32 %v1179, %v1203
    %v1228 = vmul.f32 %v1180, %v1203
    %v1229 = vmul.f32 %v1181, %v1207
    %v1230 = vmul.f32 %v1182, %v1207
    %v1231 = vmul.f32 %v1183, %v1211
    %v1232 = vmul.f32 %v1184, %v1211
    %v1233 = vmul.f32 %v1185, %v1215
    %v1234 = vmul.f32 %v1186, %v1215
    %v1235 = vmul.f32 %v1187, %v1219
    %v1236 = vmul.f32 %v1188, %v1219
    %v1237 = vadd.f32 %v1108, %v1221
    %v1238 = vadd.f32 %v1109, %v1222
    %v1239 = vadd.f32 %v1110, %v1223
    %v1240 = vadd.f32 %v1111, %v1224
    %v1241 = vadd.f32 %v1112, %v1225
    %v1242 = vadd.f32 %v1113, %v1226
    %v1243 = vadd.f32 %v1114, %v1227
    %v1244 = vadd.f32 %v1115, %v1228
    %v1245 = vadd.f32 %v1116, %v1229
    %v1246 = vadd.f32 %v1117, %v1230
    %v1247 = vadd.f32 %v1118, %v1231
    %v1248 = vadd.f32 %v1119, %v1232
    %v1249 = vadd.f32 %v1120, %v1233
    %v1250 = vadd.f32 %v1121, %v1234
    %v1251 = vadd.f32 %v1122, %v1235
    %v1252 = vadd.f32 %v1123, %v1236
    %1253 = vrot.lane.b32.xlu0 %v286, 111
    %v1254 = vpop.permute.xlu0 %1253
    %1255 = vrot.lane.b32.xlu0 %v288, 111
    %v1256 = vpop.permute.xlu0 %1255
    %1257 = vrot.lane.b32.xlu0 %v290, 111
    %v1258 = vpop.permute.xlu0 %1257
    %1259 = vrot.lane.b32.xlu0 %v292, 111
    %v1260 = vpop.permute.xlu0 %1259
    %1261 = vrot.lane.b32.xlu0 %v294, 111
    %v1262 = vpop.permute.xlu0 %1261
    %1263 = vrot.lane.b32.xlu0 %v296, 111
    %v1264 = vpop.permute.xlu0 %1263
    %1265 = vrot.lane.b32.xlu0 %v298, 111
    %v1266 = vpop.permute.xlu0 %1265
    %1267 = vrot.lane.b32.xlu0 %v300, 111
    %v1268 = vpop.permute.xlu0 %1267
    %1269 = vrot.lane.b32.xlu0 %v287, 111
    %v1270 = vpop.permute.xlu0 %1269
    %1271 = vrot.lane.b32.xlu0 %v289, 111
    %v1272 = vpop.permute.xlu0 %1271
    %1273 = vrot.lane.b32.xlu0 %v291, 111
    %v1274 = vpop.permute.xlu0 %1273
    %1275 = vrot.lane.b32.xlu0 %v293, 111
    %v1276 = vpop.permute.xlu0 %1275
    %1277 = vrot.lane.b32.xlu0 %v295, 111
    %v1278 = vpop.permute.xlu0 %1277
    %1279 = vrot.lane.b32.xlu0 %v297, 111
    %v1280 = vpop.permute.xlu0 %1279
    %1281 = vrot.lane.b32.xlu0 %v299, 111
    %v1282 = vpop.permute.xlu0 %1281
    %1283 = vrot.lane.b32.xlu0 %v301, 111
    %v1284 = vpop.permute.xlu0 %1283
    %vm1285 = vcmp.lt.s32.totalorder %v66, 111
    %v1286 = vsel %vm1285, %v1254, %v1270
    %v1287 = vsel %vm1285, %v1256, %v1272
    %v1288 = vsel %vm1285, %v1258, %v1274
    %v1289 = vsel %vm1285, %v1260, %v1276
    %v1290 = vsel %vm1285, %v1262, %v1278
    %v1291 = vsel %vm1285, %v1264, %v1280
    %v1292 = vsel %vm1285, %v1266, %v1282
    %v1293 = vsel %vm1285, %v1268, %v1284
    %v1294 = vsel %vm1285, %v1270, %v1254
    %v1295 = vsel %vm1285, %v1272, %v1256
    %v1296 = vsel %vm1285, %v1274, %v1258
    %v1297 = vsel %vm1285, %v1276, %v1260
    %v1298 = vsel %vm1285, %v1278, %v1262
    %v1299 = vsel %vm1285, %v1280, %v1264
    %v1300 = vsel %vm1285, %v1282, %v1266
    %v1301 = vsel %vm1285, %v1284, %v1268
    %v1302 = vsel %vm84, %v1286, 0.0
    %v1303 = vsel %vm85, %v1294, 0.0
    %v1304 = vsel %vm84, %v1287, 0.0
    %v1305 = vsel %vm85, %v1295, 0.0
    %v1306 = vsel %vm84, %v1288, 0.0
    %v1307 = vsel %vm85, %v1296, 0.0
    %v1308 = vsel %vm84, %v1289, 0.0
    %v1309 = vsel %vm85, %v1297, 0.0
    %v1310 = vsel %vm84, %v1290, 0.0
    %v1311 = vsel %vm85, %v1298, 0.0
    %v1312 = vsel %vm84, %v1291, 0.0
    %v1313 = vsel %vm85, %v1299, 0.0
    %v1314 = vsel %vm84, %v1292, 0.0
    %v1315 = vsel %vm85, %v1300, 0.0
    %v1316 = vsel %vm84, %v1293, 0.0
    %v1317 = vsel %vm85, %v1301, 0.0
    %1318 = vset.pattern.permute.xlu0 8
    %1319 = vperm.xlu0 %1318, %v47
    %v1320 = vpop.permute.xlu0 %1319
    %1322 = vset.pattern.permute.xlu0 8
    %1323 = vperm.xlu0 %1322, %v48
    %v1324 = vpop.permute.xlu0 %1323
    %1326 = vset.pattern.permute.xlu0 8
    %1327 = vperm.xlu0 %1326, %v49
    %v1328 = vpop.permute.xlu0 %1327
    %1330 = vset.pattern.permute.xlu0 8
    %1331 = vperm.xlu0 %1330, %v50
    %v1332 = vpop.permute.xlu0 %1331
    %1334 = vset.pattern.permute.xlu0 8
    %1335 = vperm.xlu0 %1334, %v51
    %v1336 = vpop.permute.xlu0 %1335
    %1338 = vset.pattern.permute.xlu0 8
    %1339 = vperm.xlu0 %1338, %v52
    %v1340 = vpop.permute.xlu0 %1339
    %1342 = vset.pattern.permute.xlu0 8
    %1343 = vperm.xlu0 %1342, %v53
    %v1344 = vpop.permute.xlu0 %1343
    %1346 = vset.pattern.permute.xlu0 8
    %1347 = vperm.xlu0 %1346, %v54
    %v1348 = vpop.permute.xlu0 %1347
    %v1350 = vmul.f32 %v1302, %v1320
    %v1351 = vmul.f32 %v1303, %v1320
    %v1352 = vmul.f32 %v1304, %v1324
    %v1353 = vmul.f32 %v1305, %v1324
    %v1354 = vmul.f32 %v1306, %v1328
    %v1355 = vmul.f32 %v1307, %v1328
    %v1356 = vmul.f32 %v1308, %v1332
    %v1357 = vmul.f32 %v1309, %v1332
    %v1358 = vmul.f32 %v1310, %v1336
    %v1359 = vmul.f32 %v1311, %v1336
    %v1360 = vmul.f32 %v1312, %v1340
    %v1361 = vmul.f32 %v1313, %v1340
    %v1362 = vmul.f32 %v1314, %v1344
    %v1363 = vmul.f32 %v1315, %v1344
    %v1364 = vmul.f32 %v1316, %v1348
    %v1365 = vmul.f32 %v1317, %v1348
    %v1366 = vadd.f32 %v1237, %v1350
    %v1367 = vadd.f32 %v1238, %v1351
    %v1368 = vadd.f32 %v1239, %v1352
    %v1369 = vadd.f32 %v1240, %v1353
    %v1370 = vadd.f32 %v1241, %v1354
    %v1371 = vadd.f32 %v1242, %v1355
    %v1372 = vadd.f32 %v1243, %v1356
    %v1373 = vadd.f32 %v1244, %v1357
    %v1374 = vadd.f32 %v1245, %v1358
    %v1375 = vadd.f32 %v1246, %v1359
    %v1376 = vadd.f32 %v1247, %v1360
    %v1377 = vadd.f32 %v1248, %v1361
    %v1378 = vadd.f32 %v1249, %v1362
    %v1379 = vadd.f32 %v1250, %v1363
    %v1380 = vadd.f32 %v1251, %v1364
    %v1381 = vadd.f32 %v1252, %v1365
    %1382 = vset.pattern.permute.xlu0 9
    %1383 = vperm.xlu0 %1382, %v47
    %v1384 = vpop.permute.xlu0 %1383
    %1386 = vset.pattern.permute.xlu0 9
    %1387 = vperm.xlu0 %1386, %v48
    %v1388 = vpop.permute.xlu0 %1387
    %1390 = vset.pattern.permute.xlu0 9
    %1391 = vperm.xlu0 %1390, %v49
    %v1392 = vpop.permute.xlu0 %1391
    %1394 = vset.pattern.permute.xlu0 9
    %1395 = vperm.xlu0 %1394, %v50
    %v1396 = vpop.permute.xlu0 %1395
    %1398 = vset.pattern.permute.xlu0 9
    %1399 = vperm.xlu0 %1398, %v51
    %v1400 = vpop.permute.xlu0 %1399
    %1402 = vset.pattern.permute.xlu0 9
    %1403 = vperm.xlu0 %1402, %v52
    %v1404 = vpop.permute.xlu0 %1403
    %1406 = vset.pattern.permute.xlu0 9
    %1407 = vperm.xlu0 %1406, %v53
    %v1408 = vpop.permute.xlu0 %1407
    %1410 = vset.pattern.permute.xlu0 9
    %1411 = vperm.xlu0 %1410, %v54
    %v1412 = vpop.permute.xlu0 %1411
    %v1414 = vadd.f32 %v1366, %v1384
    %v1415 = vadd.f32 %v1367, %v1384
    %v1416 = vadd.f32 %v1368, %v1388
    %v1417 = vadd.f32 %v1369, %v1388
    %v1418 = vadd.f32 %v1370, %v1392
    %v1419 = vadd.f32 %v1371, %v1392
    %v1420 = vadd.f32 %v1372, %v1396
    %v1421 = vadd.f32 %v1373, %v1396
    %v1422 = vadd.f32 %v1374, %v1400
    %v1423 = vadd.f32 %v1375, %v1400
    %v1424 = vadd.f32 %v1376, %v1404
    %v1425 = vadd.f32 %v1377, %v1404
    %v1426 = vadd.f32 %v1378, %v1408
    %v1427 = vadd.f32 %v1379, %v1408
    %v1428 = vadd.f32 %v1380, %v1412
    %v1429 = vadd.f32 %v1381, %v1412
    %v1430 = vadd.f32 %v1414, 3.0
    %v1431 = vadd.f32 %v1415, 3.0
    %v1432 = vadd.f32 %v1416, 3.0
    %v1433 = vadd.f32 %v1417, 3.0
    %v1434 = vadd.f32 %v1418, 3.0
    %v1435 = vadd.f32 %v1419, 3.0
    %v1436 = vadd.f32 %v1420, 3.0
    %v1437 = vadd.f32 %v1421, 3.0
    %v1438 = vadd.f32 %v1422, 3.0
    %v1439 = vadd.f32 %v1423, 3.0
    %v1440 = vadd.f32 %v1424, 3.0
    %v1441 = vadd.f32 %v1425, 3.0
    %v1442 = vadd.f32 %v1426, 3.0
    %v1443 = vadd.f32 %v1427, 3.0
    %v1444 = vadd.f32 %v1428, 3.0
    %v1445 = vadd.f32 %v1429, 3.0
    %v1446 = vmax.f32 %v1430, 0.0
    %v1447 = vmax.f32 %v1431, 0.0
    %v1448 = vmax.f32 %v1432, 0.0
    %v1449 = vmax.f32 %v1433, 0.0
    %v1450 = vmax.f32 %v1434, 0.0
    %v1451 = vmax.f32 %v1435, 0.0
    %v1452 = vmax.f32 %v1436, 0.0
    %v1453 = vmax.f32 %v1437, 0.0
    %v1454 = vmax.f32 %v1438, 0.0
    %v1455 = vmax.f32 %v1439, 0.0
    %v1456 = vmax.f32 %v1440, 0.0
    %v1457 = vmax.f32 %v1441, 0.0
    %v1458 = vmax.f32 %v1442, 0.0
    %v1459 = vmax.f32 %v1443, 0.0
    %v1460 = vmax.f32 %v1444, 0.0
    %v1461 = vmax.f32 %v1445, 0.0
    %v1462 = vmin.f32 %v1446, 6.0
    %v1463 = vmin.f32 %v1447, 6.0
    %v1464 = vmin.f32 %v1448, 6.0
    %v1465 = vmin.f32 %v1449, 6.0
    %v1466 = vmin.f32 %v1450, 6.0
    %v1467 = vmin.f32 %v1451, 6.0
    %v1468 = vmin.f32 %v1452, 6.0
    %v1469 = vmin.f32 %v1453, 6.0
    %v1470 = vmin.f32 %v1454, 6.0
    %v1471 = vmin.f32 %v1455, 6.0
    %v1472 = vmin.f32 %v1456, 6.0
    %v1473 = vmin.f32 %v1457, 6.0
    %v1474 = vmin.f32 %v1458, 6.0
    %v1475 = vmin.f32 %v1459, 6.0
    %v1476 = vmin.f32 %v1460, 6.0
    %v1477 = vmin.f32 %v1461, 6.0
    %v1478 = vmul.f32 %v1414, %v1462
    %v1479 = vmul.f32 %v1415, %v1463
    %v1480 = vmul.f32 %v1416, %v1464
    %v1481 = vmul.f32 %v1417, %v1465
    %v1482 = vmul.f32 %v1418, %v1466
    %v1483 = vmul.f32 %v1419, %v1467
    %v1484 = vmul.f32 %v1420, %v1468
    %v1485 = vmul.f32 %v1421, %v1469
    %v1486 = vmul.f32 %v1422, %v1470
    %v1487 = vmul.f32 %v1423, %v1471
    %v1488 = vmul.f32 %v1424, %v1472
    %v1489 = vmul.f32 %v1425, %v1473
    %v1490 = vmul.f32 %v1426, %v1474
    %v1491 = vmul.f32 %v1427, %v1475
    %v1492 = vmul.f32 %v1428, %v1476
    %v1493 = vmul.f32 %v1429, %v1477
    %v1494 = vadd.f32 %v1478, %v1479
    %1495 = vadd.xlane.f32.xlu0 %v1494
    %v1496 = vpop.xlane.xlu0 %1495
    %v1497 = vadd.f32 %v1480, %v1481
    %1498 = vadd.xlane.f32.xlu0 %v1497
    %v1499 = vpop.xlane.xlu0 %1498
    %v1500 = vadd.f32 %v1482, %v1483
    %1501 = vadd.xlane.f32.xlu0 %v1500
    %v1502 = vpop.xlane.xlu0 %1501
    %v1503 = vadd.f32 %v1484, %v1485
    %1504 = vadd.xlane.f32.xlu0 %v1503
    %v1505 = vpop.xlane.xlu0 %1504
    %v1506 = vadd.f32 %v1486, %v1487
    %1507 = vadd.xlane.f32.xlu0 %v1506
    %v1508 = vpop.xlane.xlu0 %1507
    %v1509 = vadd.f32 %v1488, %v1489
    %1510 = vadd.xlane.f32.xlu0 %v1509
    %v1511 = vpop.xlane.xlu0 %1510
    %v1512 = vadd.f32 %v1490, %v1491
    %1513 = vadd.xlane.f32.xlu0 %v1512
    %v1514 = vpop.xlane.xlu0 %1513
    %v1515 = vadd.f32 %v1492, %v1493
    %1516 = vadd.xlane.f32.xlu0 %v1515
    %v1517 = vpop.xlane.xlu0 %1516
    %v1518 = vmul.f32 %v1496, 0.00390625
    %v1519 = vmul.f32 %v1499, 0.00390625
    %v1520 = vmul.f32 %v1502, 0.00390625
    %v1521 = vmul.f32 %v1505, 0.00390625
    %v1522 = vmul.f32 %v1508, 0.00390625
    %v1523 = vmul.f32 %v1511, 0.00390625
    %v1524 = vmul.f32 %v1514, 0.00390625
    %v1525 = vmul.f32 %v1517, 0.00390625
    %v1526 = vmul.f32 %v47, %v1518
    %v1527 = vmul.f32 %v48, %v1519
    %v1528 = vmul.f32 %v49, %v1520
    %v1529 = vmul.f32 %v50, %v1521
    %v1530 = vmul.f32 %v51, %v1522
    %v1531 = vmul.f32 %v52, %v1523
    %v1532 = vmul.f32 %v53, %v1524
    %v1533 = vmul.f32 %v54, %v1525
    %vm1534 = vcmask 261248
    %v1535 = vsel %vm1534, %v1526, 0.0
    %v1536 = vsel %vm1534, %v1527, 0.0
    %v1537 = vadd.f32 %v1535, %v1536
    %v1538 = vsel %vm1534, %v1528, 0.0
    %v1539 = vadd.f32 %v1537, %v1538
    %v1540 = vsel %vm1534, %v1529, 0.0
    %v1541 = vadd.f32 %v1539, %v1540
    %v1542 = vsel %vm1534, %v1530, 0.0
    %v1543 = vadd.f32 %v1541, %v1542
    %v1544 = vsel %vm1534, %v1531, 0.0
    %v1545 = vadd.f32 %v1543, %v1544
    %v1546 = vsel %vm1534, %v1532, 0.0
    %v1547 = vadd.f32 %v1545, %v1546
    %v1548 = vsel %vm1534, %v1533, 0.0
    %v1549 = vadd.f32 %v1547, %v1548
    %v1550 = vrot.slane %v1549, 4
    %v1551 = vadd.f32 %v1549, %v1550
    %v1552 = vrot.slane %v1551, 2
    %v1553 = vadd.f32 %v1551, %v1552
    %v1554 = vrot.slane %v1553, 1
    %v1555 = vadd.f32 %v1553, %v1554
    %1556 = vrot.lane.b32.xlu0 %v47, 96
    %v1557 = vpop.permute.xlu0 %1556
    %v1559 = vadd.f32 %v1555, %v1557
    %v1560 = vmax.f32 %v1559, 0.0
    %v1561 = vlaneseq
    %v1562 = vshrl.u32 %v1561, 7
    %v1563 = vsub.s32 0, %v1562
    %v1564 = vrot.slane %v1560, %v1563
    %1566 = vrot.lane.b32.xlu0 %v1564, 16
    %v1567 = vpop.permute.xlu0 %1566
    %v1569 = vmul.f32 %v47, %v1567
    %v1570 = vmul.f32 %v48, %v1567
    %v1571 = vmul.f32 %v49, %v1567
    %v1572 = vmul.f32 %v50, %v1567
    %v1573 = vmul.f32 %v51, %v1567
    %v1574 = vmul.f32 %v52, %v1567
    %v1575 = vmul.f32 %v53, %v1567
    %v1576 = vmul.f32 %v54, %v1567
    %1585 = vrot.lane.b32.xlu0 %v1569, 96
    %v1586 = vpop.permute.xlu0 %1585
    %1587 = vrot.lane.b32.xlu0 %v1570, 96
    %v1588 = vpop.permute.xlu0 %1587
    %1589 = vrot.lane.b32.xlu0 %v1571, 96
    %v1590 = vpop.permute.xlu0 %1589
    %1591 = vrot.lane.b32.xlu0 %v1572, 96
    %v1592 = vpop.permute.xlu0 %1591
    %1593 = vrot.lane.b32.xlu0 %v1573, 96
    %v1594 = vpop.permute.xlu0 %1593
    %1595 = vrot.lane.b32.xlu0 %v1574, 96
    %v1596 = vpop.permute.xlu0 %1595
    %1597 = vrot.lane.b32.xlu0 %v1575, 96
    %v1598 = vpop.permute.xlu0 %1597
    %1599 = vrot.lane.b32.xlu0 %v1576, 96
    %v1600 = vpop.permute.xlu0 %1599
    %v1609 = vsel %vm152, %v1586, 0.0
    %1610 = vadd.xlane.f32.xlu0 %v1609
    %v1611 = vpop.xlane.xlu0 %1610
    %v1612 = vsel %vm152, %v1588, 0.0
    %1613 = vadd.xlane.f32.xlu0 %v1612
    %v1614 = vpop.xlane.xlu0 %1613
    %v1615 = vsel %vm152, %v1590, 0.0
    %1616 = vadd.xlane.f32.xlu0 %v1615
    %v1617 = vpop.xlane.xlu0 %1616
    %v1618 = vsel %vm152, %v1592, 0.0
    %1619 = vadd.xlane.f32.xlu0 %v1618
    %v1620 = vpop.xlane.xlu0 %1619
    %v1621 = vsel %vm152, %v1594, 0.0
    %1622 = vadd.xlane.f32.xlu0 %v1621
    %v1623 = vpop.xlane.xlu0 %1622
    %v1624 = vsel %vm152, %v1596, 0.0
    %1625 = vadd.xlane.f32.xlu0 %v1624
    %v1626 = vpop.xlane.xlu0 %1625
    %v1627 = vsel %vm152, %v1598, 0.0
    %1628 = vadd.xlane.f32.xlu0 %v1627
    %v1629 = vpop.xlane.xlu0 %1628
    %v1630 = vsel %vm152, %v1600, 0.0
    %1631 = vadd.xlane.f32.xlu0 %v1630
    %v1632 = vpop.xlane.xlu0 %1631
    %v1633 = vadd.f32 %v1611, %v47
    %v1634 = vadd.f32 %v1614, %v48
    %v1635 = vadd.f32 %v1617, %v49
    %v1636 = vadd.f32 %v1620, %v50
    %v1637 = vadd.f32 %v1623, %v51
    %v1638 = vadd.f32 %v1626, %v52
    %v1639 = vadd.f32 %v1629, %v53
    %v1640 = vadd.f32 %v1632, %v54
    %v1641 = vadd.f32 %v1633, 3.0
    %v1642 = vadd.f32 %v1634, 3.0
    %v1643 = vadd.f32 %v1635, 3.0
    %v1644 = vadd.f32 %v1636, 3.0
    %v1645 = vadd.f32 %v1637, 3.0
    %v1646 = vadd.f32 %v1638, 3.0
    %v1647 = vadd.f32 %v1639, 3.0
    %v1648 = vadd.f32 %v1640, 3.0
    %v1649 = vmax.f32 %v1641, 0.0
    %v1650 = vmax.f32 %v1642, 0.0
    %v1651 = vmax.f32 %v1643, 0.0
    %v1652 = vmax.f32 %v1644, 0.0
    %v1653 = vmax.f32 %v1645, 0.0
    %v1654 = vmax.f32 %v1646, 0.0
    %v1655 = vmax.f32 %v1647, 0.0
    %v1656 = vmax.f32 %v1648, 0.0
    %v1657 = vmin.f32 %v1649, 6.0
    %v1658 = vmin.f32 %v1650, 6.0
    %v1659 = vmin.f32 %v1651, 6.0
    %v1660 = vmin.f32 %v1652, 6.0
    %v1661 = vmin.f32 %v1653, 6.0
    %v1662 = vmin.f32 %v1654, 6.0
    %v1663 = vmin.f32 %v1655, 6.0
    %v1664 = vmin.f32 %v1656, 6.0
    %v1665 = vmul.f32 %v1657, 0.027777778
    %v1666 = vmul.f32 %v1658, 0.027777778
    %v1667 = vmul.f32 %v1659, 0.027777778
    %v1668 = vmul.f32 %v1660, 0.027777778
    %v1669 = vmul.f32 %v1661, 0.027777778
    %v1670 = vmul.f32 %v1662, 0.027777778
    %v1671 = vmul.f32 %v1663, 0.027777778
    %v1672 = vmul.f32 %v1664, 0.027777778
    %1674 = vset.pattern.permute.xlu0 11
    %1675 = vperm.xlu0 %1674, %v1665
    %v1676 = vpop.permute.xlu0 %1675
    %1679 = vset.pattern.permute.xlu0 11
    %1680 = vperm.xlu0 %1679, %v1666
    %v1681 = vpop.permute.xlu0 %1680
    %1684 = vset.pattern.permute.xlu0 11
    %1685 = vperm.xlu0 %1684, %v1667
    %v1686 = vpop.permute.xlu0 %1685
    %1689 = vset.pattern.permute.xlu0 11
    %1690 = vperm.xlu0 %1689, %v1668
    %v1691 = vpop.permute.xlu0 %1690
    %1694 = vset.pattern.permute.xlu0 11
    %1695 = vperm.xlu0 %1694, %v1669
    %v1696 = vpop.permute.xlu0 %1695
    %1699 = vset.pattern.permute.xlu0 11
    %1700 = vperm.xlu0 %1699, %v1670
    %v1701 = vpop.permute.xlu0 %1700
    %1704 = vset.pattern.permute.xlu0 11
    %1705 = vperm.xlu0 %1704, %v1671
    %v1706 = vpop.permute.xlu0 %1705
    %1709 = vset.pattern.permute.xlu0 11
    %1710 = vperm.xlu0 %1709, %v1672
    %v1711 = vpop.permute.xlu0 %1710
    %v1713 = vmul.f32 %v1478, %v1676
    %v1714 = vmul.f32 %v1479, %v1676
    %v1715 = vmul.f32 %v1480, %v1681
    %v1716 = vmul.f32 %v1481, %v1681
    %v1717 = vmul.f32 %v1482, %v1686
    %v1718 = vmul.f32 %v1483, %v1686
    %v1719 = vmul.f32 %v1484, %v1691
    %v1720 = vmul.f32 %v1485, %v1691
    %v1721 = vmul.f32 %v1486, %v1696
    %v1722 = vmul.f32 %v1487, %v1696
    %v1723 = vmul.f32 %v1488, %v1701
    %v1724 = vmul.f32 %v1489, %v1701
    %v1725 = vmul.f32 %v1490, %v1706
    %v1726 = vmul.f32 %v1491, %v1706
    %v1727 = vmul.f32 %v1492, %v1711
    %v1728 = vmul.f32 %v1493, %v1711
    %v1729 = vpack.c.bf16 %v1715, %v1713
    %v1730 = vpack.c.bf16 %v1716, %v1714
    %v1731 = vpack.c.bf16 %v1719, %v1717
    %v1732 = vpack.c.bf16 %v1720, %v1718
    %v1733 = vpack.c.bf16 %v1723, %v1721
    %v1734 = vpack.c.bf16 %v1724, %v1722
    %v1735 = vpack.c.bf16 %v1727, %v1725
    %v1736 = vpack.c.bf16 %v1728, %v1726
    %1737 = vset.pattern.permute.xlu0 12
    %1738 = vperm.xlu0 %1737, %v47
    %v1739 = vpop.permute.xlu0 %1738
    %1741 = vset.pattern.permute.xlu0 12
    %1742 = vperm.xlu0 %1741, %v48
    %v1743 = vpop.permute.xlu0 %1742
    %v1747 = vunpack.c.l.b16 %v63
    %v1748 = vunpack.c.l.b16 %v64
    %v1749 = vpack.c.b16 %v1748, %v1747
    %vm1750 = vcmask 523264
    %v1752 = vsel %vm1750, %v1749, 0
    %1754 = vmatprep.subr.bf16.mxu0 0
    %1755 = vmatpush1.bf16.msra.mxu0 0
    %1756 = vmatprep.subr.bf16.mxu0 0
    %1757 = vmatpush1.bf16.msra.mxu0 0
    %1758 = vmatprep.subr.bf16.mxu0 0
    %1759 = vmatpush1.bf16.msra.mxu0 0
    %1760 = vmatprep.subr.bf16.mxu0 0
    %1761 = vmatpush1.bf16.msra.mxu0 0
    %1762 = vmatprep.subr.bf16.mxu0 %v1736
    %1763 = vmatpush1.bf16.msra.mxu0 %v1735
    %1764 = vmatprep.subr.bf16.mxu0 %v1734
    %1765 = vmatpush1.bf16.msra.mxu0 %v1733
    %1766 = vmatprep.subr.bf16.mxu0 %v1732
    %1767 = vmatpush1.bf16.msra.mxu0 %v1731
    %1768 = vmatprep.subr.bf16.mxu0 %v1730
    %1769 = vmatpush1.bf16.msra.mxu0 %v1729
    %1770 = vmatprep.subr.bf16.mxu0 0
    %1771 = vmatpush2.bf16.msra.mxu0 0
    %1772 = vmatprep.subr.bf16.mxu0 0
    %1773 = vmatpush2.bf16.msra.mxu0 0
    %1774 = vmatprep.subr.bf16.mxu0 0
    %1775 = vmatpush2.bf16.msra.mxu0 0
    %1776 = vmatprep.subr.bf16.mxu0 0
    %1777 = vmatpush2.bf16.msra.mxu0 0
    %1778 = vmatprep.subr.bf16.mxu0 0
    %1779 = vmatpush2.bf16.msra.mxu0 0
    %1780 = vmatprep.subr.bf16.mxu0 0
    %1781 = vmatpush2.bf16.msra.mxu0 0
    %1782 = vmatprep.subr.bf16.mxu0 0
    %1783 = vmatpush2.bf16.msra.mxu0 0
    %1784 = vmatprep.subr.bf16.mxu0 0
    %1785 = vmatpush2.bf16.msra.mxu0 0
    %1786 = vmatprep.mubr.bf16.mxu0 0
    %1787 = vmatmul.mubr.bf16.gmra.mxu0 %v1752
    %v1788 = vpop.f32.mrf.mxu0
    %v1789 = vadd.f32 %v1739, %v1788
    %v1790 = vpop.f32.mrf.mxu0
    %v1791 = vadd.f32 %v1739, %v1790
    %v1792 = vpop.f32.mrf.mxu0
    %v1793 = vadd.f32 %v1743, %v1792
    %v1794 = vpop.f32.mrf.mxu0
    %v1795 = vadd.f32 %v1743, %v1794
    %1796 = vdwg.mxu0
    %v1797 = vadd.f32 %v1789, %v86
    %v1798 = vadd.f32 %v1791, %v87
    %v1799 = vadd.f32 %v1793, %v88
    %v1800 = vadd.f32 %v1795, %v89
    %1801 = vst [vmem:[#allocation7] sm:$0xff] %v1797
    %1802 = vst [vmem:[#allocation7 + $0x8] sm:$0xff] %v1798
    %1803 = vst [vmem:[#allocation7 + $0x10] sm:$0xff] %v1799
    %1804 = vst [vmem:[#allocation7 + $0x18] sm:$0xff] %v1800
    %s1805 = scalar_lea.vmem [#allocation2], 32
    %v1806 = vld [vmem:[%s1805] sm:$0xff]
    %v1807 = vld [vmem:[%s1805 + $0x8] sm:$0xff]
    %v1808 = vld [vmem:[%s1805 + $0x10] sm:$0xff]
    %v1809 = vld [vmem:[%s1805 + $0x18] sm:$0xff]
    %v1810 = vpack.c.bf16 %v1808, %v1806
    %v1811 = vpack.c.bf16 %v1809, %v1807
    %1812 = vmatprep.subr.bf16.mxu0 0
    %1813 = vmatpush1.bf16.msra.mxu0 0
    %1814 = vmatprep.subr.bf16.mxu0 0
    %1815 = vmatpush1.bf16.msra.mxu0 0
    %1816 = vmatprep.subr.bf16.mxu0 0
    %1817 = vmatpush1.bf16.msra.mxu0 0
    %1818 = vmatprep.subr.bf16.mxu0 0
    %1819 = vmatpush1.bf16.msra.mxu0 0
    %1820 = vmatprep.subr.bf16.mxu0 0
    %1821 = vmatpush1.bf16.msra.mxu0 0
    %1822 = vmatprep.subr.bf16.mxu0 0
    %1823 = vmatpush1.bf16.msra.mxu0 0
    %1824 = vmatprep.subr.bf16.mxu0 0
    %1825 = vmatpush1.bf16.msra.mxu0 0
    %1826 = vmatprep.subr.bf16.mxu0 %v1811
    %1827 = vmatpush1.bf16.msra.mxu0 %v1810
    %1828 = vmatprep.subr.bf16.mxu0 0
    %1829 = vmatpush2.bf16.msra.mxu0 0
    %1830 = vmatprep.subr.bf16.mxu0 0
    %1831 = vmatpush2.bf16.msra.mxu0 0
    %1832 = vmatprep.subr.bf16.mxu0 0
    %1833 = vmatpush2.bf16.msra.mxu0 0
    %1834 = vmatprep.subr.bf16.mxu0 0
    %1835 = vmatpush2.bf16.msra.mxu0 0
    %1836 = vmatprep.subr.bf16.mxu0 0
    %1837 = vmatpush2.bf16.msra.mxu0 0
    %1838 = vmatprep.subr.bf16.mxu0 0
    %1839 = vmatpush2.bf16.msra.mxu0 0
    %1840 = vmatprep.subr.bf16.mxu0 0
    %1841 = vmatpush2.bf16.msra.mxu0 0
    %1842 = vmatprep.subr.bf16.mxu0 0
    %1843 = vmatpush2.bf16.msra.mxu0 0
    %1844 = vmatprep.mubr.bf16.mxu0 0
    %1845 = vmatmul.mubr.bf16.gmra.mxu0 %v154
    %v1846 = vpop.f32.mrf.mxu0
    %v1847 = vadd.f32 %v95, %v1846
    %v1848 = vpop.f32.mrf.mxu0
    %v1849 = vadd.f32 %v95, %v1848
    %v1850 = vpop.f32.mrf.mxu0
    %v1851 = vadd.f32 %v100, %v1850
    %v1852 = vpop.f32.mrf.mxu0
    %v1853 = vadd.f32 %v100, %v1852
    %1854 = vmatprep.mubr.bf16.mxu0 0
    %1855 = vmatmul.mubr.bf16.gmra.mxu0 %v157
    %v1856 = vpop.f32.mrf.mxu0
    %v1857 = vadd.f32 %v105, %v1856
    %v1858 = vpop.f32.mrf.mxu0
    %v1859 = vadd.f32 %v105, %v1858
    %v1860 = vpop.f32.mrf.mxu0
    %v1861 = vadd.f32 %v110, %v1860
    %v1862 = vpop.f32.mrf.mxu0
    %v1863 = vadd.f32 %v110, %v1862
    %1864 = vmatprep.mubr.bf16.mxu0 0
    %1865 = vmatmul.mubr.bf16.gmra.mxu0 %v160
    %v1866 = vpop.f32.mrf.mxu0
    %v1867 = vadd.f32 %v115, %v1866
    %v1868 = vpop.f32.mrf.mxu0
    %v1869 = vadd.f32 %v115, %v1868
    %v1870 = vpop.f32.mrf.mxu0
    %v1871 = vadd.f32 %v120, %v1870
    %v1872 = vpop.f32.mrf.mxu0
    %v1873 = vadd.f32 %v120, %v1872
    %1874 = vmatprep.mubr.bf16.mxu0 0
    %1875 = vmatmul.mubr.bf16.gmra.mxu0 %v163
    %v1876 = vpop.f32.mrf.mxu0
    %v1877 = vadd.f32 %v125, %v1876
    %v1878 = vpop.f32.mrf.mxu0
    %v1879 = vadd.f32 %v125, %v1878
    %v1880 = vpop.f32.mrf.mxu0
    %v1881 = vadd.f32 %v130, %v1880
    %v1882 = vpop.f32.mrf.mxu0
    %v1883 = vadd.f32 %v130, %v1882
    %1884 = vdwg.mxu0
    %v1885 = vadd.f32 %v1847, 3.0
    %v1886 = vadd.f32 %v1849, 3.0
    %v1887 = vadd.f32 %v1851, 3.0
    %v1888 = vadd.f32 %v1853, 3.0
    %v1889 = vadd.f32 %v1857, 3.0
    %v1890 = vadd.f32 %v1859, 3.0
    %v1891 = vadd.f32 %v1861, 3.0
    %v1892 = vadd.f32 %v1863, 3.0
    %v1893 = vadd.f32 %v1867, 3.0
    %v1894 = vadd.f32 %v1869, 3.0
    %v1895 = vadd.f32 %v1871, 3.0
    %v1896 = vadd.f32 %v1873, 3.0
    %v1897 = vadd.f32 %v1877, 3.0
    %v1898 = vadd.f32 %v1879, 3.0
    %v1899 = vadd.f32 %v1881, 3.0
    %v1900 = vadd.f32 %v1883, 3.0
    %v1901 = vmax.f32 %v1885, 0.0
    %v1902 = vmax.f32 %v1886, 0.0
    %v1903 = vmax.f32 %v1887, 0.0
    %v1904 = vmax.f32 %v1888, 0.0
    %v1905 = vmax.f32 %v1889, 0.0
    %v1906 = vmax.f32 %v1890, 0.0
    %v1907 = vmax.f32 %v1891, 0.0
    %v1908 = vmax.f32 %v1892, 0.0
    %v1909 = vmax.f32 %v1893, 0.0
    %v1910 = vmax.f32 %v1894, 0.0
    %v1911 = vmax.f32 %v1895, 0.0
    %v1912 = vmax.f32 %v1896, 0.0
    %v1913 = vmax.f32 %v1897, 0.0
    %v1914 = vmax.f32 %v1898, 0.0
    %v1915 = vmax.f32 %v1899, 0.0
    %v1916 = vmax.f32 %v1900, 0.0
    %v1917 = vmin.f32 %v1901, 6.0
    %v1918 = vmin.f32 %v1902, 6.0
    %v1919 = vmin.f32 %v1903, 6.0
    %v1920 = vmin.f32 %v1904, 6.0
    %v1921 = vmin.f32 %v1905, 6.0
    %v1922 = vmin.f32 %v1906, 6.0
    %v1923 = vmin.f32 %v1907, 6.0
    %v1924 = vmin.f32 %v1908, 6.0
    %v1925 = vmin.f32 %v1909, 6.0
    %v1926 = vmin.f32 %v1910, 6.0
    %v1927 = vmin.f32 %v1911, 6.0
    %v1928 = vmin.f32 %v1912, 6.0
    %v1929 = vmin.f32 %v1913, 6.0
    %v1930 = vmin.f32 %v1914, 6.0
    %v1931 = vmin.f32 %v1915, 6.0
    %v1932 = vmin.f32 %v1916, 6.0
    %v1933 = vmul.f32 %v1847, %v1917
    %v1934 = vmul.f32 %v1849, %v1918
    %v1935 = vmul.f32 %v1851, %v1919
    %v1936 = vmul.f32 %v1853, %v1920
    %v1937 = vmul.f32 %v1857, %v1921
    %v1938 = vmul.f32 %v1859, %v1922
    %v1939 = vmul.f32 %v1861, %v1923
    %v1940 = vmul.f32 %v1863, %v1924
    %v1941 = vmul.f32 %v1867, %v1925
    %v1942 = vmul.f32 %v1869, %v1926
    %v1943 = vmul.f32 %v1871, %v1927
    %v1944 = vmul.f32 %v1873, %v1928
    %v1945 = vmul.f32 %v1877, %v1929
    %v1946 = vmul.f32 %v1879, %v1930
    %v1947 = vmul.f32 %v1881, %v1931
    %v1948 = vmul.f32 %v1883, %v1932
    %v1949 = vmul.f32 %v1933, %v304
    %v1950 = vmul.f32 %v1934, %v304
    %v1951 = vmul.f32 %v1935, %v308
    %v1952 = vmul.f32 %v1936, %v308
    %v1953 = vmul.f32 %v1937, %v312
    %v1954 = vmul.f32 %v1938, %v312
    %v1955 = vmul.f32 %v1939, %v316
    %v1956 = vmul.f32 %v1940, %v316
    %v1957 = vmul.f32 %v1941, %v320
    %v1958 = vmul.f32 %v1942, %v320
    %v1959 = vmul.f32 %v1943, %v324
    %v1960 = vmul.f32 %v1944, %v324
    %v1961 = vmul.f32 %v1945, %v328
    %v1962 = vmul.f32 %v1946, %v328
    %v1963 = vmul.f32 %v1947, %v332
    %v1964 = vmul.f32 %v1948, %v332
    %1965 = vrot.lane.b32.xlu0 %v1933, 17
    %v1966 = vpop.permute.xlu0 %1965
    %1967 = vrot.lane.b32.xlu0 %v1935, 17
    %v1968 = vpop.permute.xlu0 %1967
    %1969 = vrot.lane.b32.xlu0 %v1937, 17
    %v1970 = vpop.permute.xlu0 %1969
    %1971 = vrot.lane.b32.xlu0 %v1939, 17
    %v1972 = vpop.permute.xlu0 %1971
    %1973 = vrot.lane.b32.xlu0 %v1941, 17
    %v1974 = vpop.permute.xlu0 %1973
    %1975 = vrot.lane.b32.xlu0 %v1943, 17
    %v1976 = vpop.permute.xlu0 %1975
    %1977 = vrot.lane.b32.xlu0 %v1945, 17
    %v1978 = vpop.permute.xlu0 %1977
    %1979 = vrot.lane.b32.xlu0 %v1947, 17
    %v1980 = vpop.permute.xlu0 %1979
    %1981 = vrot.lane.b32.xlu0 %v1934, 17
    %v1982 = vpop.permute.xlu0 %1981
    %1983 = vrot.lane.b32.xlu0 %v1936, 17
    %v1984 = vpop.permute.xlu0 %1983
    %1985 = vrot.lane.b32.xlu0 %v1938, 17
    %v1986 = vpop.permute.xlu0 %1985
    %1987 = vrot.lane.b32.xlu0 %v1940, 17
    %v1988 = vpop.permute.xlu0 %1987
    %1989 = vrot.lane.b32.xlu0 %v1942, 17
    %v1990 = vpop.permute.xlu0 %1989
    %1991 = vrot.lane.b32.xlu0 %v1944, 17
    %v1992 = vpop.permute.xlu0 %1991
    %1993 = vrot.lane.b32.xlu0 %v1946, 17
    %v1994 = vpop.permute.xlu0 %1993
    %1995 = vrot.lane.b32.xlu0 %v1948, 17
    %v1996 = vpop.permute.xlu0 %1995
    %v1997 = vsel %vm382, %v1966, %v1982
    %v1998 = vsel %vm382, %v1968, %v1984
    %v1999 = vsel %vm382, %v1970, %v1986
    %v2000 = vsel %vm382, %v1972, %v1988
    %v2001 = vsel %vm382, %v1974, %v1990
    %v2002 = vsel %vm382, %v1976, %v1992
    %v2003 = vsel %vm382, %v1978, %v1994
    %v2004 = vsel %vm382, %v1980, %v1996
    %v2005 = vsel %vm382, %v1982, %v1966
    %v2006 = vsel %vm382, %v1984, %v1968
    %v2007 = vsel %vm382, %v1986, %v1970
    %v2008 = vsel %vm382, %v1988, %v1972
    %v2009 = vsel %vm382, %v1990, %v1974
    %v2010 = vsel %vm382, %v1992, %v1976
    %v2011 = vsel %vm382, %v1994, %v1978
    %v2012 = vsel %vm382, %v1996, %v1980
    %v2013 = vsel %vm78, %v2005, 0.0
    %v2014 = vsel %vm79, %v1997, 0.0
    %v2015 = vsel %vm78, %v2006, 0.0
    %v2016 = vsel %vm79, %v1998, 0.0
    %v2017 = vsel %vm78, %v2007, 0.0
    %v2018 = vsel %vm79, %v1999, 0.0
    %v2019 = vsel %vm78, %v2008, 0.0
    %v2020 = vsel %vm79, %v2000, 0.0
    %v2021 = vsel %vm78, %v2009, 0.0
    %v2022 = vsel %vm79, %v2001, 0.0
    %v2023 = vsel %vm78, %v2010, 0.0
    %v2024 = vsel %vm79, %v2002, 0.0
    %v2025 = vsel %vm78, %v2011, 0.0
    %v2026 = vsel %vm79, %v2003, 0.0
    %v2027 = vsel %vm78, %v2012, 0.0
    %v2028 = vsel %vm79, %v2004, 0.0
    %v2029 = vmul.f32 %v2013, %v417
    %v2030 = vmul.f32 %v2014, %v417
    %v2031 = vmul.f32 %v2015, %v421
    %v2032 = vmul.f32 %v2016, %v421
    %v2033 = vmul.f32 %v2017, %v425
    %v2034 = vmul.f32 %v2018, %v425
    %v2035 = vmul.f32 %v2019, %v429
    %v2036 = vmul.f32 %v2020, %v429
    %v2037 = vmul.f32 %v2021, %v433
    %v2038 = vmul.f32 %v2022, %v433
    %v2039 = vmul.f32 %v2023, %v437
    %v2040 = vmul.f32 %v2024, %v437
    %v2041 = vmul.f32 %v2025, %v441
    %v2042 = vmul.f32 %v2026, %v441
    %v2043 = vmul.f32 %v2027, %v445
    %v2044 = vmul.f32 %v2028, %v445
    %v2045 = vadd.f32 %v1949, %v2029
    %v2046 = vadd.f32 %v1950, %v2030
    %v2047 = vadd.f32 %v1951, %v2031
    %v2048 = vadd.f32 %v1952, %v2032
    %v2049 = vadd.f32 %v1953, %v2033
    %v2050 = vadd.f32 %v1954, %v2034
    %v2051 = vadd.f32 %v1955, %v2035
    %v2052 = vadd.f32 %v1956, %v2036
    %v2053 = vadd.f32 %v1957, %v2037
    %v2054 = vadd.f32 %v1958, %v2038
    %v2055 = vadd.f32 %v1959, %v2039
    %v2056 = vadd.f32 %v1960, %v2040
    %v2057 = vadd.f32 %v1961, %v2041
    %v2058 = vadd.f32 %v1962, %v2042
    %v2059 = vadd.f32 %v1963, %v2043
    %v2060 = vadd.f32 %v1964, %v2044
    %2061 = vrot.lane.b32.xlu0 %v1933, 16
    %v2062 = vpop.permute.xlu0 %2061
    %2063 = vrot.lane.b32.xlu0 %v1935, 16
    %v2064 = vpop.permute.xlu0 %2063
    %2065 = vrot.lane.b32.xlu0 %v1937, 16
    %v2066 = vpop.permute.xlu0 %2065
    %2067 = vrot.lane.b32.xlu0 %v1939, 16
    %v2068 = vpop.permute.xlu0 %2067
    %2069 = vrot.lane.b32.xlu0 %v1941, 16
    %v2070 = vpop.permute.xlu0 %2069
    %2071 = vrot.lane.b32.xlu0 %v1943, 16
    %v2072 = vpop.permute.xlu0 %2071
    %2073 = vrot.lane.b32.xlu0 %v1945, 16
    %v2074 = vpop.permute.xlu0 %2073
    %2075 = vrot.lane.b32.xlu0 %v1947, 16
    %v2076 = vpop.permute.xlu0 %2075
    %2077 = vrot.lane.b32.xlu0 %v1934, 16
    %v2078 = vpop.permute.xlu0 %2077
    %2079 = vrot.lane.b32.xlu0 %v1936, 16
    %v2080 = vpop.permute.xlu0 %2079
    %2081 = vrot.lane.b32.xlu0 %v1938, 16
    %v2082 = vpop.permute.xlu0 %2081
    %2083 = vrot.lane.b32.xlu0 %v1940, 16
    %v2084 = vpop.permute.xlu0 %2083
    %2085 = vrot.lane.b32.xlu0 %v1942, 16
    %v2086 = vpop.permute.xlu0 %2085
    %2087 = vrot.lane.b32.xlu0 %v1944, 16
    %v2088 = vpop.permute.xlu0 %2087
    %2089 = vrot.lane.b32.xlu0 %v1946, 16
    %v2090 = vpop.permute.xlu0 %2089
    %2091 = vrot.lane.b32.xlu0 %v1948, 16
    %v2092 = vpop.permute.xlu0 %2091
    %v2093 = vsel %vm511, %v2062, %v2078
    %v2094 = vsel %vm511, %v2064, %v2080
    %v2095 = vsel %vm511, %v2066, %v2082
    %v2096 = vsel %vm511, %v2068, %v2084
    %v2097 = vsel %vm511, %v2070, %v2086
    %v2098 = vsel %vm511, %v2072, %v2088
    %v2099 = vsel %vm511, %v2074, %v2090
    %v2100 = vsel %vm511, %v2076, %v2092
    %v2101 = vsel %vm511, %v2078, %v2062
    %v2102 = vsel %vm511, %v2080, %v2064
    %v2103 = vsel %vm511, %v2082, %v2066
    %v2104 = vsel %vm511, %v2084, %v2068
    %v2105 = vsel %vm511, %v2086, %v2070
    %v2106 = vsel %vm511, %v2088, %v2072
    %v2107 = vsel %vm511, %v2090, %v2074
    %v2108 = vsel %vm511, %v2092, %v2076
    %v2109 = vsel %vm74, %v2101, 0.0
    %v2110 = vsel %vm75, %v2093, 0.0
    %v2111 = vsel %vm74, %v2102, 0.0
    %v2112 = vsel %vm75, %v2094, 0.0
    %v2113 = vsel %vm74, %v2103, 0.0
    %v2114 = vsel %vm75, %v2095, 0.0
    %v2115 = vsel %vm74, %v2104, 0.0
    %v2116 = vsel %vm75, %v2096, 0.0
    %v2117 = vsel %vm74, %v2105, 0.0
    %v2118 = vsel %vm75, %v2097, 0.0
    %v2119 = vsel %vm74, %v2106, 0.0
    %v2120 = vsel %vm75, %v2098, 0.0
    %v2121 = vsel %vm74, %v2107, 0.0
    %v2122 = vsel %vm75, %v2099, 0.0
    %v2123 = vsel %vm74, %v2108, 0.0
    %v2124 = vsel %vm75, %v2100, 0.0
    %v2125 = vmul.f32 %v2109, %v546
    %v2126 = vmul.f32 %v2110, %v546
    %v2127 = vmul.f32 %v2111, %v550
    %v2128 = vmul.f32 %v2112, %v550
    %v2129 = vmul.f32 %v2113, %v554
    %v2130 = vmul.f32 %v2114, %v554
    %v2131 = vmul.f32 %v2115, %v558
    %v2132 = vmul.f32 %v2116, %v558
    %v2133 = vmul.f32 %v2117, %v562
    %v2134 = vmul.f32 %v2118, %v562
    %v2135 = vmul.f32 %v2119, %v566
    %v2136 = vmul.f32 %v2120, %v566
    %v2137 = vmul.f32 %v2121, %v570
    %v2138 = vmul.f32 %v2122, %v570
    %v2139 = vmul.f32 %v2123, %v574
    %v2140 = vmul.f32 %v2124, %v574
    %v2141 = vadd.f32 %v2045, %v2125
    %v2142 = vadd.f32 %v2046, %v2126
    %v2143 = vadd.f32 %v2047, %v2127
    %v2144 = vadd.f32 %v2048, %v2128
    %v2145 = vadd.f32 %v2049, %v2129
    %v2146 = vadd.f32 %v2050, %v2130
    %v2147 = vadd.f32 %v2051, %v2131
    %v2148 = vadd.f32 %v2052, %v2132
    %v2149 = vadd.f32 %v2053, %v2133
    %v2150 = vadd.f32 %v2054, %v2134
    %v2151 = vadd.f32 %v2055, %v2135
    %v2152 = vadd.f32 %v2056, %v2136
    %v2153 = vadd.f32 %v2057, %v2137
    %v2154 = vadd.f32 %v2058, %v2138
    %v2155 = vadd.f32 %v2059, %v2139
    %v2156 = vadd.f32 %v2060, %v2140
    %2157 = vrot.lane.b32.xlu0 %v1933, 15
    %v2158 = vpop.permute.xlu0 %2157
    %2159 = vrot.lane.b32.xlu0 %v1935, 15
    %v2160 = vpop.permute.xlu0 %2159
    %2161 = vrot.lane.b32.xlu0 %v1937, 15
    %v2162 = vpop.permute.xlu0 %2161
    %2163 = vrot.lane.b32.xlu0 %v1939, 15
    %v2164 = vpop.permute.xlu0 %2163
    %2165 = vrot.lane.b32.xlu0 %v1941, 15
    %v2166 = vpop.permute.xlu0 %2165
    %2167 = vrot.lane.b32.xlu0 %v1943, 15
    %v2168 = vpop.permute.xlu0 %2167
    %2169 = vrot.lane.b32.xlu0 %v1945, 15
    %v2170 = vpop.permute.xlu0 %2169
    %2171 = vrot.lane.b32.xlu0 %v1947, 15
    %v2172 = vpop.permute.xlu0 %2171
    %2173 = vrot.lane.b32.xlu0 %v1934, 15
    %v2174 = vpop.permute.xlu0 %2173
    %2175 = vrot.lane.b32.xlu0 %v1936, 15
    %v2176 = vpop.permute.xlu0 %2175
    %2177 = vrot.lane.b32.xlu0 %v1938, 15
    %v2178 = vpop.permute.xlu0 %2177
    %2179 = vrot.lane.b32.xlu0 %v1940, 15
    %v2180 = vpop.permute.xlu0 %2179
    %2181 = vrot.lane.b32.xlu0 %v1942, 15
    %v2182 = vpop.permute.xlu0 %2181
    %2183 = vrot.lane.b32.xlu0 %v1944, 15
    %v2184 = vpop.permute.xlu0 %2183
    %2185 = vrot.lane.b32.xlu0 %v1946, 15
    %v2186 = vpop.permute.xlu0 %2185
    %2187 = vrot.lane.b32.xlu0 %v1948, 15
    %v2188 = vpop.permute.xlu0 %2187
    %v2189 = vsel %vm640, %v2158, %v2174
    %v2190 = vsel %vm640, %v2160, %v2176
    %v2191 = vsel %vm640, %v2162, %v2178
    %v2192 = vsel %vm640, %v2164, %v2180
    %v2193 = vsel %vm640, %v2166, %v2182
    %v2194 = vsel %vm640, %v2168, %v2184
    %v2195 = vsel %vm640, %v2170, %v2186
    %v2196 = vsel %vm640, %v2172, %v2188
    %v2197 = vsel %vm640, %v2174, %v2158
    %v2198 = vsel %vm640, %v2176, %v2160
    %v2199 = vsel %vm640, %v2178, %v2162
    %v2200 = vsel %vm640, %v2180, %v2164
    %v2201 = vsel %vm640, %v2182, %v2166
    %v2202 = vsel %vm640, %v2184, %v2168
    %v2203 = vsel %vm640, %v2186, %v2170
    %v2204 = vsel %vm640, %v2188, %v2172
    %v2205 = vsel %vm80, %v2197, 0.0
    %v2206 = vsel %vm81, %v2189, 0.0
    %v2207 = vsel %vm80, %v2198, 0.0
    %v2208 = vsel %vm81, %v2190, 0.0
    %v2209 = vsel %vm80, %v2199, 0.0
    %v2210 = vsel %vm81, %v2191, 0.0
    %v2211 = vsel %vm80, %v2200, 0.0
    %v2212 = vsel %vm81, %v2192, 0.0
    %v2213 = vsel %vm80, %v2201, 0.0
    %v2214 = vsel %vm81, %v2193, 0.0
    %v2215 = vsel %vm80, %v2202, 0.0
    %v2216 = vsel %vm81, %v2194, 0.0
    %v2217 = vsel %vm80, %v2203, 0.0
    %v2218 = vsel %vm81, %v2195, 0.0
    %v2219 = vsel %vm80, %v2204, 0.0
    %v2220 = vsel %vm81, %v2196, 0.0
    %v2221 = vmul.f32 %v2205, %v675
    %v2222 = vmul.f32 %v2206, %v675
    %v2223 = vmul.f32 %v2207, %v679
    %v2224 = vmul.f32 %v2208, %v679
    %v2225 = vmul.f32 %v2209, %v683
    %v2226 = vmul.f32 %v2210, %v683
    %v2227 = vmul.f32 %v2211, %v687
    %v2228 = vmul.f32 %v2212, %v687
    %v2229 = vmul.f32 %v2213, %v691
    %v2230 = vmul.f32 %v2214, %v691
    %v2231 = vmul.f32 %v2215, %v695
    %v2232 = vmul.f32 %v2216, %v695
    %v2233 = vmul.f32 %v2217, %v699
    %v2234 = vmul.f32 %v2218, %v699
    %v2235 = vmul.f32 %v2219, %v703
    %v2236 = vmul.f32 %v2220, %v703
    %v2237 = vadd.f32 %v2141, %v2221
    %v2238 = vadd.f32 %v2142, %v2222
    %v2239 = vadd.f32 %v2143, %v2223
    %v2240 = vadd.f32 %v2144, %v2224
    %v2241 = vadd.f32 %v2145, %v2225
    %v2242 = vadd.f32 %v2146, %v2226
    %v2243 = vadd.f32 %v2147, %v2227
    %v2244 = vadd.f32 %v2148, %v2228
    %v2245 = vadd.f32 %v2149, %v2229
    %v2246 = vadd.f32 %v2150, %v2230
    %v2247 = vadd.f32 %v2151, %v2231
    %v2248 = vadd.f32 %v2152, %v2232
    %v2249 = vadd.f32 %v2153, %v2233
    %v2250 = vadd.f32 %v2154, %v2234
    %v2251 = vadd.f32 %v2155, %v2235
    %v2252 = vadd.f32 %v2156, %v2236
    %2253 = vrot.lane.b32.xlu0 %v1933, 1
    %v2254 = vpop.permute.xlu0 %2253
    %2255 = vrot.lane.b32.xlu0 %v1935, 1
    %v2256 = vpop.permute.xlu0 %2255
    %2257 = vrot.lane.b32.xlu0 %v1937, 1
    %v2258 = vpop.permute.xlu0 %2257
    %2259 = vrot.lane.b32.xlu0 %v1939, 1
    %v2260 = vpop.permute.xlu0 %2259
    %2261 = vrot.lane.b32.xlu0 %v1941, 1
    %v2262 = vpop.permute.xlu0 %2261
    %2263 = vrot.lane.b32.xlu0 %v1943, 1
    %v2264 = vpop.permute.xlu0 %2263
    %2265 = vrot.lane.b32.xlu0 %v1945, 1
    %v2266 = vpop.permute.xlu0 %2265
    %2267 = vrot.lane.b32.xlu0 %v1947, 1
    %v2268 = vpop.permute.xlu0 %2267
    %2269 = vrot.lane.b32.xlu0 %v1934, 1
    %v2270 = vpop.permute.xlu0 %2269
    %2271 = vrot.lane.b32.xlu0 %v1936, 1
    %v2272 = vpop.permute.xlu0 %2271
    %2273 = vrot.lane.b32.xlu0 %v1938, 1
    %v2274 = vpop.permute.xlu0 %2273
    %2275 = vrot.lane.b32.xlu0 %v1940, 1
    %v2276 = vpop.permute.xlu0 %2275
    %2277 = vrot.lane.b32.xlu0 %v1942, 1
    %v2278 = vpop.permute.xlu0 %2277
    %2279 = vrot.lane.b32.xlu0 %v1944, 1
    %v2280 = vpop.permute.xlu0 %2279
    %2281 = vrot.lane.b32.xlu0 %v1946, 1
    %v2282 = vpop.permute.xlu0 %2281
    %2283 = vrot.lane.b32.xlu0 %v1948, 1
    %v2284 = vpop.permute.xlu0 %2283
    %v2285 = vsel %vm769, %v2254, %v2270
    %v2286 = vsel %vm769, %v2256, %v2272
    %v2287 = vsel %vm769, %v2258, %v2274
    %v2288 = vsel %vm769, %v2260, %v2276
    %v2289 = vsel %vm769, %v2262, %v2278
    %v2290 = vsel %vm769, %v2264, %v2280
    %v2291 = vsel %vm769, %v2266, %v2282
    %v2292 = vsel %vm769, %v2268, %v2284
    %v2293 = vsel %vm769, %v2270, %v2254
    %v2294 = vsel %vm769, %v2272, %v2256
    %v2295 = vsel %vm769, %v2274, %v2258
    %v2296 = vsel %vm769, %v2276, %v2260
    %v2297 = vsel %vm769, %v2278, %v2262
    %v2298 = vsel %vm769, %v2280, %v2264
    %v2299 = vsel %vm769, %v2282, %v2266
    %v2300 = vsel %vm769, %v2284, %v2268
    %v2301 = vsel %vm70, %v2293, 0.0
    %v2302 = vsel %vm71, %v2285, 0.0
    %v2303 = vsel %vm70, %v2294, 0.0
    %v2304 = vsel %vm71, %v2286, 0.0
    %v2305 = vsel %vm70, %v2295, 0.0
    %v2306 = vsel %vm71, %v2287, 0.0
    %v2307 = vsel %vm70, %v2296, 0.0
    %v2308 = vsel %vm71, %v2288, 0.0
    %v2309 = vsel %vm70, %v2297, 0.0
    %v2310 = vsel %vm71, %v2289, 0.0
    %v2311 = vsel %vm70, %v2298, 0.0
    %v2312 = vsel %vm71, %v2290, 0.0
    %v2313 = vsel %vm70, %v2299, 0.0
    %v2314 = vsel %vm71, %v2291, 0.0
    %v2315 = vsel %vm70, %v2300, 0.0
    %v2316 = vsel %vm71, %v2292, 0.0
    %v2317 = vmul.f32 %v2301, %v804
    %v2318 = vmul.f32 %v2302, %v804
    %v2319 = vmul.f32 %v2303, %v808
    %v2320 = vmul.f32 %v2304, %v808
    %v2321 = vmul.f32 %v2305, %v812
    %v2322 = vmul.f32 %v2306, %v812
    %v2323 = vmul.f32 %v2307, %v816
    %v2324 = vmul.f32 %v2308, %v816
    %v2325 = vmul.f32 %v2309, %v820
    %v2326 = vmul.f32 %v2310, %v820
    %v2327 = vmul.f32 %v2311, %v824
    %v2328 = vmul.f32 %v2312, %v824
    %v2329 = vmul.f32 %v2313, %v828
    %v2330 = vmul.f32 %v2314, %v828
    %v2331 = vmul.f32 %v2315, %v832
    %v2332 = vmul.f32 %v2316, %v832
    %v2333 = vadd.f32 %v2237, %v2317
    %v2334 = vadd.f32 %v2238, %v2318
    %v2335 = vadd.f32 %v2239, %v2319
    %v2336 = vadd.f32 %v2240, %v2320
    %v2337 = vadd.f32 %v2241, %v2321
    %v2338 = vadd.f32 %v2242, %v2322
    %v2339 = vadd.f32 %v2243, %v2323
    %v2340 = vadd.f32 %v2244, %v2324
    %v2341 = vadd.f32 %v2245, %v2325
    %v2342 = vadd.f32 %v2246, %v2326
    %v2343 = vadd.f32 %v2247, %v2327
    %v2344 = vadd.f32 %v2248, %v2328
    %v2345 = vadd.f32 %v2249, %v2329
    %v2346 = vadd.f32 %v2250, %v2330
    %v2347 = vadd.f32 %v2251, %v2331
    %v2348 = vadd.f32 %v2252, %v2332
    %2349 = vrot.lane.b32.xlu0 %v1933, 127
    %v2350 = vpop.permute.xlu0 %2349
    %2351 = vrot.lane.b32.xlu0 %v1935, 127
    %v2352 = vpop.permute.xlu0 %2351
    %2353 = vrot.lane.b32.xlu0 %v1937, 127
    %v2354 = vpop.permute.xlu0 %2353
    %2355 = vrot.lane.b32.xlu0 %v1939, 127
    %v2356 = vpop.permute.xlu0 %2355
    %2357 = vrot.lane.b32.xlu0 %v1941, 127
    %v2358 = vpop.permute.xlu0 %2357
    %2359 = vrot.lane.b32.xlu0 %v1943, 127
    %v2360 = vpop.permute.xlu0 %2359
    %2361 = vrot.lane.b32.xlu0 %v1945, 127
    %v2362 = vpop.permute.xlu0 %2361
    %2363 = vrot.lane.b32.xlu0 %v1947, 127
    %v2364 = vpop.permute.xlu0 %2363
    %2365 = vrot.lane.b32.xlu0 %v1934, 127
    %v2366 = vpop.permute.xlu0 %2365
    %2367 = vrot.lane.b32.xlu0 %v1936, 127
    %v2368 = vpop.permute.xlu0 %2367
    %2369 = vrot.lane.b32.xlu0 %v1938, 127
    %v2370 = vpop.permute.xlu0 %2369
    %2371 = vrot.lane.b32.xlu0 %v1940, 127
    %v2372 = vpop.permute.xlu0 %2371
    %2373 = vrot.lane.b32.xlu0 %v1942, 127
    %v2374 = vpop.permute.xlu0 %2373
    %2375 = vrot.lane.b32.xlu0 %v1944, 127
    %v2376 = vpop.permute.xlu0 %2375
    %2377 = vrot.lane.b32.xlu0 %v1946, 127
    %v2378 = vpop.permute.xlu0 %2377
    %2379 = vrot.lane.b32.xlu0 %v1948, 127
    %v2380 = vpop.permute.xlu0 %2379
    %v2381 = vsel %vm898, %v2350, %v2366
    %v2382 = vsel %vm898, %v2352, %v2368
    %v2383 = vsel %vm898, %v2354, %v2370
    %v2384 = vsel %vm898, %v2356, %v2372
    %v2385 = vsel %vm898, %v2358, %v2374
    %v2386 = vsel %vm898, %v2360, %v2376
    %v2387 = vsel %vm898, %v2362, %v2378
    %v2388 = vsel %vm898, %v2364, %v2380
    %v2389 = vsel %vm898, %v2366, %v2350
    %v2390 = vsel %vm898, %v2368, %v2352
    %v2391 = vsel %vm898, %v2370, %v2354
    %v2392 = vsel %vm898, %v2372, %v2356
    %v2393 = vsel %vm898, %v2374, %v2358
    %v2394 = vsel %vm898, %v2376, %v2360
    %v2395 = vsel %vm898, %v2378, %v2362
    %v2396 = vsel %vm898, %v2380, %v2364
    %v2397 = vsel %vm72, %v2381, 0.0
    %v2398 = vsel %vm73, %v2389, 0.0
    %v2399 = vsel %vm72, %v2382, 0.0
    %v2400 = vsel %vm73, %v2390, 0.0
    %v2401 = vsel %vm72, %v2383, 0.0
    %v2402 = vsel %vm73, %v2391, 0.0
    %v2403 = vsel %vm72, %v2384, 0.0
    %v2404 = vsel %vm73, %v2392, 0.0
    %v2405 = vsel %vm72, %v2385, 0.0
    %v2406 = vsel %vm73, %v2393, 0.0
    %v2407 = vsel %vm72, %v2386, 0.0
    %v2408 = vsel %vm73, %v2394, 0.0
    %v2409 = vsel %vm72, %v2387, 0.0
    %v2410 = vsel %vm73, %v2395, 0.0
    %v2411 = vsel %vm72, %v2388, 0.0
    %v2412 = vsel %vm73, %v2396, 0.0
    %v2413 = vmul.f32 %v2397, %v933
    %v2414 = vmul.f32 %v2398, %v933
    %v2415 = vmul.f32 %v2399, %v937
    %v2416 = vmul.f32 %v2400, %v937
    %v2417 = vmul.f32 %v2401, %v941
    %v2418 = vmul.f32 %v2402, %v941
    %v2419 = vmul.f32 %v2403, %v945
    %v2420 = vmul.f32 %v2404, %v945
    %v2421 = vmul.f32 %v2405, %v949
    %v2422 = vmul.f32 %v2406, %v949
    %v2423 = vmul.f32 %v2407, %v953
    %v2424 = vmul.f32 %v2408, %v953
    %v2425 = vmul.f32 %v2409, %v957
    %v2426 = vmul.f32 %v2410, %v957
    %v2427 = vmul.f32 %v2411, %v961
    %v2428 = vmul.f32 %v2412, %v961
    %v2429 = vadd.f32 %v2333, %v2413
    %v2430 = vadd.f32 %v2334, %v2414
    %v2431 = vadd.f32 %v2335, %v2415
    %v2432 = vadd.f32 %v2336, %v2416
    %v2433 = vadd.f32 %v2337, %v2417
    %v2434 = vadd.f32 %v2338, %v2418
    %v2435 = vadd.f32 %v2339, %v2419
    %v2436 = vadd.f32 %v2340, %v2420
    %v2437 = vadd.f32 %v2341, %v2421
    %v2438 = vadd.f32 %v2342, %v2422
    %v2439 = vadd.f32 %v2343, %v2423
    %v2440 = vadd.f32 %v2344, %v2424
    %v2441 = vadd.f32 %v2345, %v2425
    %v2442 = vadd.f32 %v2346, %v2426
    %v2443 = vadd.f32 %v2347, %v2427
    %v2444 = vadd.f32 %v2348, %v2428
    %2445 = vrot.lane.b32.xlu0 %v1933, 113
    %v2446 = vpop.permute.xlu0 %2445
    %2447 = vrot.lane.b32.xlu0 %v1935, 113
    %v2448 = vpop.permute.xlu0 %2447
    %2449 = vrot.lane.b32.xlu0 %v1937, 113
    %v2450 = vpop.permute.xlu0 %2449
    %2451 = vrot.lane.b32.xlu0 %v1939, 113
    %v2452 = vpop.permute.xlu0 %2451
    %2453 = vrot.lane.b32.xlu0 %v1941, 113
    %v2454 = vpop.permute.xlu0 %2453
    %2455 = vrot.lane.b32.xlu0 %v1943, 113
    %v2456 = vpop.permute.xlu0 %2455
    %2457 = vrot.lane.b32.xlu0 %v1945, 113
    %v2458 = vpop.permute.xlu0 %2457
    %2459 = vrot.lane.b32.xlu0 %v1947, 113
    %v2460 = vpop.permute.xlu0 %2459
    %2461 = vrot.lane.b32.xlu0 %v1934, 113
    %v2462 = vpop.permute.xlu0 %2461
    %2463 = vrot.lane.b32.xlu0 %v1936, 113
    %v2464 = vpop.permute.xlu0 %2463
    %2465 = vrot.lane.b32.xlu0 %v1938, 113
    %v2466 = vpop.permute.xlu0 %2465
    %2467 = vrot.lane.b32.xlu0 %v1940, 113
    %v2468 = vpop.permute.xlu0 %2467
    %2469 = vrot.lane.b32.xlu0 %v1942, 113
    %v2470 = vpop.permute.xlu0 %2469
    %2471 = vrot.lane.b32.xlu0 %v1944, 113
    %v2472 = vpop.permute.xlu0 %2471
    %2473 = vrot.lane.b32.xlu0 %v1946, 113
    %v2474 = vpop.permute.xlu0 %2473
    %2475 = vrot.lane.b32.xlu0 %v1948, 113
    %v2476 = vpop.permute.xlu0 %2475
    %v2477 = vsel %vm1027, %v2446, %v2462
    %v2478 = vsel %vm1027, %v2448, %v2464
    %v2479 = vsel %vm1027, %v2450, %v2466
    %v2480 = vsel %vm1027, %v2452, %v2468
    %v2481 = vsel %vm1027, %v2454, %v2470
    %v2482 = vsel %vm1027, %v2456, %v2472
    %v2483 = vsel %vm1027, %v2458, %v2474
    %v2484 = vsel %vm1027, %v2460, %v2476
    %v2485 = vsel %vm1027, %v2462, %v2446
    %v2486 = vsel %vm1027, %v2464, %v2448
    %v2487 = vsel %vm1027, %v2466, %v2450
    %v2488 = vsel %vm1027, %v2468, %v2452
    %v2489 = vsel %vm1027, %v2470, %v2454
    %v2490 = vsel %vm1027, %v2472, %v2456
    %v2491 = vsel %vm1027, %v2474, %v2458
    %v2492 = vsel %vm1027, %v2476, %v2460
    %v2493 = vsel %vm82, %v2477, 0.0
    %v2494 = vsel %vm83, %v2485, 0.0
    %v2495 = vsel %vm82, %v2478, 0.0
    %v2496 = vsel %vm83, %v2486, 0.0
    %v2497 = vsel %vm82, %v2479, 0.0
    %v2498 = vsel %vm83, %v2487, 0.0
    %v2499 = vsel %vm82, %v2480, 0.0
    %v2500 = vsel %vm83, %v2488, 0.0
    %v2501 = vsel %vm82, %v2481, 0.0
    %v2502 = vsel %vm83, %v2489, 0.0
    %v2503 = vsel %vm82, %v2482, 0.0
    %v2504 = vsel %vm83, %v2490, 0.0
    %v2505 = vsel %vm82, %v2483, 0.0
    %v2506 = vsel %vm83, %v2491, 0.0
    %v2507 = vsel %vm82, %v2484, 0.0
    %v2508 = vsel %vm83, %v2492, 0.0
    %v2509 = vmul.f32 %v2493, %v1062
    %v2510 = vmul.f32 %v2494, %v1062
    %v2511 = vmul.f32 %v2495, %v1066
    %v2512 = vmul.f32 %v2496, %v1066
    %v2513 = vmul.f32 %v2497, %v1070
    %v2514 = vmul.f32 %v2498, %v1070
    %v2515 = vmul.f32 %v2499, %v1074
    %v2516 = vmul.f32 %v2500, %v1074
    %v2517 = vmul.f32 %v2501, %v1078
    %v2518 = vmul.f32 %v2502, %v1078
    %v2519 = vmul.f32 %v2503, %v1082
    %v2520 = vmul.f32 %v2504, %v1082
    %v2521 = vmul.f32 %v2505, %v1086
    %v2522 = vmul.f32 %v2506, %v1086
    %v2523 = vmul.f32 %v2507, %v1090
    %v2524 = vmul.f32 %v2508, %v1090
    %v2525 = vadd.f32 %v2429, %v2509
    %v2526 = vadd.f32 %v2430, %v2510
    %v2527 = vadd.f32 %v2431, %v2511
    %v2528 = vadd.f32 %v2432, %v2512
    %v2529 = vadd.f32 %v2433, %v2513
    %v2530 = vadd.f32 %v2434, %v2514
    %v2531 = vadd.f32 %v2435, %v2515
    %v2532 = vadd.f32 %v2436, %v2516
    %v2533 = vadd.f32 %v2437, %v2517
    %v2534 = vadd.f32 %v2438, %v2518
    %v2535 = vadd.f32 %v2439, %v2519
    %v2536 = vadd.f32 %v2440, %v2520
    %v2537 = vadd.f32 %v2441, %v2521
    %v2538 = vadd.f32 %v2442, %v2522
    %v2539 = vadd.f32 %v2443, %v2523
    %v2540 = vadd.f32 %v2444, %v2524
    %2541 = vrot.lane.b32.xlu0 %v1933, 112
    %v2542 = vpop.permute.xlu0 %2541
    %2543 = vrot.lane.b32.xlu0 %v1935, 112
    %v2544 = vpop.permute.xlu0 %2543
    %2545 = vrot.lane.b32.xlu0 %v1937, 112
    %v2546 = vpop.permute.xlu0 %2545
    %2547 = vrot.lane.b32.xlu0 %v1939, 112
    %v2548 = vpop.permute.xlu0 %2547
    %2549 = vrot.lane.b32.xlu0 %v1941, 112
    %v2550 = vpop.permute.xlu0 %2549
    %2551 = vrot.lane.b32.xlu0 %v1943, 112
    %v2552 = vpop.permute.xlu0 %2551
    %2553 = vrot.lane.b32.xlu0 %v1945, 112
    %v2554 = vpop.permute.xlu0 %2553
    %2555 = vrot.lane.b32.xlu0 %v1947, 112
    %v2556 = vpop.permute.xlu0 %2555
    %2557 = vrot.lane.b32.xlu0 %v1934, 112
    %v2558 = vpop.permute.xlu0 %2557
    %2559 = vrot.lane.b32.xlu0 %v1936, 112
    %v2560 = vpop.permute.xlu0 %2559
    %2561 = vrot.lane.b32.xlu0 %v1938, 112
    %v2562 = vpop.permute.xlu0 %2561
    %2563 = vrot.lane.b32.xlu0 %v1940, 112
    %v2564 = vpop.permute.xlu0 %2563
    %2565 = vrot.lane.b32.xlu0 %v1942, 112
    %v2566 = vpop.permute.xlu0 %2565
    %2567 = vrot.lane.b32.xlu0 %v1944, 112
    %v2568 = vpop.permute.xlu0 %2567
    %2569 = vrot.lane.b32.xlu0 %v1946, 112
    %v2570 = vpop.permute.xlu0 %2569
    %2571 = vrot.lane.b32.xlu0 %v1948, 112
    %v2572 = vpop.permute.xlu0 %2571
    %v2573 = vsel %vm1156, %v2542, %v2558
    %v2574 = vsel %vm1156, %v2544, %v2560
    %v2575 = vsel %vm1156, %v2546, %v2562
    %v2576 = vsel %vm1156, %v2548, %v2564
    %v2577 = vsel %vm1156, %v2550, %v2566
    %v2578 = vsel %vm1156, %v2552, %v2568
    %v2579 = vsel %vm1156, %v2554, %v2570
    %v2580 = vsel %vm1156, %v2556, %v2572
    %v2581 = vsel %vm1156, %v2558, %v2542
    %v2582 = vsel %vm1156, %v2560, %v2544
    %v2583 = vsel %vm1156, %v2562, %v2546
    %v2584 = vsel %vm1156, %v2564, %v2548
    %v2585 = vsel %vm1156, %v2566, %v2550
    %v2586 = vsel %vm1156, %v2568, %v2552
    %v2587 = vsel %vm1156, %v2570, %v2554
    %v2588 = vsel %vm1156, %v2572, %v2556
    %v2589 = vsel %vm76, %v2573, 0.0
    %v2590 = vsel %vm77, %v2581, 0.0
    %v2591 = vsel %vm76, %v2574, 0.0
    %v2592 = vsel %vm77, %v2582, 0.0
    %v2593 = vsel %vm76, %v2575, 0.0
    %v2594 = vsel %vm77, %v2583, 0.0
    %v2595 = vsel %vm76, %v2576, 0.0
    %v2596 = vsel %vm77, %v2584, 0.0
    %v2597 = vsel %vm76, %v2577, 0.0
    %v2598 = vsel %vm77, %v2585, 0.0
    %v2599 = vsel %vm76, %v2578, 0.0
    %v2600 = vsel %vm77, %v2586, 0.0
    %v2601 = vsel %vm76, %v2579, 0.0
    %v2602 = vsel %vm77, %v2587, 0.0
    %v2603 = vsel %vm76, %v2580, 0.0
    %v2604 = vsel %vm77, %v2588, 0.0
    %v2605 = vmul.f32 %v2589, %v1191
    %v2606 = vmul.f32 %v2590, %v1191
    %v2607 = vmul.f32 %v2591, %v1195
    %v2608 = vmul.f32 %v2592, %v1195
    %v2609 = vmul.f32 %v2593, %v1199
    %v2610 = vmul.f32 %v2594, %v1199
    %v2611 = vmul.f32 %v2595, %v1203
    %v2612 = vmul.f32 %v2596, %v1203
    %v2613 = vmul.f32 %v2597, %v1207
    %v2614 = vmul.f32 %v2598, %v1207
    %v2615 = vmul.f32 %v2599, %v1211
    %v2616 = vmul.f32 %v2600, %v1211
    %v2617 = vmul.f32 %v2601, %v1215
    %v2618 = vmul.f32 %v2602, %v1215
    %v2619 = vmul.f32 %v2603, %v1219
    %v2620 = vmul.f32 %v2604, %v1219
    %v2621 = vadd.f32 %v2525, %v2605
    %v2622 = vadd.f32 %v2526, %v2606
    %v2623 = vadd.f32 %v2527, %v2607
    %v2624 = vadd.f32 %v2528, %v2608
    %v2625 = vadd.f32 %v2529, %v2609
    %v2626 = vadd.f32 %v2530, %v2610
    %v2627 = vadd.f32 %v2531, %v2611
    %v2628 = vadd.f32 %v2532, %v2612
    %v2629 = vadd.f32 %v2533, %v2613
    %v2630 = vadd.f32 %v2534, %v2614
    %v2631 = vadd.f32 %v2535, %v2615
    %v2632 = vadd.f32 %v2536, %v2616
    %v2633 = vadd.f32 %v2537, %v2617
    %v2634 = vadd.f32 %v2538, %v2618
    %v2635 = vadd.f32 %v2539, %v2619
    %v2636 = vadd.f32 %v2540, %v2620
    %2637 = vrot.lane.b32.xlu0 %v1933, 111
    %v2638 = vpop.permute.xlu0 %2637
    %2639 = vrot.lane.b32.xlu0 %v1935, 111
    %v2640 = vpop.permute.xlu0 %2639
    %2641 = vrot.lane.b32.xlu0 %v1937, 111
    %v2642 = vpop.permute.xlu0 %2641
    %2643 = vrot.lane.b32.xlu0 %v1939, 111
    %v2644 = vpop.permute.xlu0 %2643
    %2645 = vrot.lane.b32.xlu0 %v1941, 111
    %v2646 = vpop.permute.xlu0 %2645
    %2647 = vrot.lane.b32.xlu0 %v1943, 111
    %v2648 = vpop.permute.xlu0 %2647
    %2649 = vrot.lane.b32.xlu0 %v1945, 111
    %v2650 = vpop.permute.xlu0 %2649
    %2651 = vrot.lane.b32.xlu0 %v1947, 111
    %v2652 = vpop.permute.xlu0 %2651
    %2653 = vrot.lane.b32.xlu0 %v1934, 111
    %v2654 = vpop.permute.xlu0 %2653
    %2655 = vrot.lane.b32.xlu0 %v1936, 111
    %v2656 = vpop.permute.xlu0 %2655
    %2657 = vrot.lane.b32.xlu0 %v1938, 111
    %v2658 = vpop.permute.xlu0 %2657
    %2659 = vrot.lane.b32.xlu0 %v1940, 111
    %v2660 = vpop.permute.xlu0 %2659
    %2661 = vrot.lane.b32.xlu0 %v1942, 111
    %v2662 = vpop.permute.xlu0 %2661
    %2663 = vrot.lane.b32.xlu0 %v1944, 111
    %v2664 = vpop.permute.xlu0 %2663
    %2665 = vrot.lane.b32.xlu0 %v1946, 111
    %v2666 = vpop.permute.xlu0 %2665
    %2667 = vrot.lane.b32.xlu0 %v1948, 111
    %v2668 = vpop.permute.xlu0 %2667
    %v2669 = vsel %vm1285, %v2638, %v2654
    %v2670 = vsel %vm1285, %v2640, %v2656
    %v2671 = vsel %vm1285, %v2642, %v2658
    %v2672 = vsel %vm1285, %v2644, %v2660
    %v2673 = vsel %vm1285, %v2646, %v2662
    %v2674 = vsel %vm1285, %v2648, %v2664
    %v2675 = vsel %vm1285, %v2650, %v2666
    %v2676 = vsel %vm1285, %v2652, %v2668
    %v2677 = vsel %vm1285, %v2654, %v2638
    %v2678 = vsel %vm1285, %v2656, %v2640
    %v2679 = vsel %vm1285, %v2658, %v2642
    %v2680 = vsel %vm1285, %v2660, %v2644
    %v2681 = vsel %vm1285, %v2662, %v2646
    %v2682 = vsel %vm1285, %v2664, %v2648
    %v2683 = vsel %vm1285, %v2666, %v2650
    %v2684 = vsel %vm1285, %v2668, %v2652
    %v2685 = vsel %vm84, %v2669, 0.0
    %v2686 = vsel %vm85, %v2677, 0.0
    %v2687 = vsel %vm84, %v2670, 0.0
    %v2688 = vsel %vm85, %v2678, 0.0
    %v2689 = vsel %vm84, %v2671, 0.0
    %v2690 = vsel %vm85, %v2679, 0.0
    %v2691 = vsel %vm84, %v2672, 0.0
    %v2692 = vsel %vm85, %v2680, 0.0
    %v2693 = vsel %vm84, %v2673, 0.0
    %v2694 = vsel %vm85, %v2681, 0.0
    %v2695 = vsel %vm84, %v2674, 0.0
    %v2696 = vsel %vm85, %v2682, 0.0
    %v2697 = vsel %vm84, %v2675, 0.0
    %v2698 = vsel %vm85, %v2683, 0.0
    %v2699 = vsel %vm84, %v2676, 0.0
    %v2700 = vsel %vm85, %v2684, 0.0
    %v2701 = vmul.f32 %v2685, %v1320
    %v2702 = vmul.f32 %v2686, %v1320
    %v2703 = vmul.f32 %v2687, %v1324
    %v2704 = vmul.f32 %v2688, %v1324
    %v2705 = vmul.f32 %v2689, %v1328
    %v2706 = vmul.f32 %v2690, %v1328
    %v2707 = vmul.f32 %v2691, %v1332
    %v2708 = vmul.f32 %v2692, %v1332
    %v2709 = vmul.f32 %v2693, %v1336
    %v2710 = vmul.f32 %v2694, %v1336
    %v2711 = vmul.f32 %v2695, %v1340
    %v2712 = vmul.f32 %v2696, %v1340
    %v2713 = vmul.f32 %v2697, %v1344
    %v2714 = vmul.f32 %v2698, %v1344
    %v2715 = vmul.f32 %v2699, %v1348
    %v2716 = vmul.f32 %v2700, %v1348
    %v2717 = vadd.f32 %v2621, %v2701
    %v2718 = vadd.f32 %v2622, %v2702
    %v2719 = vadd.f32 %v2623, %v2703
    %v2720 = vadd.f32 %v2624, %v2704
    %v2721 = vadd.f32 %v2625, %v2705
    %v2722 = vadd.f32 %v2626, %v2706
    %v2723 = vadd.f32 %v2627, %v2707
    %v2724 = vadd.f32 %v2628, %v2708
    %v2725 = vadd.f32 %v2629, %v2709
    %v2726 = vadd.f32 %v2630, %v2710
    %v2727 = vadd.f32 %v2631, %v2711
    %v2728 = vadd.f32 %v2632, %v2712
    %v2729 = vadd.f32 %v2633, %v2713
    %v2730 = vadd.f32 %v2634, %v2714
    %v2731 = vadd.f32 %v2635, %v2715
    %v2732 = vadd.f32 %v2636, %v2716
    %v2733 = vadd.f32 %v2717, %v1384
    %v2734 = vadd.f32 %v2718, %v1384
    %v2735 = vadd.f32 %v2719, %v1388
    %v2736 = vadd.f32 %v2720, %v1388
    %v2737 = vadd.f32 %v2721, %v1392
    %v2738 = vadd.f32 %v2722, %v1392
    %v2739 = vadd.f32 %v2723, %v1396
    %v2740 = vadd.f32 %v2724, %v1396
    %v2741 = vadd.f32 %v2725, %v1400
    %v2742 = vadd.f32 %v2726, %v1400
    %v2743 = vadd.f32 %v2727, %v1404
    %v2744 = vadd.f32 %v2728, %v1404
    %v2745 = vadd.f32 %v2729, %v1408
    %v2746 = vadd.f32 %v2730, %v1408
    %v2747 = vadd.f32 %v2731, %v1412
    %v2748 = vadd.f32 %v2732, %v1412
    %v2749 = vadd.f32 %v2733, 3.0
    %v2750 = vadd.f32 %v2734, 3.0
    %v2751 = vadd.f32 %v2735, 3.0
    %v2752 = vadd.f32 %v2736, 3.0
    %v2753 = vadd.f32 %v2737, 3.0
    %v2754 = vadd.f32 %v2738, 3.0
    %v2755 = vadd.f32 %v2739, 3.0
    %v2756 = vadd.f32 %v2740, 3.0
    %v2757 = vadd.f32 %v2741, 3.0
    %v2758 = vadd.f32 %v2742, 3.0
    %v2759 = vadd.f32 %v2743, 3.0
    %v2760 = vadd.f32 %v2744, 3.0
    %v2761 = vadd.f32 %v2745, 3.0
    %v2762 = vadd.f32 %v2746, 3.0
    %v2763 = vadd.f32 %v2747, 3.0
    %v2764 = vadd.f32 %v2748, 3.0
    %v2765 = vmax.f32 %v2749, 0.0
    %v2766 = vmax.f32 %v2750, 0.0
    %v2767 = vmax.f32 %v2751, 0.0
    %v2768 = vmax.f32 %v2752, 0.0
    %v2769 = vmax.f32 %v2753, 0.0
    %v2770 = vmax.f32 %v2754, 0.0
    %v2771 = vmax.f32 %v2755, 0.0
    %v2772 = vmax.f32 %v2756, 0.0
    %v2773 = vmax.f32 %v2757, 0.0
    %v2774 = vmax.f32 %v2758, 0.0
    %v2775 = vmax.f32 %v2759, 0.0
    %v2776 = vmax.f32 %v2760, 0.0
    %v2777 = vmax.f32 %v2761, 0.0
    %v2778 = vmax.f32 %v2762, 0.0
    %v2779 = vmax.f32 %v2763, 0.0
    %v2780 = vmax.f32 %v2764, 0.0
    %v2781 = vmin.f32 %v2765, 6.0
    %v2782 = vmin.f32 %v2766, 6.0
    %v2783 = vmin.f32 %v2767, 6.0
    %v2784 = vmin.f32 %v2768, 6.0
    %v2785 = vmin.f32 %v2769, 6.0
    %v2786 = vmin.f32 %v2770, 6.0
    %v2787 = vmin.f32 %v2771, 6.0
    %v2788 = vmin.f32 %v2772, 6.0
    %v2789 = vmin.f32 %v2773, 6.0
    %v2790 = vmin.f32 %v2774, 6.0
    %v2791 = vmin.f32 %v2775, 6.0
    %v2792 = vmin.f32 %v2776, 6.0
    %v2793 = vmin.f32 %v2777, 6.0
    %v2794 = vmin.f32 %v2778, 6.0
    %v2795 = vmin.f32 %v2779, 6.0
    %v2796 = vmin.f32 %v2780, 6.0
    %v2797 = vmul.f32 %v2733, %v2781
    %v2798 = vmul.f32 %v2734, %v2782
    %v2799 = vmul.f32 %v2735, %v2783
    %v2800 = vmul.f32 %v2736, %v2784
    %v2801 = vmul.f32 %v2737, %v2785
    %v2802 = vmul.f32 %v2738, %v2786
    %v2803 = vmul.f32 %v2739, %v2787
    %v2804 = vmul.f32 %v2740, %v2788
    %v2805 = vmul.f32 %v2741, %v2789
    %v2806 = vmul.f32 %v2742, %v2790
    %v2807 = vmul.f32 %v2743, %v2791
    %v2808 = vmul.f32 %v2744, %v2792
    %v2809 = vmul.f32 %v2745, %v2793
    %v2810 = vmul.f32 %v2746, %v2794
    %v2811 = vmul.f32 %v2747, %v2795
    %v2812 = vmul.f32 %v2748, %v2796
    %v2813 = vadd.f32 %v2797, %v2798
    %2814 = vadd.xlane.f32.xlu0 %v2813
    %v2815 = vpop.xlane.xlu0 %2814
    %v2816 = vadd.f32 %v2799, %v2800
    %2817 = vadd.xlane.f32.xlu0 %v2816
    %v2818 = vpop.xlane.xlu0 %2817
    %v2819 = vadd.f32 %v2801, %v2802
    %2820 = vadd.xlane.f32.xlu0 %v2819
    %v2821 = vpop.xlane.xlu0 %2820
    %v2822 = vadd.f32 %v2803, %v2804
    %2823 = vadd.xlane.f32.xlu0 %v2822
    %v2824 = vpop.xlane.xlu0 %2823
    %v2825 = vadd.f32 %v2805, %v2806
    %2826 = vadd.xlane.f32.xlu0 %v2825
    %v2827 = vpop.xlane.xlu0 %2826
    %v2828 = vadd.f32 %v2807, %v2808
    %2829 = vadd.xlane.f32.xlu0 %v2828
    %v2830 = vpop.xlane.xlu0 %2829
    %v2831 = vadd.f32 %v2809, %v2810
    %2832 = vadd.xlane.f32.xlu0 %v2831
    %v2833 = vpop.xlane.xlu0 %2832
    %v2834 = vadd.f32 %v2811, %v2812
    %2835 = vadd.xlane.f32.xlu0 %v2834
    %v2836 = vpop.xlane.xlu0 %2835
    %v2837 = vmul.f32 %v2815, 0.00390625
    %v2838 = vmul.f32 %v2818, 0.00390625
    %v2839 = vmul.f32 %v2821, 0.00390625
    %v2840 = vmul.f32 %v2824, 0.00390625
    %v2841 = vmul.f32 %v2827, 0.00390625
    %v2842 = vmul.f32 %v2830, 0.00390625
    %v2843 = vmul.f32 %v2833, 0.00390625
    %v2844 = vmul.f32 %v2836, 0.00390625
    %v2845 = vmul.f32 %v47, %v2837
    %v2846 = vmul.f32 %v48, %v2838
    %v2847 = vmul.f32 %v49, %v2839
    %v2848 = vmul.f32 %v50, %v2840
    %v2849 = vmul.f32 %v51, %v2841
    %v2850 = vmul.f32 %v52, %v2842
    %v2851 = vmul.f32 %v53, %v2843
    %v2852 = vmul.f32 %v54, %v2844
    %v2853 = vsel %vm1534, %v2845, 0.0
    %v2854 = vsel %vm1534, %v2846, 0.0
    %v2855 = vadd.f32 %v2853, %v2854
    %v2856 = vsel %vm1534, %v2847, 0.0
    %v2857 = vadd.f32 %v2855, %v2856
    %v2858 = vsel %vm1534, %v2848, 0.0
    %v2859 = vadd.f32 %v2857, %v2858
    %v2860 = vsel %vm1534, %v2849, 0.0
    %v2861 = vadd.f32 %v2859, %v2860
    %v2862 = vsel %vm1534, %v2850, 0.0
    %v2863 = vadd.f32 %v2861, %v2862
    %v2864 = vsel %vm1534, %v2851, 0.0
    %v2865 = vadd.f32 %v2863, %v2864
    %v2866 = vsel %vm1534, %v2852, 0.0
    %v2867 = vadd.f32 %v2865, %v2866
    %v2868 = vrot.slane %v2867, 4
    %v2869 = vadd.f32 %v2867, %v2868
    %v2870 = vrot.slane %v2869, 2
    %v2871 = vadd.f32 %v2869, %v2870
    %v2872 = vrot.slane %v2871, 1
    %v2873 = vadd.f32 %v2871, %v2872
    %v2874 = vadd.f32 %v2873, %v1557
    %v2875 = vmax.f32 %v2874, 0.0
    %v2876 = vlaneseq
    %v2877 = vshrl.u32 %v2876, 7
    %v2878 = vsub.s32 0, %v2877
    %v2879 = vrot.slane %v2875, %v2878
    %2881 = vrot.lane.b32.xlu0 %v2879, 16
    %v2882 = vpop.permute.xlu0 %2881
    %v2884 = vmul.f32 %v47, %v2882
    %v2885 = vmul.f32 %v48, %v2882
    %v2886 = vmul.f32 %v49, %v2882
    %v2887 = vmul.f32 %v50, %v2882
    %v2888 = vmul.f32 %v51, %v2882
    %v2889 = vmul.f32 %v52, %v2882
    %v2890 = vmul.f32 %v53, %v2882
    %v2891 = vmul.f32 %v54, %v2882
    %2900 = vrot.lane.b32.xlu0 %v2884, 96
    %v2901 = vpop.permute.xlu0 %2900
    %2902 = vrot.lane.b32.xlu0 %v2885, 96
    %v2903 = vpop.permute.xlu0 %2902
    %2904 = vrot.lane.b32.xlu0 %v2886, 96
    %v2905 = vpop.permute.xlu0 %2904
    %2906 = vrot.lane.b32.xlu0 %v2887, 96
    %v2907 = vpop.permute.xlu0 %2906
    %2908 = vrot.lane.b32.xlu0 %v2888, 96
    %v2909 = vpop.permute.xlu0 %2908
    %2910 = vrot.lane.b32.xlu0 %v2889, 96
    %v2911 = vpop.permute.xlu0 %2910
    %2912 = vrot.lane.b32.xlu0 %v2890, 96
    %v2913 = vpop.permute.xlu0 %2912
    %2914 = vrot.lane.b32.xlu0 %v2891, 96
    %v2915 = vpop.permute.xlu0 %2914
    %v2924 = vsel %vm152, %v2901, 0.0
    %2925 = vadd.xlane.f32.xlu0 %v2924
    %v2926 = vpop.xlane.xlu0 %2925
    %v2927 = vsel %vm152, %v2903, 0.0
    %2928 = vadd.xlane.f32.xlu0 %v2927
    %v2929 = vpop.xlane.xlu0 %2928
    %v2930 = vsel %vm152, %v2905, 0.0
    %2931 = vadd.xlane.f32.xlu0 %v2930
    %v2932 = vpop.xlane.xlu0 %2931
    %v2933 = vsel %vm152, %v2907, 0.0
    %2934 = vadd.xlane.f32.xlu0 %v2933
    %v2935 = vpop.xlane.xlu0 %2934
    %v2936 = vsel %vm152, %v2909, 0.0
    %2937 = vadd.xlane.f32.xlu0 %v2936
    %v2938 = vpop.xlane.xlu0 %2937
    %v2939 = vsel %vm152, %v2911, 0.0
    %2940 = vadd.xlane.f32.xlu0 %v2939
    %v2941 = vpop.xlane.xlu0 %2940
    %v2942 = vsel %vm152, %v2913, 0.0
    %2943 = vadd.xlane.f32.xlu0 %v2942
    %v2944 = vpop.xlane.xlu0 %2943
    %v2945 = vsel %vm152, %v2915, 0.0
    %2946 = vadd.xlane.f32.xlu0 %v2945
    %v2947 = vpop.xlane.xlu0 %2946
    %v2948 = vadd.f32 %v2926, %v47
    %v2949 = vadd.f32 %v2929, %v48
    %v2950 = vadd.f32 %v2932, %v49
    %v2951 = vadd.f32 %v2935, %v50
    %v2952 = vadd.f32 %v2938, %v51
    %v2953 = vadd.f32 %v2941, %v52
    %v2954 = vadd.f32 %v2944, %v53
    %v2955 = vadd.f32 %v2947, %v54
    %v2956 = vadd.f32 %v2948, 3.0
    %v2957 = vadd.f32 %v2949, 3.0
    %v2958 = vadd.f32 %v2950, 3.0
    %v2959 = vadd.f32 %v2951, 3.0
    %v2960 = vadd.f32 %v2952, 3.0
    %v2961 = vadd.f32 %v2953, 3.0
    %v2962 = vadd.f32 %v2954, 3.0
    %v2963 = vadd.f32 %v2955, 3.0
    %v2964 = vmax.f32 %v2956, 0.0
    %v2965 = vmax.f32 %v2957, 0.0
    %v2966 = vmax.f32 %v2958, 0.0
    %v2967 = vmax.f32 %v2959, 0.0
    %v2968 = vmax.f32 %v2960, 0.0
    %v2969 = vmax.f32 %v2961, 0.0
    %v2970 = vmax.f32 %v2962, 0.0
    %v2971 = vmax.f32 %v2963, 0.0
    %v2972 = vmin.f32 %v2964, 6.0
    %v2973 = vmin.f32 %v2965, 6.0
    %v2974 = vmin.f32 %v2966, 6.0
    %v2975 = vmin.f32 %v2967, 6.0
    %v2976 = vmin.f32 %v2968, 6.0
    %v2977 = vmin.f32 %v2969, 6.0
    %v2978 = vmin.f32 %v2970, 6.0
    %v2979 = vmin.f32 %v2971, 6.0
    %v2980 = vmul.f32 %v2972, 0.027777778
    %v2981 = vmul.f32 %v2973, 0.027777778
    %v2982 = vmul.f32 %v2974, 0.027777778
    %v2983 = vmul.f32 %v2975, 0.027777778
    %v2984 = vmul.f32 %v2976, 0.027777778
    %v2985 = vmul.f32 %v2977, 0.027777778
    %v2986 = vmul.f32 %v2978, 0.027777778
    %v2987 = vmul.f32 %v2979, 0.027777778
    %2989 = vset.pattern.permute.xlu0 11
    %2990 = vperm.xlu0 %2989, %v2980
    %v2991 = vpop.permute.xlu0 %2990
    %2994 = vset.pattern.permute.xlu0 11
    %2995 = vperm.xlu0 %2994, %v2981
    %v2996 = vpop.permute.xlu0 %2995
    %2999 = vset.pattern.permute.xlu0 11
    %3000 = vperm.xlu0 %2999, %v2982
    %v3001 = vpop.permute.xlu0 %3000
    %3004 = vset.pattern.permute.xlu0 11
    %3005 = vperm.xlu0 %3004, %v2983
    %v3006 = vpop.permute.xlu0 %3005
    %3009 = vset.pattern.permute.xlu0 11
    %3010 = vperm.xlu0 %3009, %v2984
    %v3011 = vpop.permute.xlu0 %3010
    %3014 = vset.pattern.permute.xlu0 11
    %3015 = vperm.xlu0 %3014, %v2985
    %v3016 = vpop.permute.xlu0 %3015
    %3019 = vset.pattern.permute.xlu0 11
    %3020 = vperm.xlu0 %3019, %v2986
    %v3021 = vpop.permute.xlu0 %3020
    %3024 = vset.pattern.permute.xlu0 11
    %3025 = vperm.xlu0 %3024, %v2987
    %v3026 = vpop.permute.xlu0 %3025
    %v3028 = vmul.f32 %v2797, %v2991
    %v3029 = vmul.f32 %v2798, %v2991
    %v3030 = vmul.f32 %v2799, %v2996
    %v3031 = vmul.f32 %v2800, %v2996
    %v3032 = vmul.f32 %v2801, %v3001
    %v3033 = vmul.f32 %v2802, %v3001
    %v3034 = vmul.f32 %v2803, %v3006
    %v3035 = vmul.f32 %v2804, %v3006
    %v3036 = vmul.f32 %v2805, %v3011
    %v3037 = vmul.f32 %v2806, %v3011
    %v3038 = vmul.f32 %v2807, %v3016
    %v3039 = vmul.f32 %v2808, %v3016
    %v3040 = vmul.f32 %v2809, %v3021
    %v3041 = vmul.f32 %v2810, %v3021
    %v3042 = vmul.f32 %v2811, %v3026
    %v3043 = vmul.f32 %v2812, %v3026
    %v3044 = vpack.c.bf16 %v3030, %v3028
    %v3045 = vpack.c.bf16 %v3031, %v3029
    %v3046 = vpack.c.bf16 %v3034, %v3032
    %v3047 = vpack.c.bf16 %v3035, %v3033
    %v3048 = vpack.c.bf16 %v3038, %v3036
    %v3049 = vpack.c.bf16 %v3039, %v3037
    %v3050 = vpack.c.bf16 %v3042, %v3040
    %v3051 = vpack.c.bf16 %v3043, %v3041
    %3052 = vmatprep.subr.bf16.mxu0 0
    %3053 = vmatpush1.bf16.msra.mxu0 0
    %3054 = vmatprep.subr.bf16.mxu0 0
    %3055 = vmatpush1.bf16.msra.mxu0 0
    %3056 = vmatprep.subr.bf16.mxu0 0
    %3057 = vmatpush1.bf16.msra.mxu0 0
    %3058 = vmatprep.subr.bf16.mxu0 0
    %3059 = vmatpush1.bf16.msra.mxu0 0
    %3060 = vmatprep.subr.bf16.mxu0 %v3051
    %3061 = vmatpush1.bf16.msra.mxu0 %v3050
    %3062 = vmatprep.subr.bf16.mxu0 %v3049
    %3063 = vmatpush1.bf16.msra.mxu0 %v3048
    %3064 = vmatprep.subr.bf16.mxu0 %v3047
    %3065 = vmatpush1.bf16.msra.mxu0 %v3046
    %3066 = vmatprep.subr.bf16.mxu0 %v3045
    %3067 = vmatpush1.bf16.msra.mxu0 %v3044
    %3068 = vmatprep.subr.bf16.mxu0 0
    %3069 = vmatpush2.bf16.msra.mxu0 0
    %3070 = vmatprep.subr.bf16.mxu0 0
    %3071 = vmatpush2.bf16.msra.mxu0 0
    %3072 = vmatprep.subr.bf16.mxu0 0
    %3073 = vmatpush2.bf16.msra.mxu0 0
    %3074 = vmatprep.subr.bf16.mxu0 0
    %3075 = vmatpush2.bf16.msra.mxu0 0
    %3076 = vmatprep.subr.bf16.mxu0 0
    %3077 = vmatpush2.bf16.msra.mxu0 0
    %3078 = vmatprep.subr.bf16.mxu0 0
    %3079 = vmatpush2.bf16.msra.mxu0 0
    %3080 = vmatprep.subr.bf16.mxu0 0
    %3081 = vmatpush2.bf16.msra.mxu0 0
    %3082 = vmatprep.subr.bf16.mxu0 0
    %3083 = vmatpush2.bf16.msra.mxu0 0
    %3084 = vmatprep.mubr.bf16.mxu0 0
    %3085 = vmatmul.mubr.bf16.gmra.mxu0 %v1752
    %v3086 = vpop.f32.mrf.mxu0
    %v3087 = vadd.f32 %v1739, %v3086
    %v3088 = vpop.f32.mrf.mxu0
    %v3089 = vadd.f32 %v1739, %v3088
    %v3090 = vpop.f32.mrf.mxu0
    %v3091 = vadd.f32 %v1743, %v3090
    %v3092 = vpop.f32.mrf.mxu0
    %v3093 = vadd.f32 %v1743, %v3092
    %3094 = vdwg.mxu0
    %v3095 = vadd.f32 %v3087, %v1806
    %v3096 = vadd.f32 %v3089, %v1807
    %v3097 = vadd.f32 %v3091, %v1808
    %v3098 = vadd.f32 %v3093, %v1809
    %s3099 = scalar_lea.vmem [#allocation7], 32
    %3100 = vst [vmem:[%s3099] sm:$0xff] %v3095
    %3101 = vst [vmem:[%s3099 + $0x8] sm:$0xff] %v3096
    %3102 = vst [vmem:[%s3099 + $0x10] sm:$0xff] %v3097
    %3103 = vst [vmem:[%s3099 + $0x18] sm:$0xff] %v3098
    // Predicated region
    $region26: #{tpu_custom_call.1} parent=1 // pred_check
      _
    $region27: #{tpu_custom_call.1} parent=1 // pred_check_branch
      %3105 = sbr.rel (0) target = $region29
    $region28: #{tpu_custom_call.1} parent=1 // pred_region
      %s3107 = ssub.s32 1024, 1024
      %3108 = vsyncadd [#allocation4], %s3107
      %s3109 = sshll.u32 [#allocation7], 4
      %s3110 = int_to_ptr.vmem [resolvable:$true] %s3109
      %3115 = dma.vmem_to_hbm [thread:$0]  %s3110, 1024, %s4, [#allocation4], 256, 256, 16
    $region29: #{tpu_custom_call.1} parent=1 // pred_fallthru
      _
    // Predicated region
    $region30: #{tpu_custom_call.1} parent=1 // pred_check
      _
    $region31: #{tpu_custom_call.1} parent=1 // pred_check_branch
      %3117 = sbr.rel (0) target = $region33
    $region32: #{tpu_custom_call.1} parent=1 // pred_region
      %3118 = dma.done [#allocation4], 1024
    $region33: #{tpu_custom_call.1} parent=1 // pred_fallthru
      _
    %3119 = vsyncpa [#allocation3], 1
    %3120 = vsyncpa [#allocation6], 1
    %3121 = vsyncpa [#allocation4], 1

</llo_original>
